<compile_context>
chip_gen: v7x
topology: tpu7x:2x2x1
jax: 0.10.0
libtpu: 0.0.40
codegen_flags: <defaults>
</compile_context>

<pallas_src>
import functools

import jax
import jax.numpy as jnp
import numpy as np
from jax import lax
from jax.experimental import pallas as pl
from jax.experimental.pallas import tpu as pltpu

# ----- model / problem sizes (small, TPU-tile friendly) -----
VOCAB = 128        # input_size == output_size == len(chars)
HIDDEN = 128       # hidden_size
NUM_LAYERS = 4
BATCH = 8
SEQ = 8


# --------------------------- Pallas kernel ---------------------------------
def char_rnn_kernel(tok_ref, h0_ref, emb_ref, wih0_ref, whh0_ref, wcat_ref,
                    b_ref, fcw_ref, fcb_ref, out_ref, hout_ref):
    # tok_ref:  (SEQ*BATCH, 1)              int32  time-major rows (r = t*B+b)
    # h0_ref:   (NUM_LAYERS, BATCH, HIDDEN) f32
    # emb_ref:  (VOCAB, HIDDEN)             bf16
    # wih0_ref: (HIDDEN, HIDDEN)            bf16   layer-0 input weights (x @ W)
    # whh0_ref: (HIDDEN, HIDDEN)            bf16   layer-0 recurrent weights
    # wcat_ref: (NUM_LAYERS-1, 2H, HIDDEN)  bf16   layers 1..3 stacked [Wih; Whh]
    # b_ref:    (NUM_LAYERS, 1, HIDDEN)     f32    folded b_ih + b_hh
    # fcw_ref:  (HIDDEN, VOCAB)             bf16
    # fcb_ref:  (1, VOCAB)                  f32
    # out_ref:  (BATCH, SEQ, VOCAB)         f32    batch-major logits
    # hout_ref: (NUM_LAYERS, BATCH, HIDDEN) f32

    # --- Fused embedding: one-hot(tokens) @ emb, single MXU matmul. ---------
    tok = tok_ref[...]                                          # (S*B, 1) i32
    vocab_iota = lax.broadcasted_iota(jnp.int32, (SEQ * BATCH, VOCAB), 1)
    onehot = (vocab_iota == tok).astype(jnp.bfloat16)           # (S*B, VOCAB)
    x_bf = jnp.dot(onehot, emb_ref[...],
                   preferred_element_type=jnp.float32).astype(jnp.bfloat16)

    # --- Layer-0 input projection hoisted off the recurrence (one matmul). --
    proj0 = (jnp.dot(x_bf, wih0_ref[...],
                     preferred_element_type=jnp.float32) + b_ref[0])

    # Per-layer hidden state kept as bf16 values (MXU operand form).
    h_state = [h0_ref[l].astype(jnp.bfloat16) for l in range(NUM_LAYERS)]

    # --- Wavefront over (layer, time): diagonal step s runs cells (l, s-l). -
    for s in range(SEQ + NUM_LAYERS - 1):       # static, fully unrolled
        new_h = {}
        for l in range(NUM_LAYERS):
            t = s - l
            if not (0 <= t < SEQ):
                continue
            if l == 0:
                rec = jnp.dot(h_state[0], whh0_ref[...],
                              preferred_element_type=jnp.float32)
                pre = proj0[t * BATCH:(t + 1) * BATCH, :] + rec
            else:
                # [input_t, hidden_{t-1}] @ [Wih; Whh]: one K=256 matmul/cell.
                cat = jnp.concatenate([h_state[l - 1], h_state[l]], axis=-1)
                pre = (jnp.dot(cat, wcat_ref[l - 1],
                               preferred_element_type=jnp.float32) + b_ref[l])
            h_new = jnp.tanh(pre).astype(jnp.bfloat16)
            new_h[l] = h_new

            if l == NUM_LAYERS - 1:
                # Per-timestep FC + lane-dense batch-major store (VOCAB=128
                # rows, off the recurrence critical path).
                logits = (jnp.dot(h_new, fcw_ref[...],
                                  preferred_element_type=jnp.float32)
                          + fcb_ref[...])
                out_ref[:, t, :] = logits
            if t == SEQ - 1:
                hout_ref[l] = h_new.astype(jnp.float32)

        for l, v in new_h.items():              # commit after all reads
            h_state[l] = v


# ------------------------------ wrapper -------------------------------------
@jax.jit
def char_rnn_forward(tokens, h0, params):
    # Only wrapper glue left: a tiny int32 transpose so kernel rows are
    # time-major (r = t*BATCH + b).  All float work happens in the kernel.
    tok_tm = tokens.T.reshape(SEQ * BATCH, 1)

    out_bsv, h_out = pl.pallas_call(
        char_rnn_kernel,
        out_shape=(
            jax.ShapeDtypeStruct((BATCH, SEQ, VOCAB), jnp.float32),
            jax.ShapeDtypeStruct((NUM_LAYERS, BATCH, HIDDEN), jnp.float32),
        ),
        in_specs=[pl.BlockSpec(memory_space=pltpu.MemorySpace.VMEM)] * 9,
        out_specs=(
            pl.BlockSpec(memory_space=pltpu.MemorySpace.VMEM),
            pl.BlockSpec(memory_space=pltpu.MemorySpace.VMEM),
        ),
        # h0 (input 1) reuses its buffer for the hidden-state output (output 1).
        input_output_aliases={1: 1},
    )(tok_tm, h0, params["emb"], params["wih0"], params["whh0"],
      params["wcat"], params["b"], params["fcw"], params["fcb"])

    # Batch-major already: (B, S, V) -> (B*S, V) is a free contiguous view,
    # matching PyTorch's out.view(-1, hidden) row order (row = b*SEQ + t).
    return out_bsv.reshape(BATCH * SEQ, VOCAB), h_out


# -------------------------- pure-JAX reference ------------------------------
def reference_forward(tokens, h0, params):
    # Mirrors kernel numerics: bf16 MXU operands, f32 accumulation, hidden
    # state rounded to bf16 after tanh.
    def bf(v):
        return v.astype(jnp.bfloat16).astype(jnp.float32)

    x = jnp.take(params["emb"].astype(jnp.float32), tokens, axis=0)  # (B,S,H)
    inp = x
    last = []
    for l in range(NUM_LAYERS):
        wih = params["wih"][l].astype(jnp.float32)
        whh = params["whh"][l].astype(jnp.float32)
        b = params["b"][l]
        h = bf(h0[l])
        outs = []
        for t in range(SEQ):
            pre = bf(inp[:, t, :]) @ wih + h @ whh + b
            h = bf(jnp.tanh(pre))                 # state carried as bf16 values
            outs.append(h)
        inp = jnp.stack(outs, axis=1)
        last.append(h)
    logits = (bf(inp) @ params["fcw"].astype(jnp.float32)
              + params["fcb"])                    # (B, S, VOCAB)
    return logits.reshape(BATCH * SEQ, VOCAB), jnp.stack(last, axis=0)


# ----------------------- deterministic parameter init -----------------------
def init_params(key):
    ks = jax.random.split(key, 6)
    k = 1.0 / np.sqrt(HIDDEN)
    u = functools.partial(jax.random.uniform, minval=-k, maxval=k,
                          dtype=jnp.float32)
    wih = u(ks[1], (NUM_LAYERS, HIDDEN, HIDDEN)).astype(jnp.bfloat16)
    whh = u(ks[2], (NUM_LAYERS, HIDDEN, HIDDEN)).astype(jnp.bfloat16)
    return {
        # MXU operands stored in bf16; biases stay f32 (added after f32 acc).
        "emb": jax.random.normal(ks[0], (VOCAB, HIDDEN),
                                 jnp.float32).astype(jnp.bfloat16),
        "wih": wih,                               # reference form
        "whh": whh,
        "wih0": wih[0],                           # kernel forms (built once)
        "whh0": whh[0],
        "wcat": jnp.concatenate([wih[1:], whh[1:]], axis=1),  # (L-1, 2H, H)
        "b":   u(ks[3], (NUM_LAYERS, 1, HIDDEN)),  # b_ih + b_hh folded
        "fcw": u(ks[4], (HIDDEN, VOCAB)).astype(jnp.bfloat16),
        "fcb": u(ks[5], (1, VOCAB)),
    }


if __name__ == "__main__":
    root = jax.random.PRNGKey(0)
    k_tok, k_param = jax.random.split(root)

    tokens = jax.random.randint(k_tok, (BATCH, SEQ), 0, VOCAB, dtype=jnp.int32)
    h0 = jnp.zeros((NUM_LAYERS, BATCH, HIDDEN), jnp.float32)
    params = init_params(k_param)

    out, h_out = char_rnn_forward(tokens, h0, params)
    out = jax.block_until_ready(out)
    h_out = jax.block_until_ready(h_out)

    ref_out, ref_h = reference_forward(tokens, h0, params)
    assert out.shape == (BATCH * SEQ, VOCAB)
    assert h_out.shape == (NUM_LAYERS, BATCH, HIDDEN)
    np.testing.assert_allclose(np.asarray(out), np.asarray(ref_out),
                               rtol=2e-2, atol=2e-2)
    np.testing.assert_allclose(np.asarray(h_out), np.asarray(ref_h),
                               rtol=2e-2, atol=2e-2)

    print("KERNEL_OK")
</pallas_src>

<mosaic_0001>
module attributes {stable_mosaic.version = 11 : i64} {
  func.func @char_rnn_kernel(%arg0: memref<64x1xi32, #tpu.memory_space<vmem>>, %arg1: memref<4x8x128xf32, #tpu.memory_space<vmem>>, %arg2: memref<128x128xbf16, #tpu.memory_space<vmem>>, %arg3: memref<128x128xbf16, #tpu.memory_space<vmem>>, %arg4: memref<128x128xbf16, #tpu.memory_space<vmem>>, %arg5: memref<3x256x128xbf16, #tpu.memory_space<vmem>>, %arg6: memref<4x1x128xf32, #tpu.memory_space<vmem>>, %arg7: memref<128x128xbf16, #tpu.memory_space<vmem>>, %arg8: memref<1x128xf32, #tpu.memory_space<vmem>>, %arg9: memref<8x8x128xf32, #tpu.memory_space<vmem>>, %arg10: memref<4x8x128xf32, #tpu.memory_space<vmem>>) attributes {dimension_semantics = [], scalar_prefetch = 0 : i64, scratch_operands = 0 : i64, tpu.core_type = #tpu.core_type<tc>} {
    %c0 = arith.constant 0 : index
    %c0_0 = arith.constant 0 : index
    %0 = vector.load %arg0[%c0, %c0_0] : memref<64x1xi32, #tpu.memory_space<vmem>>, vector<64x1xi32>
    %1 = tpu.iota {dimensions = array<i32: 1>} : vector<64x128xi32>
    %2 = vector.broadcast %0 : vector<64x1xi32> to vector<64x128xi32>
    %3 = arith.cmpi eq, %1, %2 : vector<64x128xi32>
    %4 = arith.extui %3 : vector<64x128xi1> to vector<64x128xi32>
    %5 = arith.sitofp %4 : vector<64x128xi32> to vector<64x128xf32>
    %6 = arith.truncf %5 : vector<64x128xf32> to vector<64x128xbf16>
    %c0_1 = arith.constant 0 : index
    %c0_2 = arith.constant 0 : index
    %7 = vector.load %arg2[%c0_1, %c0_2] : memref<128x128xbf16, #tpu.memory_space<vmem>>, vector<128x128xbf16>
    %cst = arith.constant dense<0.000000e+00> : vector<64x128xf32>
    %8 = tpu.matmul %6, %7, %cst {dimension_numbers = #tpu.dot_dimension_numbers<[1], [0], [0], [1], [0, 0, 1, 1], [], []>} : vector<64x128xbf16>, vector<128x128xbf16>, vector<64x128xf32> -> vector<64x128xf32>
    %9 = arith.truncf %8 : vector<64x128xf32> to vector<64x128xbf16>
    %c0_3 = arith.constant 0 : index
    %c0_4 = arith.constant 0 : index
    %10 = vector.load %arg3[%c0_3, %c0_4] : memref<128x128xbf16, #tpu.memory_space<vmem>>, vector<128x128xbf16>
    %cst_5 = arith.constant dense<0.000000e+00> : vector<64x128xf32>
    %11 = tpu.matmul %9, %10, %cst_5 {dimension_numbers = #tpu.dot_dimension_numbers<[1], [0], [0], [1], [0, 0, 1, 1], [], []>} : vector<64x128xbf16>, vector<128x128xbf16>, vector<64x128xf32> -> vector<64x128xf32>
    %c0_6 = arith.constant 0 : index
    %c0_7 = arith.constant 0 : index
    %c0_8 = arith.constant 0 : index
    %12 = vector.load %arg6[%c0_6, %c0_7, %c0_8] : memref<4x1x128xf32, #tpu.memory_space<vmem>>, vector<1x1x128xf32>
    %13 = vector.shape_cast %12 : vector<1x1x128xf32> to vector<1x128xf32>
    %14 = vector.broadcast %13 : vector<1x128xf32> to vector<64x128xf32>
    %15 = arith.addf %11, %14 : vector<64x128xf32>
    %c0_9 = arith.constant 0 : index
    %c0_10 = arith.constant 0 : index
    %c0_11 = arith.constant 0 : index
    %16 = vector.load %arg1[%c0_9, %c0_10, %c0_11] : memref<4x8x128xf32, #tpu.memory_space<vmem>>, vector<1x8x128xf32>
    %17 = vector.shape_cast %16 : vector<1x8x128xf32> to vector<8x128xf32>
    %18 = arith.truncf %17 : vector<8x128xf32> to vector<8x128xbf16>
    %c1 = arith.constant 1 : index
    %c0_12 = arith.constant 0 : index
    %c0_13 = arith.constant 0 : index
    %19 = vector.load %arg1[%c1, %c0_12, %c0_13] : memref<4x8x128xf32, #tpu.memory_space<vmem>>, vector<1x8x128xf32>
    %20 = vector.shape_cast %19 : vector<1x8x128xf32> to vector<8x128xf32>
    %21 = arith.truncf %20 : vector<8x128xf32> to vector<8x128xbf16>
    %c2 = arith.constant 2 : index
    %c0_14 = arith.constant 0 : index
    %c0_15 = arith.constant 0 : index
    %22 = vector.load %arg1[%c2, %c0_14, %c0_15] : memref<4x8x128xf32, #tpu.memory_space<vmem>>, vector<1x8x128xf32>
    %23 = vector.shape_cast %22 : vector<1x8x128xf32> to vector<8x128xf32>
    %24 = arith.truncf %23 : vector<8x128xf32> to vector<8x128xbf16>
    %c3 = arith.constant 3 : index
    %c0_16 = arith.constant 0 : index
    %c0_17 = arith.constant 0 : index
    %25 = vector.load %arg1[%c3, %c0_16, %c0_17] : memref<4x8x128xf32, #tpu.memory_space<vmem>>, vector<1x8x128xf32>
    %26 = vector.shape_cast %25 : vector<1x8x128xf32> to vector<8x128xf32>
    %27 = arith.truncf %26 : vector<8x128xf32> to vector<8x128xbf16>
    %c0_18 = arith.constant 0 : index
    %c0_19 = arith.constant 0 : index
    %28 = vector.load %arg4[%c0_18, %c0_19] : memref<128x128xbf16, #tpu.memory_space<vmem>>, vector<128x128xbf16>
    %cst_20 = arith.constant dense<0.000000e+00> : vector<8x128xf32>
    %29 = tpu.matmul %18, %28, %cst_20 {dimension_numbers = #tpu.dot_dimension_numbers<[1], [0], [0], [1], [0, 0, 1, 1], [], []>} : vector<8x128xbf16>, vector<128x128xbf16>, vector<8x128xf32> -> vector<8x128xf32>
    %30 = vector.extract_strided_slice %15 {offsets = [0, 0], sizes = [8, 128], strides = [1, 1]} : vector<64x128xf32> to vector<8x128xf32>
    %31 = arith.addf %30, %29 : vector<8x128xf32>
    %32 = math.tanh %31 : vector<8x128xf32>
    %33 = arith.truncf %32 : vector<8x128xf32> to vector<8x128xbf16>
    %c0_21 = arith.constant 0 : index
    %c0_22 = arith.constant 0 : index
    %34 = vector.load %arg4[%c0_21, %c0_22] : memref<128x128xbf16, #tpu.memory_space<vmem>>, vector<128x128xbf16>
    %cst_23 = arith.constant dense<0.000000e+00> : vector<8x128xf32>
    %35 = tpu.matmul %33, %34, %cst_23 {dimension_numbers = #tpu.dot_dimension_numbers<[1], [0], [0], [1], [0, 0, 1, 1], [], []>} : vector<8x128xbf16>, vector<128x128xbf16>, vector<8x128xf32> -> vector<8x128xf32>
    %36 = vector.extract_strided_slice %15 {offsets = [8, 0], sizes = [8, 128], strides = [1, 1]} : vector<64x128xf32> to vector<8x128xf32>
    %37 = arith.addf %36, %35 : vector<8x128xf32>
    %38 = math.tanh %37 : vector<8x128xf32>
    %39 = arith.truncf %38 : vector<8x128xf32> to vector<8x128xbf16>
    %40 = tpu.concatenate %33, %21 in 1 : vector<8x128xbf16>, vector<8x128xbf16> -> vector<8x256xbf16>
    %c0_24 = arith.constant 0 : index
    %c0_25 = arith.constant 0 : index
    %c0_26 = arith.constant 0 : index
    %41 = vector.load %arg5[%c0_24, %c0_25, %c0_26] : memref<3x256x128xbf16, #tpu.memory_space<vmem>>, vector<1x256x128xbf16>
    %42 = vector.shape_cast %41 : vector<1x256x128xbf16> to vector<256x128xbf16>
    %cst_27 = arith.constant dense<0.000000e+00> : vector<8x128xf32>
    %43 = tpu.matmul %40, %42, %cst_27 {dimension_numbers = #tpu.dot_dimension_numbers<[1], [0], [0], [1], [0, 0, 1, 1], [], []>} : vector<8x256xbf16>, vector<256x128xbf16>, vector<8x128xf32> -> vector<8x128xf32>
    %c1_28 = arith.constant 1 : index
    %c0_29 = arith.constant 0 : index
    %c0_30 = arith.constant 0 : index
    %44 = vector.load %arg6[%c1_28, %c0_29, %c0_30] : memref<4x1x128xf32, #tpu.memory_space<vmem>>, vector<1x1x128xf32>
    %45 = vector.shape_cast %44 : vector<1x1x128xf32> to vector<1x128xf32>
    %46 = vector.broadcast %45 : vector<1x128xf32> to vector<8x128xf32>
    %47 = arith.addf %43, %46 : vector<8x128xf32>
    %48 = math.tanh %47 : vector<8x128xf32>
    %49 = arith.truncf %48 : vector<8x128xf32> to vector<8x128xbf16>
    %c0_31 = arith.constant 0 : index
    %c0_32 = arith.constant 0 : index
    %50 = vector.load %arg4[%c0_31, %c0_32] : memref<128x128xbf16, #tpu.memory_space<vmem>>, vector<128x128xbf16>
    %cst_33 = arith.constant dense<0.000000e+00> : vector<8x128xf32>
    %51 = tpu.matmul %39, %50, %cst_33 {dimension_numbers = #tpu.dot_dimension_numbers<[1], [0], [0], [1], [0, 0, 1, 1], [], []>} : vector<8x128xbf16>, vector<128x128xbf16>, vector<8x128xf32> -> vector<8x128xf32>
    %52 = vector.extract_strided_slice %15 {offsets = [16, 0], sizes = [8, 128], strides = [1, 1]} : vector<64x128xf32> to vector<8x128xf32>
    %53 = arith.addf %52, %51 : vector<8x128xf32>
    %54 = math.tanh %53 : vector<8x128xf32>
    %55 = arith.truncf %54 : vector<8x128xf32> to vector<8x128xbf16>
    %56 = tpu.concatenate %39, %49 in 1 : vector<8x128xbf16>, vector<8x128xbf16> -> vector<8x256xbf16>
    %c0_34 = arith.constant 0 : index
    %c0_35 = arith.constant 0 : index
    %c0_36 = arith.constant 0 : index
    %57 = vector.load %arg5[%c0_34, %c0_35, %c0_36] : memref<3x256x128xbf16, #tpu.memory_space<vmem>>, vector<1x256x128xbf16>
    %58 = vector.shape_cast %57 : vector<1x256x128xbf16> to vector<256x128xbf16>
    %cst_37 = arith.constant dense<0.000000e+00> : vector<8x128xf32>
    %59 = tpu.matmul %56, %58, %cst_37 {dimension_numbers = #tpu.dot_dimension_numbers<[1], [0], [0], [1], [0, 0, 1, 1], [], []>} : vector<8x256xbf16>, vector<256x128xbf16>, vector<8x128xf32> -> vector<8x128xf32>
    %c1_38 = arith.constant 1 : index
    %c0_39 = arith.constant 0 : index
    %c0_40 = arith.constant 0 : index
    %60 = vector.load %arg6[%c1_38, %c0_39, %c0_40] : memref<4x1x128xf32, #tpu.memory_space<vmem>>, vector<1x1x128xf32>
    %61 = vector.shape_cast %60 : vector<1x1x128xf32> to vector<1x128xf32>
    %62 = vector.broadcast %61 : vector<1x128xf32> to vector<8x128xf32>
    %63 = arith.addf %59, %62 : vector<8x128xf32>
    %64 = math.tanh %63 : vector<8x128xf32>
    %65 = arith.truncf %64 : vector<8x128xf32> to vector<8x128xbf16>
    %66 = tpu.concatenate %49, %24 in 1 : vector<8x128xbf16>, vector<8x128xbf16> -> vector<8x256xbf16>
    %c1_41 = arith.constant 1 : index
    %c0_42 = arith.constant 0 : index
    %c0_43 = arith.constant 0 : index
    %67 = vector.load %arg5[%c1_41, %c0_42, %c0_43] : memref<3x256x128xbf16, #tpu.memory_space<vmem>>, vector<1x256x128xbf16>
    %68 = vector.shape_cast %67 : vector<1x256x128xbf16> to vector<256x128xbf16>
    %cst_44 = arith.constant dense<0.000000e+00> : vector<8x128xf32>
    %69 = tpu.matmul %66, %68, %cst_44 {dimension_numbers = #tpu.dot_dimension_numbers<[1], [0], [0], [1], [0, 0, 1, 1], [], []>} : vector<8x256xbf16>, vector<256x128xbf16>, vector<8x128xf32> -> vector<8x128xf32>
    %c2_45 = arith.constant 2 : index
    %c0_46 = arith.constant 0 : index
    %c0_47 = arith.constant 0 : index
    %70 = vector.load %arg6[%c2_45, %c0_46, %c0_47] : memref<4x1x128xf32, #tpu.memory_space<vmem>>, vector<1x1x128xf32>
    %71 = vector.shape_cast %70 : vector<1x1x128xf32> to vector<1x128xf32>
    %72 = vector.broadcast %71 : vector<1x128xf32> to vector<8x128xf32>
    %73 = arith.addf %69, %72 : vector<8x128xf32>
    %74 = math.tanh %73 : vector<8x128xf32>
    %75 = arith.truncf %74 : vector<8x128xf32> to vector<8x128xbf16>
    %c0_48 = arith.constant 0 : index
    %c0_49 = arith.constant 0 : index
    %76 = vector.load %arg4[%c0_48, %c0_49] : memref<128x128xbf16, #tpu.memory_space<vmem>>, vector<128x128xbf16>
    %cst_50 = arith.constant dense<0.000000e+00> : vector<8x128xf32>
    %77 = tpu.matmul %55, %76, %cst_50 {dimension_numbers = #tpu.dot_dimension_numbers<[1], [0], [0], [1], [0, 0, 1, 1], [], []>} : vector<8x128xbf16>, vector<128x128xbf16>, vector<8x128xf32> -> vector<8x128xf32>
    %78 = vector.extract_strided_slice %15 {offsets = [24, 0], sizes = [8, 128], strides = [1, 1]} : vector<64x128xf32> to vector<8x128xf32>
    %79 = arith.addf %78, %77 : vector<8x128xf32>
    %80 = math.tanh %79 : vector<8x128xf32>
    %81 = arith.truncf %80 : vector<8x128xf32> to vector<8x128xbf16>
    %82 = tpu.concatenate %55, %65 in 1 : vector<8x128xbf16>, vector<8x128xbf16> -> vector<8x256xbf16>
    %c0_51 = arith.constant 0 : index
    %c0_52 = arith.constant 0 : index
    %c0_53 = arith.constant 0 : index
    %83 = vector.load %arg5[%c0_51, %c0_52, %c0_53] : memref<3x256x128xbf16, #tpu.memory_space<vmem>>, vector<1x256x128xbf16>
    %84 = vector.shape_cast %83 : vector<1x256x128xbf16> to vector<256x128xbf16>
    %cst_54 = arith.constant dense<0.000000e+00> : vector<8x128xf32>
    %85 = tpu.matmul %82, %84, %cst_54 {dimension_numbers = #tpu.dot_dimension_numbers<[1], [0], [0], [1], [0, 0, 1, 1], [], []>} : vector<8x256xbf16>, vector<256x128xbf16>, vector<8x128xf32> -> vector<8x128xf32>
    %c1_55 = arith.constant 1 : index
    %c0_56 = arith.constant 0 : index
    %c0_57 = arith.constant 0 : index
    %86 = vector.load %arg6[%c1_55, %c0_56, %c0_57] : memref<4x1x128xf32, #tpu.memory_space<vmem>>, vector<1x1x128xf32>
    %87 = vector.shape_cast %86 : vector<1x1x128xf32> to vector<1x128xf32>
    %88 = vector.broadcast %87 : vector<1x128xf32> to vector<8x128xf32>
    %89 = arith.addf %85, %88 : vector<8x128xf32>
    %90 = math.tanh %89 : vector<8x128xf32>
    %91 = arith.truncf %90 : vector<8x128xf32> to vector<8x128xbf16>
    %92 = tpu.concatenate %65, %75 in 1 : vector<8x128xbf16>, vector<8x128xbf16> -> vector<8x256xbf16>
    %c1_58 = arith.constant 1 : index
    %c0_59 = arith.constant 0 : index
    %c0_60 = arith.constant 0 : index
    %93 = vector.load %arg5[%c1_58, %c0_59, %c0_60] : memref<3x256x128xbf16, #tpu.memory_space<vmem>>, vector<1x256x128xbf16>
    %94 = vector.shape_cast %93 : vector<1x256x128xbf16> to vector<256x128xbf16>
    %cst_61 = arith.constant dense<0.000000e+00> : vector<8x128xf32>
    %95 = tpu.matmul %92, %94, %cst_61 {dimension_numbers = #tpu.dot_dimension_numbers<[1], [0], [0], [1], [0, 0, 1, 1], [], []>} : vector<8x256xbf16>, vector<256x128xbf16>, vector<8x128xf32> -> vector<8x128xf32>
    %c2_62 = arith.constant 2 : index
    %c0_63 = arith.constant 0 : index
    %c0_64 = arith.constant 0 : index
    %96 = vector.load %arg6[%c2_62, %c0_63, %c0_64] : memref<4x1x128xf32, #tpu.memory_space<vmem>>, vector<1x1x128xf32>
    %97 = vector.shape_cast %96 : vector<1x1x128xf32> to vector<1x128xf32>
    %98 = vector.broadcast %97 : vector<1x128xf32> to vector<8x128xf32>
    %99 = arith.addf %95, %98 : vector<8x128xf32>
    %100 = math.tanh %99 : vector<8x128xf32>
    %101 = arith.truncf %100 : vector<8x128xf32> to vector<8x128xbf16>
    %102 = tpu.concatenate %75, %27 in 1 : vector<8x128xbf16>, vector<8x128xbf16> -> vector<8x256xbf16>
    %c2_65 = arith.constant 2 : index
    %c0_66 = arith.constant 0 : index
    %c0_67 = arith.constant 0 : index
    %103 = vector.load %arg5[%c2_65, %c0_66, %c0_67] : memref<3x256x128xbf16, #tpu.memory_space<vmem>>, vector<1x256x128xbf16>
    %104 = vector.shape_cast %103 : vector<1x256x128xbf16> to vector<256x128xbf16>
    %cst_68 = arith.constant dense<0.000000e+00> : vector<8x128xf32>
    %105 = tpu.matmul %102, %104, %cst_68 {dimension_numbers = #tpu.dot_dimension_numbers<[1], [0], [0], [1], [0, 0, 1, 1], [], []>} : vector<8x256xbf16>, vector<256x128xbf16>, vector<8x128xf32> -> vector<8x128xf32>
    %c3_69 = arith.constant 3 : index
    %c0_70 = arith.constant 0 : index
    %c0_71 = arith.constant 0 : index
    %106 = vector.load %arg6[%c3_69, %c0_70, %c0_71] : memref<4x1x128xf32, #tpu.memory_space<vmem>>, vector<1x1x128xf32>
    %107 = vector.shape_cast %106 : vector<1x1x128xf32> to vector<1x128xf32>
    %108 = vector.broadcast %107 : vector<1x128xf32> to vector<8x128xf32>
    %109 = arith.addf %105, %108 : vector<8x128xf32>
    %110 = math.tanh %109 : vector<8x128xf32>
    %111 = arith.truncf %110 : vector<8x128xf32> to vector<8x128xbf16>
    %c0_72 = arith.constant 0 : index
    %c0_73 = arith.constant 0 : index
    %112 = vector.load %arg7[%c0_72, %c0_73] : memref<128x128xbf16, #tpu.memory_space<vmem>>, vector<128x128xbf16>
    %cst_74 = arith.constant dense<0.000000e+00> : vector<8x128xf32>
    %113 = tpu.matmul %111, %112, %cst_74 {dimension_numbers = #tpu.dot_dimension_numbers<[1], [0], [0], [1], [0, 0, 1, 1], [], []>} : vector<8x128xbf16>, vector<128x128xbf16>, vector<8x128xf32> -> vector<8x128xf32>
    %c0_75 = arith.constant 0 : index
    %c0_76 = arith.constant 0 : index
    %114 = vector.load %arg8[%c0_75, %c0_76] : memref<1x128xf32, #tpu.memory_space<vmem>>, vector<1x128xf32>
    %115 = vector.broadcast %114 : vector<1x128xf32> to vector<8x128xf32>
    %116 = arith.addf %113, %115 : vector<8x128xf32>
    %c0_77 = arith.constant 0 : index
    %c0_78 = arith.constant 0 : index
    %c0_79 = arith.constant 0 : index
    %117 = vector.load %arg9[%c0_77, %c0_78, %c0_79] : memref<8x8x128xf32, #tpu.memory_space<vmem>>, vector<8x1x128xf32>
    %118 = vector.shape_cast %117 : vector<8x1x128xf32> to vector<8x128xf32>
    %119 = vector.shape_cast %116 : vector<8x128xf32> to vector<8x1x128xf32>
    tpu.vector_store %arg9[%c0_77, %c0_78, %c0_79], %119 {strides = array<i32>} : memref<8x8x128xf32, #tpu.memory_space<vmem>>, vector<8x1x128xf32>,
    %c0_80 = arith.constant 0 : index
    %c0_81 = arith.constant 0 : index
    %120 = vector.load %arg4[%c0_80, %c0_81] : memref<128x128xbf16, #tpu.memory_space<vmem>>, vector<128x128xbf16>
    %cst_82 = arith.constant dense<0.000000e+00> : vector<8x128xf32>
    %121 = tpu.matmul %81, %120, %cst_82 {dimension_numbers = #tpu.dot_dimension_numbers<[1], [0], [0], [1], [0, 0, 1, 1], [], []>} : vector<8x128xbf16>, vector<128x128xbf16>, vector<8x128xf32> -> vector<8x128xf32>
    %122 = vector.extract_strided_slice %15 {offsets = [32, 0], sizes = [8, 128], strides = [1, 1]} : vector<64x128xf32> to vector<8x128xf32>
    %123 = arith.addf %122, %121 : vector<8x128xf32>
    %124 = math.tanh %123 : vector<8x128xf32>
    %125 = arith.truncf %124 : vector<8x128xf32> to vector<8x128xbf16>
    %126 = tpu.concatenate %81, %91 in 1 : vector<8x128xbf16>, vector<8x128xbf16> -> vector<8x256xbf16>
    %c0_83 = arith.constant 0 : index
    %c0_84 = arith.constant 0 : index
    %c0_85 = arith.constant 0 : index
    %127 = vector.load %arg5[%c0_83, %c0_84, %c0_85] : memref<3x256x128xbf16, #tpu.memory_space<vmem>>, vector<1x256x128xbf16>
    %128 = vector.shape_cast %127 : vector<1x256x128xbf16> to vector<256x128xbf16>
    %cst_86 = arith.constant dense<0.000000e+00> : vector<8x128xf32>
    %129 = tpu.matmul %126, %128, %cst_86 {dimension_numbers = #tpu.dot_dimension_numbers<[1], [0], [0], [1], [0, 0, 1, 1], [], []>} : vector<8x256xbf16>, vector<256x128xbf16>, vector<8x128xf32> -> vector<8x128xf32>
    %c1_87 = arith.constant 1 : index
    %c0_88 = arith.constant 0 : index
    %c0_89 = arith.constant 0 : index
    %130 = vector.load %arg6[%c1_87, %c0_88, %c0_89] : memref<4x1x128xf32, #tpu.memory_space<vmem>>, vector<1x1x128xf32>
    %131 = vector.shape_cast %130 : vector<1x1x128xf32> to vector<1x128xf32>
    %132 = vector.broadcast %131 : vector<1x128xf32> to vector<8x128xf32>
    %133 = arith.addf %129, %132 : vector<8x128xf32>
    %134 = math.tanh %133 : vector<8x128xf32>
    %135 = arith.truncf %134 : vector<8x128xf32> to vector<8x128xbf16>
    %136 = tpu.concatenate %91, %101 in 1 : vector<8x128xbf16>, vector<8x128xbf16> -> vector<8x256xbf16>
    %c1_90 = arith.constant 1 : index
    %c0_91 = arith.constant 0 : index
    %c0_92 = arith.constant 0 : index
    %137 = vector.load %arg5[%c1_90, %c0_91, %c0_92] : memref<3x256x128xbf16, #tpu.memory_space<vmem>>, vector<1x256x128xbf16>
    %138 = vector.shape_cast %137 : vector<1x256x128xbf16> to vector<256x128xbf16>
    %cst_93 = arith.constant dense<0.000000e+00> : vector<8x128xf32>
    %139 = tpu.matmul %136, %138, %cst_93 {dimension_numbers = #tpu.dot_dimension_numbers<[1], [0], [0], [1], [0, 0, 1, 1], [], []>} : vector<8x256xbf16>, vector<256x128xbf16>, vector<8x128xf32> -> vector<8x128xf32>
    %c2_94 = arith.constant 2 : index
    %c0_95 = arith.constant 0 : index
    %c0_96 = arith.constant 0 : index
    %140 = vector.load %arg6[%c2_94, %c0_95, %c0_96] : memref<4x1x128xf32, #tpu.memory_space<vmem>>, vector<1x1x128xf32>
    %141 = vector.shape_cast %140 : vector<1x1x128xf32> to vector<1x128xf32>
    %142 = vector.broadcast %141 : vector<1x128xf32> to vector<8x128xf32>
    %143 = arith.addf %139, %142 : vector<8x128xf32>
    %144 = math.tanh %143 : vector<8x128xf32>
    %145 = arith.truncf %144 : vector<8x128xf32> to vector<8x128xbf16>
    %146 = tpu.concatenate %101, %111 in 1 : vector<8x128xbf16>, vector<8x128xbf16> -> vector<8x256xbf16>
    %c2_97 = arith.constant 2 : index
    %c0_98 = arith.constant 0 : index
    %c0_99 = arith.constant 0 : index
    %147 = vector.load %arg5[%c2_97, %c0_98, %c0_99] : memref<3x256x128xbf16, #tpu.memory_space<vmem>>, vector<1x256x128xbf16>
    %148 = vector.shape_cast %147 : vector<1x256x128xbf16> to vector<256x128xbf16>
    %cst_100 = arith.constant dense<0.000000e+00> : vector<8x128xf32>
    %149 = tpu.matmul %146, %148, %cst_100 {dimension_numbers = #tpu.dot_dimension_numbers<[1], [0], [0], [1], [0, 0, 1, 1], [], []>} : vector<8x256xbf16>, vector<256x128xbf16>, vector<8x128xf32> -> vector<8x128xf32>
    %c3_101 = arith.constant 3 : index
    %c0_102 = arith.constant 0 : index
    %c0_103 = arith.constant 0 : index
    %150 = vector.load %arg6[%c3_101, %c0_102, %c0_103] : memref<4x1x128xf32, #tpu.memory_space<vmem>>, vector<1x1x128xf32>
    %151 = vector.shape_cast %150 : vector<1x1x128xf32> to vector<1x128xf32>
    %152 = vector.broadcast %151 : vector<1x128xf32> to vector<8x128xf32>
    %153 = arith.addf %149, %152 : vector<8x128xf32>
    %154 = math.tanh %153 : vector<8x128xf32>
    %155 = arith.truncf %154 : vector<8x128xf32> to vector<8x128xbf16>
    %c0_104 = arith.constant 0 : index
    %c0_105 = arith.constant 0 : index
    %156 = vector.load %arg7[%c0_104, %c0_105] : memref<128x128xbf16, #tpu.memory_space<vmem>>, vector<128x128xbf16>
    %cst_106 = arith.constant dense<0.000000e+00> : vector<8x128xf32>
    %157 = tpu.matmul %155, %156, %cst_106 {dimension_numbers = #tpu.dot_dimension_numbers<[1], [0], [0], [1], [0, 0, 1, 1], [], []>} : vector<8x128xbf16>, vector<128x128xbf16>, vector<8x128xf32> -> vector<8x128xf32>
    %c0_107 = arith.constant 0 : index
    %c0_108 = arith.constant 0 : index
    %158 = vector.load %arg8[%c0_107, %c0_108] : memref<1x128xf32, #tpu.memory_space<vmem>>, vector<1x128xf32>
    %159 = vector.broadcast %158 : vector<1x128xf32> to vector<8x128xf32>
    %160 = arith.addf %157, %159 : vector<8x128xf32>
    %c0_109 = arith.constant 0 : index
    %c1_110 = arith.constant 1 : index
    %c0_111 = arith.constant 0 : index
    %161 = vector.load %arg9[%c0_109, %c1_110, %c0_111] : memref<8x8x128xf32, #tpu.memory_space<vmem>>, vector<8x1x128xf32>
    %162 = vector.shape_cast %161 : vector<8x1x128xf32> to vector<8x128xf32>
    %163 = vector.shape_cast %160 : vector<8x128xf32> to vector<8x1x128xf32>
    tpu.vector_store %arg9[%c0_109, %c1_110, %c0_111], %163 {strides = array<i32>} : memref<8x8x128xf32, #tpu.memory_space<vmem>>, vector<8x1x128xf32>,
    %c0_112 = arith.constant 0 : index
    %c0_113 = arith.constant 0 : index
    %164 = vector.load %arg4[%c0_112, %c0_113] : memref<128x128xbf16, #tpu.memory_space<vmem>>, vector<128x128xbf16>
    %cst_114 = arith.constant dense<0.000000e+00> : vector<8x128xf32>
    %165 = tpu.matmul %125, %164, %cst_114 {dimension_numbers = #tpu.dot_dimension_numbers<[1], [0], [0], [1], [0, 0, 1, 1], [], []>} : vector<8x128xbf16>, vector<128x128xbf16>, vector<8x128xf32> -> vector<8x128xf32>
    %166 = vector.extract_strided_slice %15 {offsets = [40, 0], sizes = [8, 128], strides = [1, 1]} : vector<64x128xf32> to vector<8x128xf32>
    %167 = arith.addf %166, %165 : vector<8x128xf32>
    %168 = math.tanh %167 : vector<8x128xf32>
    %169 = arith.truncf %168 : vector<8x128xf32> to vector<8x128xbf16>
    %170 = tpu.concatenate %125, %135 in 1 : vector<8x128xbf16>, vector<8x128xbf16> -> vector<8x256xbf16>
    %c0_115 = arith.constant 0 : index
    %c0_116 = arith.constant 0 : index
    %c0_117 = arith.constant 0 : index
    %171 = vector.load %arg5[%c0_115, %c0_116, %c0_117] : memref<3x256x128xbf16, #tpu.memory_space<vmem>>, vector<1x256x128xbf16>
    %172 = vector.shape_cast %171 : vector<1x256x128xbf16> to vector<256x128xbf16>
    %cst_118 = arith.constant dense<0.000000e+00> : vector<8x128xf32>
    %173 = tpu.matmul %170, %172, %cst_118 {dimension_numbers = #tpu.dot_dimension_numbers<[1], [0], [0], [1], [0, 0, 1, 1], [], []>} : vector<8x256xbf16>, vector<256x128xbf16>, vector<8x128xf32> -> vector<8x128xf32>
    %c1_119 = arith.constant 1 : index
    %c0_120 = arith.constant 0 : index
    %c0_121 = arith.constant 0 : index
    %174 = vector.load %arg6[%c1_119, %c0_120, %c0_121] : memref<4x1x128xf32, #tpu.memory_space<vmem>>, vector<1x1x128xf32>
    %175 = vector.shape_cast %174 : vector<1x1x128xf32> to vector<1x128xf32>
    %176 = vector.broadcast %175 : vector<1x128xf32> to vector<8x128xf32>
    %177 = arith.addf %173, %176 : vector<8x128xf32>
    %178 = math.tanh %177 : vector<8x128xf32>
    %179 = arith.truncf %178 : vector<8x128xf32> to vector<8x128xbf16>
    %180 = tpu.concatenate %135, %145 in 1 : vector<8x128xbf16>, vector<8x128xbf16> -> vector<8x256xbf16>
    %c1_122 = arith.constant 1 : index
    %c0_123 = arith.constant 0 : index
    %c0_124 = arith.constant 0 : index
    %181 = vector.load %arg5[%c1_122, %c0_123, %c0_124] : memref<3x256x128xbf16, #tpu.memory_space<vmem>>, vector<1x256x128xbf16>
    %182 = vector.shape_cast %181 : vector<1x256x128xbf16> to vector<256x128xbf16>
    %cst_125 = arith.constant dense<0.000000e+00> : vector<8x128xf32>
    %183 = tpu.matmul %180, %182, %cst_125 {dimension_numbers = #tpu.dot_dimension_numbers<[1], [0], [0], [1], [0, 0, 1, 1], [], []>} : vector<8x256xbf16>, vector<256x128xbf16>, vector<8x128xf32> -> vector<8x128xf32>
    %c2_126 = arith.constant 2 : index
    %c0_127 = arith.constant 0 : index
    %c0_128 = arith.constant 0 : index
    %184 = vector.load %arg6[%c2_126, %c0_127, %c0_128] : memref<4x1x128xf32, #tpu.memory_space<vmem>>, vector<1x1x128xf32>
    %185 = vector.shape_cast %184 : vector<1x1x128xf32> to vector<1x128xf32>
    %186 = vector.broadcast %185 : vector<1x128xf32> to vector<8x128xf32>
    %187 = arith.addf %183, %186 : vector<8x128xf32>
    %188 = math.tanh %187 : vector<8x128xf32>
    %189 = arith.truncf %188 : vector<8x128xf32> to vector<8x128xbf16>
    %190 = tpu.concatenate %145, %155 in 1 : vector<8x128xbf16>, vector<8x128xbf16> -> vector<8x256xbf16>
    %c2_129 = arith.constant 2 : index
    %c0_130 = arith.constant 0 : index
    %c0_131 = arith.constant 0 : index
    %191 = vector.load %arg5[%c2_129, %c0_130, %c0_131] : memref<3x256x128xbf16, #tpu.memory_space<vmem>>, vector<1x256x128xbf16>
    %192 = vector.shape_cast %191 : vector<1x256x128xbf16> to vector<256x128xbf16>
    %cst_132 = arith.constant dense<0.000000e+00> : vector<8x128xf32>
    %193 = tpu.matmul %190, %192, %cst_132 {dimension_numbers = #tpu.dot_dimension_numbers<[1], [0], [0], [1], [0, 0, 1, 1], [], []>} : vector<8x256xbf16>, vector<256x128xbf16>, vector<8x128xf32> -> vector<8x128xf32>
    %c3_133 = arith.constant 3 : index
    %c0_134 = arith.constant 0 : index
    %c0_135 = arith.constant 0 : index
    %194 = vector.load %arg6[%c3_133, %c0_134, %c0_135] : memref<4x1x128xf32, #tpu.memory_space<vmem>>, vector<1x1x128xf32>
    %195 = vector.shape_cast %194 : vector<1x1x128xf32> to vector<1x128xf32>
    %196 = vector.broadcast %195 : vector<1x128xf32> to vector<8x128xf32>
    %197 = arith.addf %193, %196 : vector<8x128xf32>
    %198 = math.tanh %197 : vector<8x128xf32>
    %199 = arith.truncf %198 : vector<8x128xf32> to vector<8x128xbf16>
    %c0_136 = arith.constant 0 : index
    %c0_137 = arith.constant 0 : index
    %200 = vector.load %arg7[%c0_136, %c0_137] : memref<128x128xbf16, #tpu.memory_space<vmem>>, vector<128x128xbf16>
    %cst_138 = arith.constant dense<0.000000e+00> : vector<8x128xf32>
    %201 = tpu.matmul %199, %200, %cst_138 {dimension_numbers = #tpu.dot_dimension_numbers<[1], [0], [0], [1], [0, 0, 1, 1], [], []>} : vector<8x128xbf16>, vector<128x128xbf16>, vector<8x128xf32> -> vector<8x128xf32>
    %c0_139 = arith.constant 0 : index
    %c0_140 = arith.constant 0 : index
    %202 = vector.load %arg8[%c0_139, %c0_140] : memref<1x128xf32, #tpu.memory_space<vmem>>, vector<1x128xf32>
    %203 = vector.broadcast %202 : vector<1x128xf32> to vector<8x128xf32>
    %204 = arith.addf %201, %203 : vector<8x128xf32>
    %c0_141 = arith.constant 0 : index
    %c2_142 = arith.constant 2 : index
    %c0_143 = arith.constant 0 : index
    %205 = vector.load %arg9[%c0_141, %c2_142, %c0_143] : memref<8x8x128xf32, #tpu.memory_space<vmem>>, vector<8x1x128xf32>
    %206 = vector.shape_cast %205 : vector<8x1x128xf32> to vector<8x128xf32>
    %207 = vector.shape_cast %204 : vector<8x128xf32> to vector<8x1x128xf32>
    tpu.vector_store %arg9[%c0_141, %c2_142, %c0_143], %207 {strides = array<i32>} : memref<8x8x128xf32, #tpu.memory_space<vmem>>, vector<8x1x128xf32>,
    %c0_144 = arith.constant 0 : index
    %c0_145 = arith.constant 0 : index
    %208 = vector.load %arg4[%c0_144, %c0_145] : memref<128x128xbf16, #tpu.memory_space<vmem>>, vector<128x128xbf16>
    %cst_146 = arith.constant dense<0.000000e+00> : vector<8x128xf32>
    %209 = tpu.matmul %169, %208, %cst_146 {dimension_numbers = #tpu.dot_dimension_numbers<[1], [0], [0], [1], [0, 0, 1, 1], [], []>} : vector<8x128xbf16>, vector<128x128xbf16>, vector<8x128xf32> -> vector<8x128xf32>
    %210 = vector.extract_strided_slice %15 {offsets = [48, 0], sizes = [8, 128], strides = [1, 1]} : vector<64x128xf32> to vector<8x128xf32>
    %211 = arith.addf %210, %209 : vector<8x128xf32>
    %212 = math.tanh %211 : vector<8x128xf32>
    %213 = arith.truncf %212 : vector<8x128xf32> to vector<8x128xbf16>
    %214 = tpu.concatenate %169, %179 in 1 : vector<8x128xbf16>, vector<8x128xbf16> -> vector<8x256xbf16>
    %c0_147 = arith.constant 0 : index
    %c0_148 = arith.constant 0 : index
    %c0_149 = arith.constant 0 : index
    %215 = vector.load %arg5[%c0_147, %c0_148, %c0_149] : memref<3x256x128xbf16, #tpu.memory_space<vmem>>, vector<1x256x128xbf16>
    %216 = vector.shape_cast %215 : vector<1x256x128xbf16> to vector<256x128xbf16>
    %cst_150 = arith.constant dense<0.000000e+00> : vector<8x128xf32>
    %217 = tpu.matmul %214, %216, %cst_150 {dimension_numbers = #tpu.dot_dimension_numbers<[1], [0], [0], [1], [0, 0, 1, 1], [], []>} : vector<8x256xbf16>, vector<256x128xbf16>, vector<8x128xf32> -> vector<8x128xf32>
    %c1_151 = arith.constant 1 : index
    %c0_152 = arith.constant 0 : index
    %c0_153 = arith.constant 0 : index
    %218 = vector.load %arg6[%c1_151, %c0_152, %c0_153] : memref<4x1x128xf32, #tpu.memory_space<vmem>>, vector<1x1x128xf32>
    %219 = vector.shape_cast %218 : vector<1x1x128xf32> to vector<1x128xf32>
    %220 = vector.broadcast %219 : vector<1x128xf32> to vector<8x128xf32>
    %221 = arith.addf %217, %220 : vector<8x128xf32>
    %222 = math.tanh %221 : vector<8x128xf32>
    %223 = arith.truncf %222 : vector<8x128xf32> to vector<8x128xbf16>
    %224 = tpu.concatenate %179, %189 in 1 : vector<8x128xbf16>, vector<8x128xbf16> -> vector<8x256xbf16>
    %c1_154 = arith.constant 1 : index
    %c0_155 = arith.constant 0 : index
    %c0_156 = arith.constant 0 : index
    %225 = vector.load %arg5[%c1_154, %c0_155, %c0_156] : memref<3x256x128xbf16, #tpu.memory_space<vmem>>, vector<1x256x128xbf16>
    %226 = vector.shape_cast %225 : vector<1x256x128xbf16> to vector<256x128xbf16>
    %cst_157 = arith.constant dense<0.000000e+00> : vector<8x128xf32>
    %227 = tpu.matmul %224, %226, %cst_157 {dimension_numbers = #tpu.dot_dimension_numbers<[1], [0], [0], [1], [0, 0, 1, 1], [], []>} : vector<8x256xbf16>, vector<256x128xbf16>, vector<8x128xf32> -> vector<8x128xf32>
    %c2_158 = arith.constant 2 : index
    %c0_159 = arith.constant 0 : index
    %c0_160 = arith.constant 0 : index
    %228 = vector.load %arg6[%c2_158, %c0_159, %c0_160] : memref<4x1x128xf32, #tpu.memory_space<vmem>>, vector<1x1x128xf32>
    %229 = vector.shape_cast %228 : vector<1x1x128xf32> to vector<1x128xf32>
    %230 = vector.broadcast %229 : vector<1x128xf32> to vector<8x128xf32>
    %231 = arith.addf %227, %230 : vector<8x128xf32>
    %232 = math.tanh %231 : vector<8x128xf32>
    %233 = arith.truncf %232 : vector<8x128xf32> to vector<8x128xbf16>
    %234 = tpu.concatenate %189, %199 in 1 : vector<8x128xbf16>, vector<8x128xbf16> -> vector<8x256xbf16>
    %c2_161 = arith.constant 2 : index
    %c0_162 = arith.constant 0 : index
    %c0_163 = arith.constant 0 : index
    %235 = vector.load %arg5[%c2_161, %c0_162, %c0_163] : memref<3x256x128xbf16, #tpu.memory_space<vmem>>, vector<1x256x128xbf16>
    %236 = vector.shape_cast %235 : vector<1x256x128xbf16> to vector<256x128xbf16>
    %cst_164 = arith.constant dense<0.000000e+00> : vector<8x128xf32>
    %237 = tpu.matmul %234, %236, %cst_164 {dimension_numbers = #tpu.dot_dimension_numbers<[1], [0], [0], [1], [0, 0, 1, 1], [], []>} : vector<8x256xbf16>, vector<256x128xbf16>, vector<8x128xf32> -> vector<8x128xf32>
    %c3_165 = arith.constant 3 : index
    %c0_166 = arith.constant 0 : index
    %c0_167 = arith.constant 0 : index
    %238 = vector.load %arg6[%c3_165, %c0_166, %c0_167] : memref<4x1x128xf32, #tpu.memory_space<vmem>>, vector<1x1x128xf32>
    %239 = vector.shape_cast %238 : vector<1x1x128xf32> to vector<1x128xf32>
    %240 = vector.broadcast %239 : vector<1x128xf32> to vector<8x128xf32>
    %241 = arith.addf %237, %240 : vector<8x128xf32>
    %242 = math.tanh %241 : vector<8x128xf32>
    %243 = arith.truncf %242 : vector<8x128xf32> to vector<8x128xbf16>
    %c0_168 = arith.constant 0 : index
    %c0_169 = arith.constant 0 : index
    %244 = vector.load %arg7[%c0_168, %c0_169] : memref<128x128xbf16, #tpu.memory_space<vmem>>, vector<128x128xbf16>
    %cst_170 = arith.constant dense<0.000000e+00> : vector<8x128xf32>
    %245 = tpu.matmul %243, %244, %cst_170 {dimension_numbers = #tpu.dot_dimension_numbers<[1], [0], [0], [1], [0, 0, 1, 1], [], []>} : vector<8x128xbf16>, vector<128x128xbf16>, vector<8x128xf32> -> vector<8x128xf32>
    %c0_171 = arith.constant 0 : index
    %c0_172 = arith.constant 0 : index
    %246 = vector.load %arg8[%c0_171, %c0_172] : memref<1x128xf32, #tpu.memory_space<vmem>>, vector<1x128xf32>
    %247 = vector.broadcast %246 : vector<1x128xf32> to vector<8x128xf32>
    %248 = arith.addf %245, %247 : vector<8x128xf32>
    %c0_173 = arith.constant 0 : index
    %c3_174 = arith.constant 3 : index
    %c0_175 = arith.constant 0 : index
    %249 = vector.load %arg9[%c0_173, %c3_174, %c0_175] : memref<8x8x128xf32, #tpu.memory_space<vmem>>, vector<8x1x128xf32>
    %250 = vector.shape_cast %249 : vector<8x1x128xf32> to vector<8x128xf32>
    %251 = vector.shape_cast %248 : vector<8x128xf32> to vector<8x1x128xf32>
    tpu.vector_store %arg9[%c0_173, %c3_174, %c0_175], %251 {strides = array<i32>} : memref<8x8x128xf32, #tpu.memory_space<vmem>>, vector<8x1x128xf32>,
    %c0_176 = arith.constant 0 : index
    %c0_177 = arith.constant 0 : index
    %252 = vector.load %arg4[%c0_176, %c0_177] : memref<128x128xbf16, #tpu.memory_space<vmem>>, vector<128x128xbf16>
    %cst_178 = arith.constant dense<0.000000e+00> : vector<8x128xf32>
    %253 = tpu.matmul %213, %252, %cst_178 {dimension_numbers = #tpu.dot_dimension_numbers<[1], [0], [0], [1], [0, 0, 1, 1], [], []>} : vector<8x128xbf16>, vector<128x128xbf16>, vector<8x128xf32> -> vector<8x128xf32>
    %254 = vector.extract_strided_slice %15 {offsets = [56, 0], sizes = [8, 128], strides = [1, 1]} : vector<64x128xf32> to vector<8x128xf32>
    %255 = arith.addf %254, %253 : vector<8x128xf32>
    %256 = math.tanh %255 : vector<8x128xf32>
    %257 = arith.truncf %256 : vector<8x128xf32> to vector<8x128xbf16>
    %258 = arith.extf %257 : vector<8x128xbf16> to vector<8x128xf32>
    %c0_179 = arith.constant 0 : index
    %c0_180 = arith.constant 0 : index
    %c0_181 = arith.constant 0 : index
    %259 = vector.load %arg10[%c0_179, %c0_180, %c0_181] : memref<4x8x128xf32, #tpu.memory_space<vmem>>, vector<1x8x128xf32>
    %260 = vector.shape_cast %259 : vector<1x8x128xf32> to vector<8x128xf32>
    %261 = vector.shape_cast %258 : vector<8x128xf32> to vector<1x8x128xf32>
    tpu.vector_store %arg10[%c0_179, %c0_180, %c0_181], %261 {strides = array<i32>} : memref<4x8x128xf32, #tpu.memory_space<vmem>>, vector<1x8x128xf32>,
    %262 = tpu.concatenate %213, %223 in 1 : vector<8x128xbf16>, vector<8x128xbf16> -> vector<8x256xbf16>
    %c0_182 = arith.constant 0 : index
    %c0_183 = arith.constant 0 : index
    %c0_184 = arith.constant 0 : index
    %263 = vector.load %arg5[%c0_182, %c0_183, %c0_184] : memref<3x256x128xbf16, #tpu.memory_space<vmem>>, vector<1x256x128xbf16>
    %264 = vector.shape_cast %263 : vector<1x256x128xbf16> to vector<256x128xbf16>
    %cst_185 = arith.constant dense<0.000000e+00> : vector<8x128xf32>
    %265 = tpu.matmul %262, %264, %cst_185 {dimension_numbers = #tpu.dot_dimension_numbers<[1], [0], [0], [1], [0, 0, 1, 1], [], []>} : vector<8x256xbf16>, vector<256x128xbf16>, vector<8x128xf32> -> vector<8x128xf32>
    %c1_186 = arith.constant 1 : index
    %c0_187 = arith.constant 0 : index
    %c0_188 = arith.constant 0 : index
    %266 = vector.load %arg6[%c1_186, %c0_187, %c0_188] : memref<4x1x128xf32, #tpu.memory_space<vmem>>, vector<1x1x128xf32>
    %267 = vector.shape_cast %266 : vector<1x1x128xf32> to vector<1x128xf32>
    %268 = vector.broadcast %267 : vector<1x128xf32> to vector<8x128xf32>
    %269 = arith.addf %265, %268 : vector<8x128xf32>
    %270 = math.tanh %269 : vector<8x128xf32>
    %271 = arith.truncf %270 : vector<8x128xf32> to vector<8x128xbf16>
    %272 = tpu.concatenate %223, %233 in 1 : vector<8x128xbf16>, vector<8x128xbf16> -> vector<8x256xbf16>
    %c1_189 = arith.constant 1 : index
    %c0_190 = arith.constant 0 : index
    %c0_191 = arith.constant 0 : index
    %273 = vector.load %arg5[%c1_189, %c0_190, %c0_191] : memref<3x256x128xbf16, #tpu.memory_space<vmem>>, vector<1x256x128xbf16>
    %274 = vector.shape_cast %273 : vector<1x256x128xbf16> to vector<256x128xbf16>
    %cst_192 = arith.constant dense<0.000000e+00> : vector<8x128xf32>
    %275 = tpu.matmul %272, %274, %cst_192 {dimension_numbers = #tpu.dot_dimension_numbers<[1], [0], [0], [1], [0, 0, 1, 1], [], []>} : vector<8x256xbf16>, vector<256x128xbf16>, vector<8x128xf32> -> vector<8x128xf32>
    %c2_193 = arith.constant 2 : index
    %c0_194 = arith.constant 0 : index
    %c0_195 = arith.constant 0 : index
    %276 = vector.load %arg6[%c2_193, %c0_194, %c0_195] : memref<4x1x128xf32, #tpu.memory_space<vmem>>, vector<1x1x128xf32>
    %277 = vector.shape_cast %276 : vector<1x1x128xf32> to vector<1x128xf32>
    %278 = vector.broadcast %277 : vector<1x128xf32> to vector<8x128xf32>
    %279 = arith.addf %275, %278 : vector<8x128xf32>
    %280 = math.tanh %279 : vector<8x128xf32>
    %281 = arith.truncf %280 : vector<8x128xf32> to vector<8x128xbf16>
    %282 = tpu.concatenate %233, %243 in 1 : vector<8x128xbf16>, vector<8x128xbf16> -> vector<8x256xbf16>
    %c2_196 = arith.constant 2 : index
    %c0_197 = arith.constant 0 : index
    %c0_198 = arith.constant 0 : index
    %283 = vector.load %arg5[%c2_196, %c0_197, %c0_198] : memref<3x256x128xbf16, #tpu.memory_space<vmem>>, vector<1x256x128xbf16>
    %284 = vector.shape_cast %283 : vector<1x256x128xbf16> to vector<256x128xbf16>
    %cst_199 = arith.constant dense<0.000000e+00> : vector<8x128xf32>
    %285 = tpu.matmul %282, %284, %cst_199 {dimension_numbers = #tpu.dot_dimension_numbers<[1], [0], [0], [1], [0, 0, 1, 1], [], []>} : vector<8x256xbf16>, vector<256x128xbf16>, vector<8x128xf32> -> vector<8x128xf32>
    %c3_200 = arith.constant 3 : index
    %c0_201 = arith.constant 0 : index
    %c0_202 = arith.constant 0 : index
    %286 = vector.load %arg6[%c3_200, %c0_201, %c0_202] : memref<4x1x128xf32, #tpu.memory_space<vmem>>, vector<1x1x128xf32>
    %287 = vector.shape_cast %286 : vector<1x1x128xf32> to vector<1x128xf32>
    %288 = vector.broadcast %287 : vector<1x128xf32> to vector<8x128xf32>
    %289 = arith.addf %285, %288 : vector<8x128xf32>
    %290 = math.tanh %289 : vector<8x128xf32>
    %291 = arith.truncf %290 : vector<8x128xf32> to vector<8x128xbf16>
    %c0_203 = arith.constant 0 : index
    %c0_204 = arith.constant 0 : index
    %292 = vector.load %arg7[%c0_203, %c0_204] : memref<128x128xbf16, #tpu.memory_space<vmem>>, vector<128x128xbf16>
    %cst_205 = arith.constant dense<0.000000e+00> : vector<8x128xf32>
    %293 = tpu.matmul %291, %292, %cst_205 {dimension_numbers = #tpu.dot_dimension_numbers<[1], [0], [0], [1], [0, 0, 1, 1], [], []>} : vector<8x128xbf16>, vector<128x128xbf16>, vector<8x128xf32> -> vector<8x128xf32>
    %c0_206 = arith.constant 0 : index
    %c0_207 = arith.constant 0 : index
    %294 = vector.load %arg8[%c0_206, %c0_207] : memref<1x128xf32, #tpu.memory_space<vmem>>, vector<1x128xf32>
    %295 = vector.broadcast %294 : vector<1x128xf32> to vector<8x128xf32>
    %296 = arith.addf %293, %295 : vector<8x128xf32>
    %c0_208 = arith.constant 0 : index
    %c4 = arith.constant 4 : index
    %c0_209 = arith.constant 0 : index
    %297 = vector.load %arg9[%c0_208, %c4, %c0_209] : memref<8x8x128xf32, #tpu.memory_space<vmem>>, vector<8x1x128xf32>
    %298 = vector.shape_cast %297 : vector<8x1x128xf32> to vector<8x128xf32>
    %299 = vector.shape_cast %296 : vector<8x128xf32> to vector<8x1x128xf32>
    tpu.vector_store %arg9[%c0_208, %c4, %c0_209], %299 {strides = array<i32>} : memref<8x8x128xf32, #tpu.memory_space<vmem>>, vector<8x1x128xf32>,
    %300 = tpu.concatenate %257, %271 in 1 : vector<8x128xbf16>, vector<8x128xbf16> -> vector<8x256xbf16>
    %c0_210 = arith.constant 0 : index
    %c0_211 = arith.constant 0 : index
    %c0_212 = arith.constant 0 : index
    %301 = vector.load %arg5[%c0_210, %c0_211, %c0_212] : memref<3x256x128xbf16, #tpu.memory_space<vmem>>, vector<1x256x128xbf16>
    %302 = vector.shape_cast %301 : vector<1x256x128xbf16> to vector<256x128xbf16>
    %cst_213 = arith.constant dense<0.000000e+00> : vector<8x128xf32>
    %303 = tpu.matmul %300, %302, %cst_213 {dimension_numbers = #tpu.dot_dimension_numbers<[1], [0], [0], [1], [0, 0, 1, 1], [], []>} : vector<8x256xbf16>, vector<256x128xbf16>, vector<8x128xf32> -> vector<8x128xf32>
    %c1_214 = arith.constant 1 : index
    %c0_215 = arith.constant 0 : index
    %c0_216 = arith.constant 0 : index
    %304 = vector.load %arg6[%c1_214, %c0_215, %c0_216] : memref<4x1x128xf32, #tpu.memory_space<vmem>>, vector<1x1x128xf32>
    %305 = vector.shape_cast %304 : vector<1x1x128xf32> to vector<1x128xf32>
    %306 = vector.broadcast %305 : vector<1x128xf32> to vector<8x128xf32>
    %307 = arith.addf %303, %306 : vector<8x128xf32>
    %308 = math.tanh %307 : vector<8x128xf32>
    %309 = arith.truncf %308 : vector<8x128xf32> to vector<8x128xbf16>
    %310 = arith.extf %309 : vector<8x128xbf16> to vector<8x128xf32>
    %c1_217 = arith.constant 1 : index
    %c0_218 = arith.constant 0 : index
    %c0_219 = arith.constant 0 : index
    %311 = vector.load %arg10[%c1_217, %c0_218, %c0_219] : memref<4x8x128xf32, #tpu.memory_space<vmem>>, vector<1x8x128xf32>
    %312 = vector.shape_cast %311 : vector<1x8x128xf32> to vector<8x128xf32>
    %313 = vector.shape_cast %310 : vector<8x128xf32> to vector<1x8x128xf32>
    tpu.vector_store %arg10[%c1_217, %c0_218, %c0_219], %313 {strides = array<i32>} : memref<4x8x128xf32, #tpu.memory_space<vmem>>, vector<1x8x128xf32>,
    %314 = tpu.concatenate %271, %281 in 1 : vector<8x128xbf16>, vector<8x128xbf16> -> vector<8x256xbf16>
    %c1_220 = arith.constant 1 : index
    %c0_221 = arith.constant 0 : index
    %c0_222 = arith.constant 0 : index
    %315 = vector.load %arg5[%c1_220, %c0_221, %c0_222] : memref<3x256x128xbf16, #tpu.memory_space<vmem>>, vector<1x256x128xbf16>
    %316 = vector.shape_cast %315 : vector<1x256x128xbf16> to vector<256x128xbf16>
    %cst_223 = arith.constant dense<0.000000e+00> : vector<8x128xf32>
    %317 = tpu.matmul %314, %316, %cst_223 {dimension_numbers = #tpu.dot_dimension_numbers<[1], [0], [0], [1], [0, 0, 1, 1], [], []>} : vector<8x256xbf16>, vector<256x128xbf16>, vector<8x128xf32> -> vector<8x128xf32>
    %c2_224 = arith.constant 2 : index
    %c0_225 = arith.constant 0 : index
    %c0_226 = arith.constant 0 : index
    %318 = vector.load %arg6[%c2_224, %c0_225, %c0_226] : memref<4x1x128xf32, #tpu.memory_space<vmem>>, vector<1x1x128xf32>
    %319 = vector.shape_cast %318 : vector<1x1x128xf32> to vector<1x128xf32>
    %320 = vector.broadcast %319 : vector<1x128xf32> to vector<8x128xf32>
    %321 = arith.addf %317, %320 : vector<8x128xf32>
    %322 = math.tanh %321 : vector<8x128xf32>
    %323 = arith.truncf %322 : vector<8x128xf32> to vector<8x128xbf16>
    %324 = tpu.concatenate %281, %291 in 1 : vector<8x128xbf16>, vector<8x128xbf16> -> vector<8x256xbf16>
    %c2_227 = arith.constant 2 : index
    %c0_228 = arith.constant 0 : index
    %c0_229 = arith.constant 0 : index
    %325 = vector.load %arg5[%c2_227, %c0_228, %c0_229] : memref<3x256x128xbf16, #tpu.memory_space<vmem>>, vector<1x256x128xbf16>
    %326 = vector.shape_cast %325 : vector<1x256x128xbf16> to vector<256x128xbf16>
    %cst_230 = arith.constant dense<0.000000e+00> : vector<8x128xf32>
    %327 = tpu.matmul %324, %326, %cst_230 {dimension_numbers = #tpu.dot_dimension_numbers<[1], [0], [0], [1], [0, 0, 1, 1], [], []>} : vector<8x256xbf16>, vector<256x128xbf16>, vector<8x128xf32> -> vector<8x128xf32>
    %c3_231 = arith.constant 3 : index
    %c0_232 = arith.constant 0 : index
    %c0_233 = arith.constant 0 : index
    %328 = vector.load %arg6[%c3_231, %c0_232, %c0_233] : memref<4x1x128xf32, #tpu.memory_space<vmem>>, vector<1x1x128xf32>
    %329 = vector.shape_cast %328 : vector<1x1x128xf32> to vector<1x128xf32>
    %330 = vector.broadcast %329 : vector<1x128xf32> to vector<8x128xf32>
    %331 = arith.addf %327, %330 : vector<8x128xf32>
    %332 = math.tanh %331 : vector<8x128xf32>
    %333 = arith.truncf %332 : vector<8x128xf32> to vector<8x128xbf16>
    %c0_234 = arith.constant 0 : index
    %c0_235 = arith.constant 0 : index
    %334 = vector.load %arg7[%c0_234, %c0_235] : memref<128x128xbf16, #tpu.memory_space<vmem>>, vector<128x128xbf16>
    %cst_236 = arith.constant dense<0.000000e+00> : vector<8x128xf32>
    %335 = tpu.matmul %333, %334, %cst_236 {dimension_numbers = #tpu.dot_dimension_numbers<[1], [0], [0], [1], [0, 0, 1, 1], [], []>} : vector<8x128xbf16>, vector<128x128xbf16>, vector<8x128xf32> -> vector<8x128xf32>
    %c0_237 = arith.constant 0 : index
    %c0_238 = arith.constant 0 : index
    %336 = vector.load %arg8[%c0_237, %c0_238] : memref<1x128xf32, #tpu.memory_space<vmem>>, vector<1x128xf32>
    %337 = vector.broadcast %336 : vector<1x128xf32> to vector<8x128xf32>
    %338 = arith.addf %335, %337 : vector<8x128xf32>
    %c0_239 = arith.constant 0 : index
    %c5 = arith.constant 5 : index
    %c0_240 = arith.constant 0 : index
    %339 = vector.load %arg9[%c0_239, %c5, %c0_240] : memref<8x8x128xf32, #tpu.memory_space<vmem>>, vector<8x1x128xf32>
    %340 = vector.shape_cast %339 : vector<8x1x128xf32> to vector<8x128xf32>
    %341 = vector.shape_cast %338 : vector<8x128xf32> to vector<8x1x128xf32>
    tpu.vector_store %arg9[%c0_239, %c5, %c0_240], %341 {strides = array<i32>} : memref<8x8x128xf32, #tpu.memory_space<vmem>>, vector<8x1x128xf32>,
    %342 = tpu.concatenate %309, %323 in 1 : vector<8x128xbf16>, vector<8x128xbf16> -> vector<8x256xbf16>
    %c1_241 = arith.constant 1 : index
    %c0_242 = arith.constant 0 : index
    %c0_243 = arith.constant 0 : index
    %343 = vector.load %arg5[%c1_241, %c0_242, %c0_243] : memref<3x256x128xbf16, #tpu.memory_space<vmem>>, vector<1x256x128xbf16>
    %344 = vector.shape_cast %343 : vector<1x256x128xbf16> to vector<256x128xbf16>
    %cst_244 = arith.constant dense<0.000000e+00> : vector<8x128xf32>
    %345 = tpu.matmul %342, %344, %cst_244 {dimension_numbers = #tpu.dot_dimension_numbers<[1], [0], [0], [1], [0, 0, 1, 1], [], []>} : vector<8x256xbf16>, vector<256x128xbf16>, vector<8x128xf32> -> vector<8x128xf32>
    %c2_245 = arith.constant 2 : index
    %c0_246 = arith.constant 0 : index
    %c0_247 = arith.constant 0 : index
    %346 = vector.load %arg6[%c2_245, %c0_246, %c0_247] : memref<4x1x128xf32, #tpu.memory_space<vmem>>, vector<1x1x128xf32>
    %347 = vector.shape_cast %346 : vector<1x1x128xf32> to vector<1x128xf32>
    %348 = vector.broadcast %347 : vector<1x128xf32> to vector<8x128xf32>
    %349 = arith.addf %345, %348 : vector<8x128xf32>
    %350 = math.tanh %349 : vector<8x128xf32>
    %351 = arith.truncf %350 : vector<8x128xf32> to vector<8x128xbf16>
    %352 = arith.extf %351 : vector<8x128xbf16> to vector<8x128xf32>
    %c2_248 = arith.constant 2 : index
    %c0_249 = arith.constant 0 : index
    %c0_250 = arith.constant 0 : index
    %353 = vector.load %arg10[%c2_248, %c0_249, %c0_250] : memref<4x8x128xf32, #tpu.memory_space<vmem>>, vector<1x8x128xf32>
    %354 = vector.shape_cast %353 : vector<1x8x128xf32> to vector<8x128xf32>
    %355 = vector.shape_cast %352 : vector<8x128xf32> to vector<1x8x128xf32>
    tpu.vector_store %arg10[%c2_248, %c0_249, %c0_250], %355 {strides = array<i32>} : memref<4x8x128xf32, #tpu.memory_space<vmem>>, vector<1x8x128xf32>,
    %356 = tpu.concatenate %323, %333 in 1 : vector<8x128xbf16>, vector<8x128xbf16> -> vector<8x256xbf16>
    %c2_251 = arith.constant 2 : index
    %c0_252 = arith.constant 0 : index
    %c0_253 = arith.constant 0 : index
    %357 = vector.load %arg5[%c2_251, %c0_252, %c0_253] : memref<3x256x128xbf16, #tpu.memory_space<vmem>>, vector<1x256x128xbf16>
    %358 = vector.shape_cast %357 : vector<1x256x128xbf16> to vector<256x128xbf16>
    %cst_254 = arith.constant dense<0.000000e+00> : vector<8x128xf32>
    %359 = tpu.matmul %356, %358, %cst_254 {dimension_numbers = #tpu.dot_dimension_numbers<[1], [0], [0], [1], [0, 0, 1, 1], [], []>} : vector<8x256xbf16>, vector<256x128xbf16>, vector<8x128xf32> -> vector<8x128xf32>
    %c3_255 = arith.constant 3 : index
    %c0_256 = arith.constant 0 : index
    %c0_257 = arith.constant 0 : index
    %360 = vector.load %arg6[%c3_255, %c0_256, %c0_257] : memref<4x1x128xf32, #tpu.memory_space<vmem>>, vector<1x1x128xf32>
    %361 = vector.shape_cast %360 : vector<1x1x128xf32> to vector<1x128xf32>
    %362 = vector.broadcast %361 : vector<1x128xf32> to vector<8x128xf32>
    %363 = arith.addf %359, %362 : vector<8x128xf32>
    %364 = math.tanh %363 : vector<8x128xf32>
    %365 = arith.truncf %364 : vector<8x128xf32> to vector<8x128xbf16>
    %c0_258 = arith.constant 0 : index
    %c0_259 = arith.constant 0 : index
    %366 = vector.load %arg7[%c0_258, %c0_259] : memref<128x128xbf16, #tpu.memory_space<vmem>>, vector<128x128xbf16>
    %cst_260 = arith.constant dense<0.000000e+00> : vector<8x128xf32>
    %367 = tpu.matmul %365, %366, %cst_260 {dimension_numbers = #tpu.dot_dimension_numbers<[1], [0], [0], [1], [0, 0, 1, 1], [], []>} : vector<8x128xbf16>, vector<128x128xbf16>, vector<8x128xf32> -> vector<8x128xf32>
    %c0_261 = arith.constant 0 : index
    %c0_262 = arith.constant 0 : index
    %368 = vector.load %arg8[%c0_261, %c0_262] : memref<1x128xf32, #tpu.memory_space<vmem>>, vector<1x128xf32>
    %369 = vector.broadcast %368 : vector<1x128xf32> to vector<8x128xf32>
    %370 = arith.addf %367, %369 : vector<8x128xf32>
    %c0_263 = arith.constant 0 : index
    %c6 = arith.constant 6 : index
    %c0_264 = arith.constant 0 : index
    %371 = vector.load %arg9[%c0_263, %c6, %c0_264] : memref<8x8x128xf32, #tpu.memory_space<vmem>>, vector<8x1x128xf32>
    %372 = vector.shape_cast %371 : vector<8x1x128xf32> to vector<8x128xf32>
    %373 = vector.shape_cast %370 : vector<8x128xf32> to vector<8x1x128xf32>
    tpu.vector_store %arg9[%c0_263, %c6, %c0_264], %373 {strides = array<i32>} : memref<8x8x128xf32, #tpu.memory_space<vmem>>, vector<8x1x128xf32>,
    %374 = tpu.concatenate %351, %365 in 1 : vector<8x128xbf16>, vector<8x128xbf16> -> vector<8x256xbf16>
    %c2_265 = arith.constant 2 : index
    %c0_266 = arith.constant 0 : index
    %c0_267 = arith.constant 0 : index
    %375 = vector.load %arg5[%c2_265, %c0_266, %c0_267] : memref<3x256x128xbf16, #tpu.memory_space<vmem>>, vector<1x256x128xbf16>
    %376 = vector.shape_cast %375 : vector<1x256x128xbf16> to vector<256x128xbf16>
    %cst_268 = arith.constant dense<0.000000e+00> : vector<8x128xf32>
    %377 = tpu.matmul %374, %376, %cst_268 {dimension_numbers = #tpu.dot_dimension_numbers<[1], [0], [0], [1], [0, 0, 1, 1], [], []>} : vector<8x256xbf16>, vector<256x128xbf16>, vector<8x128xf32> -> vector<8x128xf32>
    %c3_269 = arith.constant 3 : index
    %c0_270 = arith.constant 0 : index
    %c0_271 = arith.constant 0 : index
    %378 = vector.load %arg6[%c3_269, %c0_270, %c0_271] : memref<4x1x128xf32, #tpu.memory_space<vmem>>, vector<1x1x128xf32>
    %379 = vector.shape_cast %378 : vector<1x1x128xf32> to vector<1x128xf32>
    %380 = vector.broadcast %379 : vector<1x128xf32> to vector<8x128xf32>
    %381 = arith.addf %377, %380 : vector<8x128xf32>
    %382 = math.tanh %381 : vector<8x128xf32>
    %383 = arith.truncf %382 : vector<8x128xf32> to vector<8x128xbf16>
    %c0_272 = arith.constant 0 : index
    %c0_273 = arith.constant 0 : index
    %384 = vector.load %arg7[%c0_272, %c0_273] : memref<128x128xbf16, #tpu.memory_space<vmem>>, vector<128x128xbf16>
    %cst_274 = arith.constant dense<0.000000e+00> : vector<8x128xf32>
    %385 = tpu.matmul %383, %384, %cst_274 {dimension_numbers = #tpu.dot_dimension_numbers<[1], [0], [0], [1], [0, 0, 1, 1], [], []>} : vector<8x128xbf16>, vector<128x128xbf16>, vector<8x128xf32> -> vector<8x128xf32>
    %c0_275 = arith.constant 0 : index
    %c0_276 = arith.constant 0 : index
    %386 = vector.load %arg8[%c0_275, %c0_276] : memref<1x128xf32, #tpu.memory_space<vmem>>, vector<1x128xf32>
    %387 = vector.broadcast %386 : vector<1x128xf32> to vector<8x128xf32>
    %388 = arith.addf %385, %387 : vector<8x128xf32>
    %c0_277 = arith.constant 0 : index
    %c7 = arith.constant 7 : index
    %c0_278 = arith.constant 0 : index
    %389 = vector.load %arg9[%c0_277, %c7, %c0_278] : memref<8x8x128xf32, #tpu.memory_space<vmem>>, vector<8x1x128xf32>
    %390 = vector.shape_cast %389 : vector<8x1x128xf32> to vector<8x128xf32>
    %391 = vector.shape_cast %388 : vector<8x128xf32> to vector<8x1x128xf32>
    tpu.vector_store %arg9[%c0_277, %c7, %c0_278], %391 {strides = array<i32>} : memref<8x8x128xf32, #tpu.memory_space<vmem>>, vector<8x1x128xf32>,
    %392 = arith.extf %383 : vector<8x128xbf16> to vector<8x128xf32>
    %c3_279 = arith.constant 3 : index
    %c0_280 = arith.constant 0 : index
    %c0_281 = arith.constant 0 : index
    %393 = vector.load %arg10[%c3_279, %c0_280, %c0_281] : memref<4x8x128xf32, #tpu.memory_space<vmem>>, vector<1x8x128xf32>
    %394 = vector.shape_cast %393 : vector<1x8x128xf32> to vector<8x128xf32>
    %395 = vector.shape_cast %392 : vector<8x128xf32> to vector<1x8x128xf32>
    tpu.vector_store %arg10[%c3_279, %c0_280, %c0_281], %395 {strides = array<i32>} : memref<4x8x128xf32, #tpu.memory_space<vmem>>, vector<1x8x128xf32>,
    return
  }
}

</mosaic_0001>

<llo_original>
// kernel: char_rnn_forward.1
$region0: #{char_rnn_forward.1}
  #allocation0 [shape = 'u32[]', space=smem, size = 0x4, offset = 0x4, fixed_abs, tag = 'smem constant byte address 0x4 - core index']
  #allocation1 [shape = 'u32[144,128]{1,0:T(1,128)}', space=vmem, size = 0x12000, scoped, tag = 'internal scratch']
  %s0 = inlined_call_operand.vmem [shape: s32[64,1], index: 0, kind: input, shape index: {}]
  %s1 = inlined_call_operand.vmem [shape: f32[4,8,128], index: 1, kind: input, shape index: {}, may-alias: {1,10}]
  %s2 = inlined_call_operand.vmem [shape: bf16[128,128], index: 2, kind: input, shape index: {}]
  %s3 = inlined_call_operand.hbm [shape: bf16[128,128], index: 3, kind: input, shape index: {}]
  %s4 = inlined_call_operand.hbm [shape: bf16[128,128], index: 4, kind: input, shape index: {}]
  %s5 = inlined_call_operand.hbm [shape: bf16[3,256,128], index: 5, kind: input, shape index: {}]
  %s6 = inlined_call_operand.vmem [shape: f32[4,1,128], index: 6, kind: input, shape index: {}]
  %s7 = inlined_call_operand.vmem [shape: bf16[128,128], index: 7, kind: input, shape index: {}]
  %s8 = inlined_call_operand.vmem [shape: f32[1,128], index: 8, kind: input, shape index: {}]
  %s9 = inlined_call_operand.hbm [shape: f32[8,8,128], index: 9, kind: output, shape index: {0}]
  %s10 = inlined_call_operand.vmem [shape: f32[4,8,128], index: 10, kind: output, shape index: {1}, may-alias: {1,10}]
  %11 = xla_tuple %s9, %s10
  %s12 = sld [smem:[#allocation0]]
  $region66: #{char_rnn_forward.1} parent=0
    _
  %s14 = ssub.s32 1, %s12
  %s15 = scalar_select 0, %s14, %s12
  $region1: #{char_rnn_forward.1} parent=0
    #allocation2 [shape = 'u8[32768]{0}', space=vmem, size = 0x8000, scoped, tag = 'input window, operand 3, single buffered']
    #allocation3 [shape = 's32[1]{0}', space=sflag, size = 0x4, scoped, tag = 'scoped memory for char_rnn_forward.1']
    #allocation4 [shape = 's32[1]{0}', space=sflag, size = 0x4, scoped, tag = 'scoped memory for char_rnn_forward.1']
    #allocation5 [shape = 'u8[32768]{0}', space=vmem, size = 0x8000, scoped, tag = 'input window, operand 4, single buffered']
    #allocation6 [shape = 's32[1]{0}', space=sflag, size = 0x4, scoped, tag = 'scoped memory for char_rnn_forward.1']
    #allocation7 [shape = 'u8[196608]{0}', space=vmem, size = 0x30000, scoped, tag = 'input window, operand 5, single buffered']
    #allocation8 [shape = 'u8[32768]{0}', space=vmem, size = 0x8000, scoped, tag = 'output window, operand 0, single buffered']
    %16 = vsyncpa [#allocation3], 0
    %17 = vsyncpa [#allocation6], 0
    %18 = vsyncpa [#allocation4], 0
    // Predicated region
    $region2: #{char_rnn_forward.1} parent=1 // pred_check
      _
    $region3: #{char_rnn_forward.1} parent=1 // pred_check_branch
      %20 = sbr.rel (0) target = $region5
    $region4: #{char_rnn_forward.1} parent=1 // pred_region
      _
    $region5: #{char_rnn_forward.1} parent=1 // pred_fallthru
      _
    // Predicated region
    $region6: #{char_rnn_forward.1} parent=1 // pred_check
      _
    $region7: #{char_rnn_forward.1} parent=1 // pred_check_branch
      %22 = sbr.rel (0) target = $region9
    $region8: #{char_rnn_forward.1} parent=1 // pred_region
      _
    $region9: #{char_rnn_forward.1} parent=1 // pred_fallthru
      _
    // Predicated region
    $region10: #{char_rnn_forward.1} parent=1 // pred_check
      _
    $region11: #{char_rnn_forward.1} parent=1 // pred_check_branch
      %24 = sbr.rel (0) target = $region13
    $region12: #{char_rnn_forward.1} parent=1 // pred_region
      _
    $region13: #{char_rnn_forward.1} parent=1 // pred_fallthru
      _
    // Predicated region
    $region14: #{char_rnn_forward.1} parent=1 // pred_check
      _
    $region15: #{char_rnn_forward.1} parent=1 // pred_check_branch
      %26 = sbr.rel (0) target = $region17
    $region16: #{char_rnn_forward.1} parent=1 // pred_region
      %s28 = ssub.s32 1024, 1024
      %29 = vsyncadd [#allocation3], %s28
      %s30 = sshll.u32 [#allocation2], 4
      %s31 = int_to_ptr.vmem [resolvable:$true] %s30
      %36 = dma.hbm_to_vmem [thread:$0]  %s3, 1024, %s31, [#allocation3], 64, 64, 4
    $region17: #{char_rnn_forward.1} parent=1 // pred_fallthru
      _
    // Predicated region
    $region18: #{char_rnn_forward.1} parent=1 // pred_check
      _
    $region19: #{char_rnn_forward.1} parent=1 // pred_check_branch
      %38 = sbr.rel (0) target = $region21
    $region20: #{char_rnn_forward.1} parent=1 // pred_region
      %s40 = ssub.s32 1024, 1024
      %41 = vsyncadd [#allocation6], %s40
      %s42 = sshll.u32 [#allocation5], 4
      %s43 = int_to_ptr.vmem [resolvable:$true] %s42
      %48 = dma.hbm_to_vmem [thread:$0]  %s4, 1024, %s43, [#allocation6], 64, 64, 4
    $region21: #{char_rnn_forward.1} parent=1 // pred_fallthru
      _
    // Predicated region
    $region22: #{char_rnn_forward.1} parent=1 // pred_check
      _
    $region23: #{char_rnn_forward.1} parent=1 // pred_check_branch
      %50 = sbr.rel (0) target = $region25
    $region24: #{char_rnn_forward.1} parent=1 // pred_region
      %s52 = ssub.s32 6144, 6144
      %53 = vsyncadd [#allocation6], %s52
      %s54 = sshll.u32 [#allocation7], 4
      %s55 = int_to_ptr.vmem [resolvable:$true] %s54
      %60 = dma.hbm_to_vmem [thread:$0]  %s5, 6144, %s55, [#allocation6], 64, 64, 4
    $region25: #{char_rnn_forward.1} parent=1 // pred_fallthru
      _
    // Predicated region
    $region26: #{char_rnn_forward.1} parent=1 // pred_check
      _
    $region27: #{char_rnn_forward.1} parent=1 // pred_check_branch
      %62 = sbr.rel (0) target = $region29
    $region28: #{char_rnn_forward.1} parent=1 // pred_region
      _
    $region29: #{char_rnn_forward.1} parent=1 // pred_fallthru
      _
    // Predicated region
    $region30: #{char_rnn_forward.1} parent=1 // pred_check
      _
    $region31: #{char_rnn_forward.1} parent=1 // pred_check_branch
      %64 = sbr.rel (0) target = $region33
    $region32: #{char_rnn_forward.1} parent=1 // pred_region
      _
    $region33: #{char_rnn_forward.1} parent=1 // pred_fallthru
      _
    // Predicated region
    $region34: #{char_rnn_forward.1} parent=1 // pred_check
      _
    $region35: #{char_rnn_forward.1} parent=1 // pred_check_branch
      %66 = sbr.rel (0) target = $region37
    $region36: #{char_rnn_forward.1} parent=1 // pred_region
      _
    $region37: #{char_rnn_forward.1} parent=1 // pred_fallthru
      _
    // Predicated region
    $region38: #{char_rnn_forward.1} parent=1 // pred_check
      _
    $region39: #{char_rnn_forward.1} parent=1 // pred_check_branch
      %68 = sbr.rel (0) target = $region41
    $region40: #{char_rnn_forward.1} parent=1 // pred_region
      %69 = dma.done [#allocation3], 1024
    $region41: #{char_rnn_forward.1} parent=1 // pred_fallthru
      _
    // Predicated region
    $region42: #{char_rnn_forward.1} parent=1 // pred_check
      _
    $region43: #{char_rnn_forward.1} parent=1 // pred_check_branch
      %71 = sbr.rel (0) target = $region45
    $region44: #{char_rnn_forward.1} parent=1 // pred_region
      %72 = dma.done [#allocation6], 1024
    $region45: #{char_rnn_forward.1} parent=1 // pred_fallthru
      _
    // Predicated region
    $region46: #{char_rnn_forward.1} parent=1 // pred_check
      _
    $region47: #{char_rnn_forward.1} parent=1 // pred_check_branch
      %74 = sbr.rel (0) target = $region49
    $region48: #{char_rnn_forward.1} parent=1 // pred_region
      %75 = dma.done [#allocation6], 6144
    $region49: #{char_rnn_forward.1} parent=1 // pred_fallthru
      _
    %v77 = vld [vmem:[%s0] sm:$0xff]
    %v78 = vld [vmem:[%s0 + $0x8] sm:$0xff]
    %v79 = vld [vmem:[%s0 + $0x10] sm:$0xff]
    %v80 = vld [vmem:[%s0 + $0x18] sm:$0xff]
    %v81 = vld [vmem:[%s0 + $0x20] sm:$0xff]
    %v82 = vld [vmem:[%s0 + $0x28] sm:$0xff]
    %v83 = vld [vmem:[%s0 + $0x30] sm:$0xff]
    %v84 = vld [vmem:[%s0 + $0x38] sm:$0xff]
    %v85 = vlaneseq
    %v86 = vand.u32 %v85, 127
    %87 = vset.pattern.permute.xlu0 0
    %88 = vperm.xlu0 %87, %v77
    %v89 = vpop.permute.xlu0 %88
    %90 = vset.pattern.permute.xlu0 0
    %91 = vperm.xlu0 %90, %v78
    %v92 = vpop.permute.xlu0 %91
    %93 = vset.pattern.permute.xlu0 0
    %94 = vperm.xlu0 %93, %v79
    %v95 = vpop.permute.xlu0 %94
    %96 = vset.pattern.permute.xlu0 0
    %97 = vperm.xlu0 %96, %v80
    %v98 = vpop.permute.xlu0 %97
    %99 = vset.pattern.permute.xlu0 0
    %100 = vperm.xlu0 %99, %v81
    %v101 = vpop.permute.xlu0 %100
    %102 = vset.pattern.permute.xlu0 0
    %103 = vperm.xlu0 %102, %v82
    %v104 = vpop.permute.xlu0 %103
    %105 = vset.pattern.permute.xlu0 0
    %106 = vperm.xlu0 %105, %v83
    %v107 = vpop.permute.xlu0 %106
    %108 = vset.pattern.permute.xlu0 0
    %109 = vperm.xlu0 %108, %v84
    %v110 = vpop.permute.xlu0 %109
    %vm111 = vcmp.eq.s32.totalorder %v86, %v89
    %vm112 = vcmp.eq.s32.totalorder %v86, %v92
    %vm113 = vcmp.eq.s32.totalorder %v86, %v95
    %vm114 = vcmp.eq.s32.totalorder %v86, %v98
    %vm115 = vcmp.eq.s32.totalorder %v86, %v101
    %vm116 = vcmp.eq.s32.totalorder %v86, %v104
    %vm117 = vcmp.eq.s32.totalorder %v86, %v107
    %vm118 = vcmp.eq.s32.totalorder %v86, %v110
    %v119 = vsel %vm111, 1, 0
    %v120 = vsel %vm112, 1, 0
    %v121 = vsel %vm113, 1, 0
    %v122 = vsel %vm114, 1, 0
    %v123 = vsel %vm115, 1, 0
    %v124 = vsel %vm116, 1, 0
    %v125 = vsel %vm117, 1, 0
    %v126 = vsel %vm118, 1, 0
    %v127 = vcvt.s32.f32 %v119
    %v128 = vcvt.s32.f32 %v120
    %v129 = vcvt.s32.f32 %v121
    %v130 = vcvt.s32.f32 %v122
    %v131 = vcvt.s32.f32 %v123
    %v132 = vcvt.s32.f32 %v124
    %v133 = vcvt.s32.f32 %v125
    %v134 = vcvt.s32.f32 %v126
    %v135 = vpack.c.bf16 %v128, %v127
    %v136 = vpack.c.bf16 %v130, %v129
    %v137 = vpack.c.bf16 %v132, %v131
    %v138 = vpack.c.bf16 %v134, %v133
    %v139 = vld [vmem:[%s2] sm:$0xf]
    %v140 = vld [vmem:[%s2 + $0x4] sm:$0xf]
    %v141 = vld [vmem:[%s2 + $0x8] sm:$0xf]
    %v142 = vld [vmem:[%s2 + $0xc] sm:$0xf]
    %v143 = vld [vmem:[%s2 + $0x10] sm:$0xf]
    %v144 = vld [vmem:[%s2 + $0x14] sm:$0xf]
    %v145 = vld [vmem:[%s2 + $0x18] sm:$0xf]
    %v146 = vld [vmem:[%s2 + $0x1c] sm:$0xf]
    %v147 = vld [vmem:[%s2 + $0x20] sm:$0xf]
    %v148 = vld [vmem:[%s2 + $0x24] sm:$0xf]
    %v149 = vld [vmem:[%s2 + $0x28] sm:$0xf]
    %v150 = vld [vmem:[%s2 + $0x2c] sm:$0xf]
    %v151 = vld [vmem:[%s2 + $0x30] sm:$0xf]
    %v152 = vld [vmem:[%s2 + $0x34] sm:$0xf]
    %v153 = vld [vmem:[%s2 + $0x38] sm:$0xf]
    %v154 = vld [vmem:[%s2 + $0x3c] sm:$0xf]
    %v171 = vunpack.c.l.b16 %v139
    %v172 = vunpack.c.l.b16 %v140
    %v173 = vunpack.c.l.b16 %v141
    %v174 = vunpack.c.l.b16 %v142
    %v175 = vunpack.c.l.b16 %v143
    %v176 = vunpack.c.l.b16 %v144
    %v177 = vunpack.c.l.b16 %v145
    %v178 = vunpack.c.l.b16 %v146
    %v179 = vunpack.c.l.b16 %v147
    %v180 = vunpack.c.l.b16 %v148
    %v181 = vunpack.c.l.b16 %v149
    %v182 = vunpack.c.l.b16 %v150
    %v183 = vunpack.c.l.b16 %v151
    %v184 = vunpack.c.l.b16 %v152
    %v185 = vunpack.c.l.b16 %v153
    %v186 = vunpack.c.l.b16 %v154
    %v187 = vpack.c.b16 %v172, %v171
    %v188 = vpack.c.b16 %v174, %v173
    %v189 = vpack.c.b16 %v176, %v175
    %v190 = vpack.c.b16 %v178, %v177
    %v191 = vpack.c.b16 %v180, %v179
    %v192 = vpack.c.b16 %v182, %v181
    %v193 = vpack.c.b16 %v184, %v183
    %v194 = vpack.c.b16 %v186, %v185
    %203 = vmatprep.subr.bf16.mxu0 0
    %204 = vmatpush1.bf16.msra.mxu0 %v187
    %205 = vmatprep.subr.bf16.mxu0 0
    %206 = vmatpush1.bf16.msra.mxu0 %v188
    %207 = vmatprep.subr.bf16.mxu0 0
    %208 = vmatpush1.bf16.msra.mxu0 %v189
    %209 = vmatprep.subr.bf16.mxu0 0
    %210 = vmatpush1.bf16.msra.mxu0 %v190
    %211 = vmatprep.subr.bf16.mxu0 0
    %212 = vmatpush1.bf16.msra.mxu0 %v191
    %213 = vmatprep.subr.bf16.mxu0 0
    %214 = vmatpush1.bf16.msra.mxu0 %v192
    %215 = vmatprep.subr.bf16.mxu0 0
    %216 = vmatpush1.bf16.msra.mxu0 %v193
    %217 = vmatprep.subr.bf16.mxu0 0
    %218 = vmatpush1.bf16.msra.mxu0 %v194
    %219 = vmatprep.subr.bf16.mxu0 0
    %220 = vmatpush1.bf16.msra.mxu0 0
    %221 = vmatprep.subr.bf16.mxu0 0
    %222 = vmatpush1.bf16.msra.mxu0 0
    %223 = vmatprep.subr.bf16.mxu0 0
    %224 = vmatpush1.bf16.msra.mxu0 0
    %225 = vmatprep.subr.bf16.mxu0 0
    %226 = vmatpush1.bf16.msra.mxu0 0
    %227 = vmatprep.subr.bf16.mxu0 0
    %228 = vmatpush1.bf16.msra.mxu0 0
    %229 = vmatprep.subr.bf16.mxu0 0
    %230 = vmatpush1.bf16.msra.mxu0 0
    %231 = vmatprep.subr.bf16.mxu0 0
    %232 = vmatpush1.bf16.msra.mxu0 0
    %233 = vmatprep.subr.bf16.mxu0 0
    %234 = vmatpush1.bf16.msra.mxu0 0
    %235 = vmatprep.mubr.bf16.mxu0 0
    %236 = vmatmul.mubr.bf16.gmra.mrb[0].mxu0 %v135
    %v237 = vpop.f32.mrb[0].mxu0
    %v238 = vadd.f32 0.0, %v237
    %v239 = vpop.f32.mrb[0].mxu0
    %v240 = vpop.f32.mrb[0].mxu0
    %v241 = vadd.f32 0.0, %v240
    %v242 = vpop.f32.mrb[0].mxu0
    %243 = vmatprep.mubr.bf16.mxu0 0
    %244 = vmatmul.mubr.bf16.gmra.mrb[0].mxu0 %v136
    %v245 = vpop.f32.mrb[0].mxu0
    %v246 = vadd.f32 0.0, %v245
    %v247 = vpop.f32.mrb[0].mxu0
    %v248 = vpop.f32.mrb[0].mxu0
    %v249 = vadd.f32 0.0, %v248
    %v250 = vpop.f32.mrb[0].mxu0
    %251 = vmatprep.mubr.bf16.mxu0 0
    %252 = vmatmul.mubr.bf16.gmra.mrb[0].mxu0 %v137
    %v253 = vpop.f32.mrb[0].mxu0
    %v254 = vadd.f32 0.0, %v253
    %v255 = vpop.f32.mrb[0].mxu0
    %v256 = vpop.f32.mrb[0].mxu0
    %v257 = vadd.f32 0.0, %v256
    %v258 = vpop.f32.mrb[0].mxu0
    %259 = vmatprep.mubr.bf16.mxu0 0
    %260 = vmatmul.mubr.bf16.gmra.mrb[0].mxu0 %v138
    %v261 = vpop.f32.mrb[0].mxu0
    %v262 = vadd.f32 0.0, %v261
    %v263 = vpop.f32.mrb[0].mxu0
    %v264 = vpop.f32.mrb[0].mxu0
    %v265 = vadd.f32 0.0, %v264
    %v266 = vpop.f32.mrb[0].mxu0
    %267 = vdwg.mxu0
    %v268 = vpack.c.bf16 %v241, %v238
    %v269 = vpack.c.bf16 %v249, %v246
    %v270 = vpack.c.bf16 %v257, %v254
    %v271 = vpack.c.bf16 %v265, %v262
    %v272 = vld [vmem:[#allocation2] sm:$0xf]
    %v273 = vld [vmem:[#allocation2 + $0x4] sm:$0xf]
    %v274 = vld [vmem:[#allocation2 + $0x8] sm:$0xf]
    %v275 = vld [vmem:[#allocation2 + $0xc] sm:$0xf]
    %v276 = vld [vmem:[#allocation2 + $0x10] sm:$0xf]
    %v277 = vld [vmem:[#allocation2 + $0x14] sm:$0xf]
    %v278 = vld [vmem:[#allocation2 + $0x18] sm:$0xf]
    %v279 = vld [vmem:[#allocation2 + $0x1c] sm:$0xf]
    %v280 = vld [vmem:[#allocation2 + $0x20] sm:$0xf]
    %v281 = vld [vmem:[#allocation2 + $0x24] sm:$0xf]
    %v282 = vld [vmem:[#allocation2 + $0x28] sm:$0xf]
    %v283 = vld [vmem:[#allocation2 + $0x2c] sm:$0xf]
    %v284 = vld [vmem:[#allocation2 + $0x30] sm:$0xf]
    %v285 = vld [vmem:[#allocation2 + $0x34] sm:$0xf]
    %v286 = vld [vmem:[#allocation2 + $0x38] sm:$0xf]
    %v287 = vld [vmem:[#allocation2 + $0x3c] sm:$0xf]
    %v288 = vld [vmem:[%s6] sm:$0x1]
    %v290 = vlaneseq
    %v291 = vshrl.u32 %v290, 7
    %v292 = vsub.s32 0, %v291
    %v293 = vrot.slane %v288, %v292
    %v311 = vunpack.c.l.b16 %v272
    %v312 = vunpack.c.l.b16 %v273
    %v313 = vunpack.c.l.b16 %v274
    %v314 = vunpack.c.l.b16 %v275
    %v315 = vunpack.c.l.b16 %v276
    %v316 = vunpack.c.l.b16 %v277
    %v317 = vunpack.c.l.b16 %v278
    %v318 = vunpack.c.l.b16 %v279
    %v319 = vunpack.c.l.b16 %v280
    %v320 = vunpack.c.l.b16 %v281
    %v321 = vunpack.c.l.b16 %v282
    %v322 = vunpack.c.l.b16 %v283
    %v323 = vunpack.c.l.b16 %v284
    %v324 = vunpack.c.l.b16 %v285
    %v325 = vunpack.c.l.b16 %v286
    %v326 = vunpack.c.l.b16 %v287
    %v327 = vpack.c.b16 %v312, %v311
    %v328 = vpack.c.b16 %v314, %v313
    %v329 = vpack.c.b16 %v316, %v315
    %v330 = vpack.c.b16 %v318, %v317
    %v331 = vpack.c.b16 %v320, %v319
    %v332 = vpack.c.b16 %v322, %v321
    %v333 = vpack.c.b16 %v324, %v323
    %v334 = vpack.c.b16 %v326, %v325
    %343 = vmatprep.subr.bf16.mxu0 0
    %344 = vmatpush1.bf16.msra.mxu0 %v327
    %345 = vmatprep.subr.bf16.mxu0 0
    %346 = vmatpush1.bf16.msra.mxu0 %v328
    %347 = vmatprep.subr.bf16.mxu0 0
    %348 = vmatpush1.bf16.msra.mxu0 %v329
    %349 = vmatprep.subr.bf16.mxu0 0
    %350 = vmatpush1.bf16.msra.mxu0 %v330
    %351 = vmatprep.subr.bf16.mxu0 0
    %352 = vmatpush1.bf16.msra.mxu0 %v331
    %353 = vmatprep.subr.bf16.mxu0 0
    %354 = vmatpush1.bf16.msra.mxu0 %v332
    %355 = vmatprep.subr.bf16.mxu0 0
    %356 = vmatpush1.bf16.msra.mxu0 %v333
    %357 = vmatprep.subr.bf16.mxu0 0
    %358 = vmatpush1.bf16.msra.mxu0 %v334
    %359 = vmatprep.subr.bf16.mxu0 0
    %360 = vmatpush1.bf16.msra.mxu0 0
    %361 = vmatprep.subr.bf16.mxu0 0
    %362 = vmatpush1.bf16.msra.mxu0 0
    %363 = vmatprep.subr.bf16.mxu0 0
    %364 = vmatpush1.bf16.msra.mxu0 0
    %365 = vmatprep.subr.bf16.mxu0 0
    %366 = vmatpush1.bf16.msra.mxu0 0
    %367 = vmatprep.subr.bf16.mxu0 0
    %368 = vmatpush1.bf16.msra.mxu0 0
    %369 = vmatprep.subr.bf16.mxu0 0
    %370 = vmatpush1.bf16.msra.mxu0 0
    %371 = vmatprep.subr.bf16.mxu0 0
    %372 = vmatpush1.bf16.msra.mxu0 0
    %373 = vmatprep.subr.bf16.mxu0 0
    %374 = vmatpush1.bf16.msra.mxu0 0
    %375 = vmatprep.mubr.bf16.mxu0 0
    %376 = vmatmul.mubr.bf16.gmra.mrb[0].mxu0 %v268
    %v377 = vpop.f32.mrb[0].mxu0
    %v378 = vadd.f32 %v293, %v377
    %v379 = vpop.f32.mrb[0].mxu0
    %v380 = vpop.f32.mrb[0].mxu0
    %v381 = vadd.f32 %v293, %v380
    %v382 = vpop.f32.mrb[0].mxu0
    %383 = vmatprep.mubr.bf16.mxu0 0
    %384 = vmatmul.mubr.bf16.gmra.mrb[0].mxu0 %v269
    %v385 = vpop.f32.mrb[0].mxu0
    %v386 = vadd.f32 %v293, %v385
    %v387 = vpop.f32.mrb[0].mxu0
    %v388 = vpop.f32.mrb[0].mxu0
    %v389 = vadd.f32 %v293, %v388
    %v390 = vpop.f32.mrb[0].mxu0
    %391 = vmatprep.mubr.bf16.mxu0 0
    %392 = vmatmul.mubr.bf16.gmra.mrb[0].mxu0 %v270
    %v393 = vpop.f32.mrb[0].mxu0
    %v394 = vadd.f32 %v293, %v393
    %v395 = vpop.f32.mrb[0].mxu0
    %v396 = vpop.f32.mrb[0].mxu0
    %v397 = vadd.f32 %v293, %v396
    %v398 = vpop.f32.mrb[0].mxu0
    %399 = vmatprep.mubr.bf16.mxu0 0
    %400 = vmatmul.mubr.bf16.gmra.mrb[0].mxu0 %v271
    %v401 = vpop.f32.mrb[0].mxu0
    %v402 = vadd.f32 %v293, %v401
    %v403 = vpop.f32.mrb[0].mxu0
    %v404 = vpop.f32.mrb[0].mxu0
    %v405 = vadd.f32 %v293, %v404
    %v406 = vpop.f32.mrb[0].mxu0
    %407 = vdwg.mxu0
    %v408 = vld [vmem:[%s1] sm:$0xff]
    %v409 = vpack.c.bf16 %v408, %v408
    %s410 = scalar_lea.vmem %s1, 8
    %v411 = vld [vmem:[%s410] sm:$0xff]
    %v412 = vpack.c.bf16 %v411, %v411
    %s413 = scalar_lea.vmem %s1, 16
    %v414 = vld [vmem:[%s413] sm:$0xff]
    %v415 = vpack.c.bf16 %v414, %v414
    %s416 = scalar_lea.vmem %s1, 24
    %v417 = vld [vmem:[%s416] sm:$0xff]
    %v418 = vpack.c.bf16 %v417, %v417
    %v419 = vld [vmem:[#allocation5] sm:$0xf]
    %v420 = vld [vmem:[#allocation5 + $0x4] sm:$0xf]
    %v421 = vld [vmem:[#allocation5 + $0x8] sm:$0xf]
    %v422 = vld [vmem:[#allocation5 + $0xc] sm:$0xf]
    %v423 = vld [vmem:[#allocation5 + $0x10] sm:$0xf]
    %v424 = vld [vmem:[#allocation5 + $0x14] sm:$0xf]
    %v425 = vld [vmem:[#allocation5 + $0x18] sm:$0xf]
    %v426 = vld [vmem:[#allocation5 + $0x1c] sm:$0xf]
    %v427 = vld [vmem:[#allocation5 + $0x20] sm:$0xf]
    %v428 = vld [vmem:[#allocation5 + $0x24] sm:$0xf]
    %v429 = vld [vmem:[#allocation5 + $0x28] sm:$0xf]
    %v430 = vld [vmem:[#allocation5 + $0x2c] sm:$0xf]
    %v431 = vld [vmem:[#allocation5 + $0x30] sm:$0xf]
    %v432 = vld [vmem:[#allocation5 + $0x34] sm:$0xf]
    %v433 = vld [vmem:[#allocation5 + $0x38] sm:$0xf]
    %v434 = vld [vmem:[#allocation5 + $0x3c] sm:$0xf]
    %v451 = vunpack.c.l.b16 %v419
    %v452 = vunpack.c.l.b16 %v420
    %v453 = vunpack.c.l.b16 %v421
    %v454 = vunpack.c.l.b16 %v422
    %v455 = vunpack.c.l.b16 %v423
    %v456 = vunpack.c.l.b16 %v424
    %v457 = vunpack.c.l.b16 %v425
    %v458 = vunpack.c.l.b16 %v426
    %v459 = vunpack.c.l.b16 %v427
    %v460 = vunpack.c.l.b16 %v428
    %v461 = vunpack.c.l.b16 %v429
    %v462 = vunpack.c.l.b16 %v430
    %v463 = vunpack.c.l.b16 %v431
    %v464 = vunpack.c.l.b16 %v432
    %v465 = vunpack.c.l.b16 %v433
    %v466 = vunpack.c.l.b16 %v434
    %v467 = vpack.c.b16 %v452, %v451
    %v468 = vpack.c.b16 %v454, %v453
    %v469 = vpack.c.b16 %v456, %v455
    %v470 = vpack.c.b16 %v458, %v457
    %v471 = vpack.c.b16 %v460, %v459
    %v472 = vpack.c.b16 %v462, %v461
    %v473 = vpack.c.b16 %v464, %v463
    %v474 = vpack.c.b16 %v466, %v465
    %483 = vmatprep.subr.bf16.mxu0 0
    %484 = vmatpush1.bf16.msra.mxu0 %v467
    %485 = vmatprep.subr.bf16.mxu0 0
    %486 = vmatpush1.bf16.msra.mxu0 %v468
    %487 = vmatprep.subr.bf16.mxu0 0
    %488 = vmatpush1.bf16.msra.mxu0 %v469
    %489 = vmatprep.subr.bf16.mxu0 0
    %490 = vmatpush1.bf16.msra.mxu0 %v470
    %491 = vmatprep.subr.bf16.mxu0 0
    %492 = vmatpush1.bf16.msra.mxu0 %v471
    %493 = vmatprep.subr.bf16.mxu0 0
    %494 = vmatpush1.bf16.msra.mxu0 %v472
    %495 = vmatprep.subr.bf16.mxu0 0
    %496 = vmatpush1.bf16.msra.mxu0 %v473
    %497 = vmatprep.subr.bf16.mxu0 0
    %498 = vmatpush1.bf16.msra.mxu0 %v474
    %499 = vmatprep.subr.bf16.mxu0 0
    %500 = vmatpush1.bf16.msra.mxu0 0
    %501 = vmatprep.subr.bf16.mxu0 0
    %502 = vmatpush1.bf16.msra.mxu0 0
    %503 = vmatprep.subr.bf16.mxu0 0
    %504 = vmatpush1.bf16.msra.mxu0 0
    %505 = vmatprep.subr.bf16.mxu0 0
    %506 = vmatpush1.bf16.msra.mxu0 0
    %507 = vmatprep.subr.bf16.mxu0 0
    %508 = vmatpush1.bf16.msra.mxu0 0
    %509 = vmatprep.subr.bf16.mxu0 0
    %510 = vmatpush1.bf16.msra.mxu0 0
    %511 = vmatprep.subr.bf16.mxu0 0
    %512 = vmatpush1.bf16.msra.mxu0 0
    %513 = vmatprep.subr.bf16.mxu0 0
    %514 = vmatpush1.bf16.msra.mxu0 0
    %515 = vmatprep.mubr.bf16.mxu0 0
    %516 = vmatmul.mubr.bf16.gmra.mrb[0].mxu0 %v409
    %v517 = vpop.f32.mrb[0].mxu0
    %v518 = vadd.f32 0.0, %v517
    %v519 = vpop.f32.mrb[0].mxu0
    %v520 = vpop.f32.mrb[0].mxu0
    %v521 = vpop.f32.mrb[0].mxu0
    %522 = vdwg.mxu0
    %v523 = vadd.f32 %v378, %v518
    %v524 = vtanh.pop %v523
    %v525 = vpack.c.bf16 %v524, %v524
    %526 = vmatprep.subr.bf16.mxu0 0
    %527 = vmatpush1.bf16.msra.mxu0 %v467
    %528 = vmatprep.subr.bf16.mxu0 0
    %529 = vmatpush1.bf16.msra.mxu0 %v468
    %530 = vmatprep.subr.bf16.mxu0 0
    %531 = vmatpush1.bf16.msra.mxu0 %v469
    %532 = vmatprep.subr.bf16.mxu0 0
    %533 = vmatpush1.bf16.msra.mxu0 %v470
    %534 = vmatprep.subr.bf16.mxu0 0
    %535 = vmatpush1.bf16.msra.mxu0 %v471
    %536 = vmatprep.subr.bf16.mxu0 0
    %537 = vmatpush1.bf16.msra.mxu0 %v472
    %538 = vmatprep.subr.bf16.mxu0 0
    %539 = vmatpush1.bf16.msra.mxu0 %v473
    %540 = vmatprep.subr.bf16.mxu0 0
    %541 = vmatpush1.bf16.msra.mxu0 %v474
    %542 = vmatprep.subr.bf16.mxu0 0
    %543 = vmatpush1.bf16.msra.mxu0 0
    %544 = vmatprep.subr.bf16.mxu0 0
    %545 = vmatpush1.bf16.msra.mxu0 0
    %546 = vmatprep.subr.bf16.mxu0 0
    %547 = vmatpush1.bf16.msra.mxu0 0
    %548 = vmatprep.subr.bf16.mxu0 0
    %549 = vmatpush1.bf16.msra.mxu0 0
    %550 = vmatprep.subr.bf16.mxu0 0
    %551 = vmatpush1.bf16.msra.mxu0 0
    %552 = vmatprep.subr.bf16.mxu0 0
    %553 = vmatpush1.bf16.msra.mxu0 0
    %554 = vmatprep.subr.bf16.mxu0 0
    %555 = vmatpush1.bf16.msra.mxu0 0
    %556 = vmatprep.subr.bf16.mxu0 0
    %557 = vmatpush1.bf16.msra.mxu0 0
    %558 = vmatprep.mubr.bf16.mxu0 0
    %559 = vmatmul.mubr.bf16.gmra.mrb[0].mxu0 %v525
    %v560 = vpop.f32.mrb[0].mxu0
    %v561 = vadd.f32 0.0, %v560
    %v562 = vpop.f32.mrb[0].mxu0
    %v563 = vpop.f32.mrb[0].mxu0
    %v564 = vpop.f32.mrb[0].mxu0
    %565 = vdwg.mxu0
    %v566 = vadd.f32 %v381, %v561
    %v567 = vtanh.pop %v566
    %v568 = vpack.c.bf16 %v567, %v567
    %v569 = vld [vmem:[#allocation7] sm:$0xf]
    %v570 = vld [vmem:[#allocation7 + $0x4] sm:$0xf]
    %v571 = vld [vmem:[#allocation7 + $0x8] sm:$0xf]
    %v572 = vld [vmem:[#allocation7 + $0xc] sm:$0xf]
    %v573 = vld [vmem:[#allocation7 + $0x10] sm:$0xf]
    %v574 = vld [vmem:[#allocation7 + $0x14] sm:$0xf]
    %v575 = vld [vmem:[#allocation7 + $0x18] sm:$0xf]
    %v576 = vld [vmem:[#allocation7 + $0x1c] sm:$0xf]
    %v577 = vld [vmem:[#allocation7 + $0x20] sm:$0xf]
    %v578 = vld [vmem:[#allocation7 + $0x24] sm:$0xf]
    %v579 = vld [vmem:[#allocation7 + $0x28] sm:$0xf]
    %v580 = vld [vmem:[#allocation7 + $0x2c] sm:$0xf]
    %v581 = vld [vmem:[#allocation7 + $0x30] sm:$0xf]
    %v582 = vld [vmem:[#allocation7 + $0x34] sm:$0xf]
    %v583 = vld [vmem:[#allocation7 + $0x38] sm:$0xf]
    %v584 = vld [vmem:[#allocation7 + $0x3c] sm:$0xf]
    %v585 = vld [vmem:[#allocation7 + $0x40] sm:$0xf]
    %v586 = vld [vmem:[#allocation7 + $0x44] sm:$0xf]
    %v587 = vld [vmem:[#allocation7 + $0x48] sm:$0xf]
    %v588 = vld [vmem:[#allocation7 + $0x4c] sm:$0xf]
    %v589 = vld [vmem:[#allocation7 + $0x50] sm:$0xf]
    %v590 = vld [vmem:[#allocation7 + $0x54] sm:$0xf]
    %v591 = vld [vmem:[#allocation7 + $0x58] sm:$0xf]
    %v592 = vld [vmem:[#allocation7 + $0x5c] sm:$0xf]
    %v593 = vld [vmem:[#allocation7 + $0x60] sm:$0xf]
    %v594 = vld [vmem:[#allocation7 + $0x64] sm:$0xf]
    %v595 = vld [vmem:[#allocation7 + $0x68] sm:$0xf]
    %v596 = vld [vmem:[#allocation7 + $0x6c] sm:$0xf]
    %v597 = vld [vmem:[#allocation7 + $0x70] sm:$0xf]
    %v598 = vld [vmem:[#allocation7 + $0x74] sm:$0xf]
    %v599 = vld [vmem:[#allocation7 + $0x78] sm:$0xf]
    %v600 = vld [vmem:[#allocation7 + $0x7c] sm:$0xf]
    %s601 = scalar_lea.vmem %s6, 1
    %v602 = vld [vmem:[%s601] sm:$0x1]
    %v604 = vlaneseq
    %v605 = vshrl.u32 %v604, 7
    %v606 = vsub.s32 0, %v605
    %v607 = vrot.slane %v602, %v606
    %v641 = vunpack.c.l.b16 %v569
    %v642 = vunpack.c.l.b16 %v570
    %v643 = vunpack.c.l.b16 %v571
    %v644 = vunpack.c.l.b16 %v572
    %v645 = vunpack.c.l.b16 %v573
    %v646 = vunpack.c.l.b16 %v574
    %v647 = vunpack.c.l.b16 %v575
    %v648 = vunpack.c.l.b16 %v576
    %v649 = vunpack.c.l.b16 %v577
    %v650 = vunpack.c.l.b16 %v578
    %v651 = vunpack.c.l.b16 %v579
    %v652 = vunpack.c.l.b16 %v580
    %v653 = vunpack.c.l.b16 %v581
    %v654 = vunpack.c.l.b16 %v582
    %v655 = vunpack.c.l.b16 %v583
    %v656 = vunpack.c.l.b16 %v584
    %v657 = vunpack.c.l.b16 %v585
    %v658 = vunpack.c.l.b16 %v586
    %v659 = vunpack.c.l.b16 %v587
    %v660 = vunpack.c.l.b16 %v588
    %v661 = vunpack.c.l.b16 %v589
    %v662 = vunpack.c.l.b16 %v590
    %v663 = vunpack.c.l.b16 %v591
    %v664 = vunpack.c.l.b16 %v592
    %v665 = vunpack.c.l.b16 %v593
    %v666 = vunpack.c.l.b16 %v594
    %v667 = vunpack.c.l.b16 %v595
    %v668 = vunpack.c.l.b16 %v596
    %v669 = vunpack.c.l.b16 %v597
    %v670 = vunpack.c.l.b16 %v598
    %v671 = vunpack.c.l.b16 %v599
    %v672 = vunpack.c.l.b16 %v600
    %v673 = vpack.c.b16 %v642, %v641
    %v674 = vpack.c.b16 %v644, %v643
    %v675 = vpack.c.b16 %v646, %v645
    %v676 = vpack.c.b16 %v648, %v647
    %v677 = vpack.c.b16 %v650, %v649
    %v678 = vpack.c.b16 %v652, %v651
    %v679 = vpack.c.b16 %v654, %v653
    %v680 = vpack.c.b16 %v656, %v655
    %v681 = vpack.c.b16 %v658, %v657
    %v682 = vpack.c.b16 %v660, %v659
    %v683 = vpack.c.b16 %v662, %v661
    %v684 = vpack.c.b16 %v664, %v663
    %v685 = vpack.c.b16 %v666, %v665
    %v686 = vpack.c.b16 %v668, %v667
    %v687 = vpack.c.b16 %v670, %v669
    %v688 = vpack.c.b16 %v672, %v671
    %705 = vmatprep.subr.bf16.mxu0 0
    %706 = vmatpush1.bf16.msra.mxu0 %v673
    %707 = vmatprep.subr.bf16.mxu0 0
    %708 = vmatpush1.bf16.msra.mxu0 %v674
    %709 = vmatprep.subr.bf16.mxu0 0
    %710 = vmatpush1.bf16.msra.mxu0 %v675
    %711 = vmatprep.subr.bf16.mxu0 0
    %712 = vmatpush1.bf16.msra.mxu0 %v676
    %713 = vmatprep.subr.bf16.mxu0 0
    %714 = vmatpush1.bf16.msra.mxu0 %v677
    %715 = vmatprep.subr.bf16.mxu0 0
    %716 = vmatpush1.bf16.msra.mxu0 %v678
    %717 = vmatprep.subr.bf16.mxu0 0
    %718 = vmatpush1.bf16.msra.mxu0 %v679
    %719 = vmatprep.subr.bf16.mxu0 0
    %720 = vmatpush1.bf16.msra.mxu0 %v680
    %721 = vmatprep.subr.bf16.mxu0 0
    %722 = vmatpush1.bf16.msra.mxu0 %v681
    %723 = vmatprep.subr.bf16.mxu0 0
    %724 = vmatpush1.bf16.msra.mxu0 %v682
    %725 = vmatprep.subr.bf16.mxu0 0
    %726 = vmatpush1.bf16.msra.mxu0 %v683
    %727 = vmatprep.subr.bf16.mxu0 0
    %728 = vmatpush1.bf16.msra.mxu0 %v684
    %729 = vmatprep.subr.bf16.mxu0 0
    %730 = vmatpush1.bf16.msra.mxu0 %v685
    %731 = vmatprep.subr.bf16.mxu0 0
    %732 = vmatpush1.bf16.msra.mxu0 %v686
    %733 = vmatprep.subr.bf16.mxu0 0
    %734 = vmatpush1.bf16.msra.mxu0 %v687
    %735 = vmatprep.subr.bf16.mxu0 0
    %736 = vmatpush1.bf16.msra.mxu0 %v688
    %737 = vmatprep.mubr.bf16.mxu0 %v412
    %738 = vmatmul.mubr.bf16.gmra.mrb[0].mxu0 %v525
    %v739 = vpop.f32.mrb[0].mxu0
    %v740 = vadd.f32 %v607, %v739
    %v741 = vpop.f32.mrb[0].mxu0
    %v742 = vpop.f32.mrb[0].mxu0
    %v743 = vpop.f32.mrb[0].mxu0
    %744 = vdwg.mxu0
    %v745 = vtanh.pop %v740
    %v746 = vpack.c.bf16 %v745, %v745
    %747 = vmatprep.subr.bf16.mxu0 0
    %748 = vmatpush1.bf16.msra.mxu0 %v467
    %749 = vmatprep.subr.bf16.mxu0 0
    %750 = vmatpush1.bf16.msra.mxu0 %v468
    %751 = vmatprep.subr.bf16.mxu0 0
    %752 = vmatpush1.bf16.msra.mxu0 %v469
    %753 = vmatprep.subr.bf16.mxu0 0
    %754 = vmatpush1.bf16.msra.mxu0 %v470
    %755 = vmatprep.subr.bf16.mxu0 0
    %756 = vmatpush1.bf16.msra.mxu0 %v471
    %757 = vmatprep.subr.bf16.mxu0 0
    %758 = vmatpush1.bf16.msra.mxu0 %v472
    %759 = vmatprep.subr.bf16.mxu0 0
    %760 = vmatpush1.bf16.msra.mxu0 %v473
    %761 = vmatprep.subr.bf16.mxu0 0
    %762 = vmatpush1.bf16.msra.mxu0 %v474
    %763 = vmatprep.subr.bf16.mxu0 0
    %764 = vmatpush1.bf16.msra.mxu0 0
    %765 = vmatprep.subr.bf16.mxu0 0
    %766 = vmatpush1.bf16.msra.mxu0 0
    %767 = vmatprep.subr.bf16.mxu0 0
    %768 = vmatpush1.bf16.msra.mxu0 0
    %769 = vmatprep.subr.bf16.mxu0 0
    %770 = vmatpush1.bf16.msra.mxu0 0
    %771 = vmatprep.subr.bf16.mxu0 0
    %772 = vmatpush1.bf16.msra.mxu0 0
    %773 = vmatprep.subr.bf16.mxu0 0
    %774 = vmatpush1.bf16.msra.mxu0 0
    %775 = vmatprep.subr.bf16.mxu0 0
    %776 = vmatpush1.bf16.msra.mxu0 0
    %777 = vmatprep.subr.bf16.mxu0 0
    %778 = vmatpush1.bf16.msra.mxu0 0
    %779 = vmatprep.mubr.bf16.mxu0 0
    %780 = vmatmul.mubr.bf16.gmra.mrb[0].mxu0 %v568
    %v781 = vpop.f32.mrb[0].mxu0
    %v782 = vadd.f32 0.0, %v781
    %v783 = vpop.f32.mrb[0].mxu0
    %v784 = vpop.f32.mrb[0].mxu0
    %v785 = vpop.f32.mrb[0].mxu0
    %786 = vdwg.mxu0
    %v787 = vadd.f32 %v386, %v782
    %v788 = vtanh.pop %v787
    %v789 = vpack.c.bf16 %v788, %v788
    %790 = vmatprep.subr.bf16.mxu0 0
    %791 = vmatpush1.bf16.msra.mxu0 %v673
    %792 = vmatprep.subr.bf16.mxu0 0
    %793 = vmatpush1.bf16.msra.mxu0 %v674
    %794 = vmatprep.subr.bf16.mxu0 0
    %795 = vmatpush1.bf16.msra.mxu0 %v675
    %796 = vmatprep.subr.bf16.mxu0 0
    %797 = vmatpush1.bf16.msra.mxu0 %v676
    %798 = vmatprep.subr.bf16.mxu0 0
    %799 = vmatpush1.bf16.msra.mxu0 %v677
    %800 = vmatprep.subr.bf16.mxu0 0
    %801 = vmatpush1.bf16.msra.mxu0 %v678
    %802 = vmatprep.subr.bf16.mxu0 0
    %803 = vmatpush1.bf16.msra.mxu0 %v679
    %804 = vmatprep.subr.bf16.mxu0 0
    %805 = vmatpush1.bf16.msra.mxu0 %v680
    %806 = vmatprep.subr.bf16.mxu0 0
    %807 = vmatpush1.bf16.msra.mxu0 %v681
    %808 = vmatprep.subr.bf16.mxu0 0
    %809 = vmatpush1.bf16.msra.mxu0 %v682
    %810 = vmatprep.subr.bf16.mxu0 0
    %811 = vmatpush1.bf16.msra.mxu0 %v683
    %812 = vmatprep.subr.bf16.mxu0 0
    %813 = vmatpush1.bf16.msra.mxu0 %v684
    %814 = vmatprep.subr.bf16.mxu0 0
    %815 = vmatpush1.bf16.msra.mxu0 %v685
    %816 = vmatprep.subr.bf16.mxu0 0
    %817 = vmatpush1.bf16.msra.mxu0 %v686
    %818 = vmatprep.subr.bf16.mxu0 0
    %819 = vmatpush1.bf16.msra.mxu0 %v687
    %820 = vmatprep.subr.bf16.mxu0 0
    %821 = vmatpush1.bf16.msra.mxu0 %v688
    %822 = vmatprep.mubr.bf16.mxu0 %v746
    %823 = vmatmul.mubr.bf16.gmra.mrb[0].mxu0 %v568
    %v824 = vpop.f32.mrb[0].mxu0
    %v825 = vadd.f32 %v607, %v824
    %v826 = vpop.f32.mrb[0].mxu0
    %v827 = vpop.f32.mrb[0].mxu0
    %v828 = vpop.f32.mrb[0].mxu0
    %829 = vdwg.mxu0
    %v830 = vtanh.pop %v825
    %v831 = vpack.c.bf16 %v830, %v830
    %s832 = scalar_lea.vmem [#allocation7], 128
    %v833 = vld [vmem:[%s832] sm:$0xf]
    %v834 = vld [vmem:[%s832 + $0x4] sm:$0xf]
    %v835 = vld [vmem:[%s832 + $0x8] sm:$0xf]
    %v836 = vld [vmem:[%s832 + $0xc] sm:$0xf]
    %v837 = vld [vmem:[%s832 + $0x10] sm:$0xf]
    %v838 = vld [vmem:[%s832 + $0x14] sm:$0xf]
    %v839 = vld [vmem:[%s832 + $0x18] sm:$0xf]
    %v840 = vld [vmem:[%s832 + $0x1c] sm:$0xf]
    %v841 = vld [vmem:[%s832 + $0x20] sm:$0xf]
    %v842 = vld [vmem:[%s832 + $0x24] sm:$0xf]
    %v843 = vld [vmem:[%s832 + $0x28] sm:$0xf]
    %v844 = vld [vmem:[%s832 + $0x2c] sm:$0xf]
    %v845 = vld [vmem:[%s832 + $0x30] sm:$0xf]
    %v846 = vld [vmem:[%s832 + $0x34] sm:$0xf]
    %v847 = vld [vmem:[%s832 + $0x38] sm:$0xf]
    %v848 = vld [vmem:[%s832 + $0x3c] sm:$0xf]
    %v849 = vld [vmem:[%s832 + $0x40] sm:$0xf]
    %v850 = vld [vmem:[%s832 + $0x44] sm:$0xf]
    %v851 = vld [vmem:[%s832 + $0x48] sm:$0xf]
    %v852 = vld [vmem:[%s832 + $0x4c] sm:$0xf]
    %v853 = vld [vmem:[%s832 + $0x50] sm:$0xf]
    %v854 = vld [vmem:[%s832 + $0x54] sm:$0xf]
    %v855 = vld [vmem:[%s832 + $0x58] sm:$0xf]
    %v856 = vld [vmem:[%s832 + $0x5c] sm:$0xf]
    %v857 = vld [vmem:[%s832 + $0x60] sm:$0xf]
    %v858 = vld [vmem:[%s832 + $0x64] sm:$0xf]
    %v859 = vld [vmem:[%s832 + $0x68] sm:$0xf]
    %v860 = vld [vmem:[%s832 + $0x6c] sm:$0xf]
    %v861 = vld [vmem:[%s832 + $0x70] sm:$0xf]
    %v862 = vld [vmem:[%s832 + $0x74] sm:$0xf]
    %v863 = vld [vmem:[%s832 + $0x78] sm:$0xf]
    %v864 = vld [vmem:[%s832 + $0x7c] sm:$0xf]
    %s865 = scalar_lea.vmem %s6, 2
    %v866 = vld [vmem:[%s865] sm:$0x1]
    %v868 = vlaneseq
    %v869 = vshrl.u32 %v868, 7
    %v870 = vsub.s32 0, %v869
    %v871 = vrot.slane %v866, %v870
    %v905 = vunpack.c.l.b16 %v833
    %v906 = vunpack.c.l.b16 %v834
    %v907 = vunpack.c.l.b16 %v835
    %v908 = vunpack.c.l.b16 %v836
    %v909 = vunpack.c.l.b16 %v837
    %v910 = vunpack.c.l.b16 %v838
    %v911 = vunpack.c.l.b16 %v839
    %v912 = vunpack.c.l.b16 %v840
    %v913 = vunpack.c.l.b16 %v841
    %v914 = vunpack.c.l.b16 %v842
    %v915 = vunpack.c.l.b16 %v843
    %v916 = vunpack.c.l.b16 %v844
    %v917 = vunpack.c.l.b16 %v845
    %v918 = vunpack.c.l.b16 %v846
    %v919 = vunpack.c.l.b16 %v847
    %v920 = vunpack.c.l.b16 %v848
    %v921 = vunpack.c.l.b16 %v849
    %v922 = vunpack.c.l.b16 %v850
    %v923 = vunpack.c.l.b16 %v851
    %v924 = vunpack.c.l.b16 %v852
    %v925 = vunpack.c.l.b16 %v853
    %v926 = vunpack.c.l.b16 %v854
    %v927 = vunpack.c.l.b16 %v855
    %v928 = vunpack.c.l.b16 %v856
    %v929 = vunpack.c.l.b16 %v857
    %v930 = vunpack.c.l.b16 %v858
    %v931 = vunpack.c.l.b16 %v859
    %v932 = vunpack.c.l.b16 %v860
    %v933 = vunpack.c.l.b16 %v861
    %v934 = vunpack.c.l.b16 %v862
    %v935 = vunpack.c.l.b16 %v863
    %v936 = vunpack.c.l.b16 %v864
    %v937 = vpack.c.b16 %v906, %v905
    %v938 = vpack.c.b16 %v908, %v907
    %v939 = vpack.c.b16 %v910, %v909
    %v940 = vpack.c.b16 %v912, %v911
    %v941 = vpack.c.b16 %v914, %v913
    %v942 = vpack.c.b16 %v916, %v915
    %v943 = vpack.c.b16 %v918, %v917
    %v944 = vpack.c.b16 %v920, %v919
    %v945 = vpack.c.b16 %v922, %v921
    %v946 = vpack.c.b16 %v924, %v923
    %v947 = vpack.c.b16 %v926, %v925
    %v948 = vpack.c.b16 %v928, %v927
    %v949 = vpack.c.b16 %v930, %v929
    %v950 = vpack.c.b16 %v932, %v931
    %v951 = vpack.c.b16 %v934, %v933
    %v952 = vpack.c.b16 %v936, %v935
    %969 = vmatprep.subr.bf16.mxu0 0
    %970 = vmatpush1.bf16.msra.mxu0 %v937
    %971 = vmatprep.subr.bf16.mxu0 0
    %972 = vmatpush1.bf16.msra.mxu0 %v938
    %973 = vmatprep.subr.bf16.mxu0 0
    %974 = vmatpush1.bf16.msra.mxu0 %v939
    %975 = vmatprep.subr.bf16.mxu0 0
    %976 = vmatpush1.bf16.msra.mxu0 %v940
    %977 = vmatprep.subr.bf16.mxu0 0
    %978 = vmatpush1.bf16.msra.mxu0 %v941
    %979 = vmatprep.subr.bf16.mxu0 0
    %980 = vmatpush1.bf16.msra.mxu0 %v942
    %981 = vmatprep.subr.bf16.mxu0 0
    %982 = vmatpush1.bf16.msra.mxu0 %v943
    %983 = vmatprep.subr.bf16.mxu0 0
    %984 = vmatpush1.bf16.msra.mxu0 %v944
    %985 = vmatprep.subr.bf16.mxu0 0
    %986 = vmatpush1.bf16.msra.mxu0 %v945
    %987 = vmatprep.subr.bf16.mxu0 0
    %988 = vmatpush1.bf16.msra.mxu0 %v946
    %989 = vmatprep.subr.bf16.mxu0 0
    %990 = vmatpush1.bf16.msra.mxu0 %v947
    %991 = vmatprep.subr.bf16.mxu0 0
    %992 = vmatpush1.bf16.msra.mxu0 %v948
    %993 = vmatprep.subr.bf16.mxu0 0
    %994 = vmatpush1.bf16.msra.mxu0 %v949
    %995 = vmatprep.subr.bf16.mxu0 0
    %996 = vmatpush1.bf16.msra.mxu0 %v950
    %997 = vmatprep.subr.bf16.mxu0 0
    %998 = vmatpush1.bf16.msra.mxu0 %v951
    %999 = vmatprep.subr.bf16.mxu0 0
    %1000 = vmatpush1.bf16.msra.mxu0 %v952
    %1001 = vmatprep.mubr.bf16.mxu0 %v415
    %1002 = vmatmul.mubr.bf16.gmra.mrb[0].mxu0 %v746
    %v1003 = vpop.f32.mrb[0].mxu0
    %v1004 = vadd.f32 %v871, %v1003
    %v1005 = vpop.f32.mrb[0].mxu0
    %v1006 = vpop.f32.mrb[0].mxu0
    %v1007 = vpop.f32.mrb[0].mxu0
    %1008 = vdwg.mxu0
    %v1009 = vtanh.pop %v1004
    %v1010 = vpack.c.bf16 %v1009, %v1009
    %1011 = vmatprep.subr.bf16.mxu0 0
    %1012 = vmatpush1.bf16.msra.mxu0 %v467
    %1013 = vmatprep.subr.bf16.mxu0 0
    %1014 = vmatpush1.bf16.msra.mxu0 %v468
    %1015 = vmatprep.subr.bf16.mxu0 0
    %1016 = vmatpush1.bf16.msra.mxu0 %v469
    %1017 = vmatprep.subr.bf16.mxu0 0
    %1018 = vmatpush1.bf16.msra.mxu0 %v470
    %1019 = vmatprep.subr.bf16.mxu0 0
    %1020 = vmatpush1.bf16.msra.mxu0 %v471
    %1021 = vmatprep.subr.bf16.mxu0 0
    %1022 = vmatpush1.bf16.msra.mxu0 %v472
    %1023 = vmatprep.subr.bf16.mxu0 0
    %1024 = vmatpush1.bf16.msra.mxu0 %v473
    %1025 = vmatprep.subr.bf16.mxu0 0
    %1026 = vmatpush1.bf16.msra.mxu0 %v474
    %1027 = vmatprep.subr.bf16.mxu0 0
    %1028 = vmatpush1.bf16.msra.mxu0 0
    %1029 = vmatprep.subr.bf16.mxu0 0
    %1030 = vmatpush1.bf16.msra.mxu0 0
    %1031 = vmatprep.subr.bf16.mxu0 0
    %1032 = vmatpush1.bf16.msra.mxu0 0
    %1033 = vmatprep.subr.bf16.mxu0 0
    %1034 = vmatpush1.bf16.msra.mxu0 0
    %1035 = vmatprep.subr.bf16.mxu0 0
    %1036 = vmatpush1.bf16.msra.mxu0 0
    %1037 = vmatprep.subr.bf16.mxu0 0
    %1038 = vmatpush1.bf16.msra.mxu0 0
    %1039 = vmatprep.subr.bf16.mxu0 0
    %1040 = vmatpush1.bf16.msra.mxu0 0
    %1041 = vmatprep.subr.bf16.mxu0 0
    %1042 = vmatpush1.bf16.msra.mxu0 0
    %1043 = vmatprep.mubr.bf16.mxu0 0
    %1044 = vmatmul.mubr.bf16.gmra.mrb[0].mxu0 %v789
    %v1045 = vpop.f32.mrb[0].mxu0
    %v1046 = vadd.f32 0.0, %v1045
    %v1047 = vpop.f32.mrb[0].mxu0
    %v1048 = vpop.f32.mrb[0].mxu0
    %v1049 = vpop.f32.mrb[0].mxu0
    %1050 = vdwg.mxu0
    %v1051 = vadd.f32 %v389, %v1046
    %v1052 = vtanh.pop %v1051
    %v1053 = vpack.c.bf16 %v1052, %v1052
    %1054 = vmatprep.subr.bf16.mxu0 0
    %1055 = vmatpush1.bf16.msra.mxu0 %v673
    %1056 = vmatprep.subr.bf16.mxu0 0
    %1057 = vmatpush1.bf16.msra.mxu0 %v674
    %1058 = vmatprep.subr.bf16.mxu0 0
    %1059 = vmatpush1.bf16.msra.mxu0 %v675
    %1060 = vmatprep.subr.bf16.mxu0 0
    %1061 = vmatpush1.bf16.msra.mxu0 %v676
    %1062 = vmatprep.subr.bf16.mxu0 0
    %1063 = vmatpush1.bf16.msra.mxu0 %v677
    %1064 = vmatprep.subr.bf16.mxu0 0
    %1065 = vmatpush1.bf16.msra.mxu0 %v678
    %1066 = vmatprep.subr.bf16.mxu0 0
    %1067 = vmatpush1.bf16.msra.mxu0 %v679
    %1068 = vmatprep.subr.bf16.mxu0 0
    %1069 = vmatpush1.bf16.msra.mxu0 %v680
    %1070 = vmatprep.subr.bf16.mxu0 0
    %1071 = vmatpush1.bf16.msra.mxu0 %v681
    %1072 = vmatprep.subr.bf16.mxu0 0
    %1073 = vmatpush1.bf16.msra.mxu0 %v682
    %1074 = vmatprep.subr.bf16.mxu0 0
    %1075 = vmatpush1.bf16.msra.mxu0 %v683
    %1076 = vmatprep.subr.bf16.mxu0 0
    %1077 = vmatpush1.bf16.msra.mxu0 %v684
    %1078 = vmatprep.subr.bf16.mxu0 0
    %1079 = vmatpush1.bf16.msra.mxu0 %v685
    %1080 = vmatprep.subr.bf16.mxu0 0
    %1081 = vmatpush1.bf16.msra.mxu0 %v686
    %1082 = vmatprep.subr.bf16.mxu0 0
    %1083 = vmatpush1.bf16.msra.mxu0 %v687
    %1084 = vmatprep.subr.bf16.mxu0 0
    %1085 = vmatpush1.bf16.msra.mxu0 %v688
    %1086 = vmatprep.mubr.bf16.mxu0 %v831
    %1087 = vmatmul.mubr.bf16.gmra.mrb[0].mxu0 %v789
    %v1088 = vpop.f32.mrb[0].mxu0
    %v1089 = vadd.f32 %v607, %v1088
    %v1090 = vpop.f32.mrb[0].mxu0
    %v1091 = vpop.f32.mrb[0].mxu0
    %v1092 = vpop.f32.mrb[0].mxu0
    %1093 = vdwg.mxu0
    %v1094 = vtanh.pop %v1089
    %v1095 = vpack.c.bf16 %v1094, %v1094
    %1096 = vmatprep.subr.bf16.mxu0 0
    %1097 = vmatpush1.bf16.msra.mxu0 %v937
    %1098 = vmatprep.subr.bf16.mxu0 0
    %1099 = vmatpush1.bf16.msra.mxu0 %v938
    %1100 = vmatprep.subr.bf16.mxu0 0
    %1101 = vmatpush1.bf16.msra.mxu0 %v939
    %1102 = vmatprep.subr.bf16.mxu0 0
    %1103 = vmatpush1.bf16.msra.mxu0 %v940
    %1104 = vmatprep.subr.bf16.mxu0 0
    %1105 = vmatpush1.bf16.msra.mxu0 %v941
    %1106 = vmatprep.subr.bf16.mxu0 0
    %1107 = vmatpush1.bf16.msra.mxu0 %v942
    %1108 = vmatprep.subr.bf16.mxu0 0
    %1109 = vmatpush1.bf16.msra.mxu0 %v943
    %1110 = vmatprep.subr.bf16.mxu0 0
    %1111 = vmatpush1.bf16.msra.mxu0 %v944
    %1112 = vmatprep.subr.bf16.mxu0 0
    %1113 = vmatpush1.bf16.msra.mxu0 %v945
    %1114 = vmatprep.subr.bf16.mxu0 0
    %1115 = vmatpush1.bf16.msra.mxu0 %v946
    %1116 = vmatprep.subr.bf16.mxu0 0
    %1117 = vmatpush1.bf16.msra.mxu0 %v947
    %1118 = vmatprep.subr.bf16.mxu0 0
    %1119 = vmatpush1.bf16.msra.mxu0 %v948
    %1120 = vmatprep.subr.bf16.mxu0 0
    %1121 = vmatpush1.bf16.msra.mxu0 %v949
    %1122 = vmatprep.subr.bf16.mxu0 0
    %1123 = vmatpush1.bf16.msra.mxu0 %v950
    %1124 = vmatprep.subr.bf16.mxu0 0
    %1125 = vmatpush1.bf16.msra.mxu0 %v951
    %1126 = vmatprep.subr.bf16.mxu0 0
    %1127 = vmatpush1.bf16.msra.mxu0 %v952
    %1128 = vmatprep.mubr.bf16.mxu0 %v1010
    %1129 = vmatmul.mubr.bf16.gmra.mrb[0].mxu0 %v831
    %v1130 = vpop.f32.mrb[0].mxu0
    %v1131 = vadd.f32 %v871, %v1130
    %v1132 = vpop.f32.mrb[0].mxu0
    %v1133 = vpop.f32.mrb[0].mxu0
    %v1134 = vpop.f32.mrb[0].mxu0
    %1135 = vdwg.mxu0
    %v1136 = vtanh.pop %v1131
    %v1137 = vpack.c.bf16 %v1136, %v1136
    %s1138 = scalar_lea.vmem [#allocation7], 256
    %v1139 = vld [vmem:[%s1138] sm:$0xf]
    %v1140 = vld [vmem:[%s1138 + $0x4] sm:$0xf]
    %v1141 = vld [vmem:[%s1138 + $0x8] sm:$0xf]
    %v1142 = vld [vmem:[%s1138 + $0xc] sm:$0xf]
    %v1143 = vld [vmem:[%s1138 + $0x10] sm:$0xf]
    %v1144 = vld [vmem:[%s1138 + $0x14] sm:$0xf]
    %v1145 = vld [vmem:[%s1138 + $0x18] sm:$0xf]
    %v1146 = vld [vmem:[%s1138 + $0x1c] sm:$0xf]
    %v1147 = vld [vmem:[%s1138 + $0x20] sm:$0xf]
    %v1148 = vld [vmem:[%s1138 + $0x24] sm:$0xf]
    %v1149 = vld [vmem:[%s1138 + $0x28] sm:$0xf]
    %v1150 = vld [vmem:[%s1138 + $0x2c] sm:$0xf]
    %v1151 = vld [vmem:[%s1138 + $0x30] sm:$0xf]
    %v1152 = vld [vmem:[%s1138 + $0x34] sm:$0xf]
    %v1153 = vld [vmem:[%s1138 + $0x38] sm:$0xf]
    %v1154 = vld [vmem:[%s1138 + $0x3c] sm:$0xf]
    %v1155 = vld [vmem:[%s1138 + $0x40] sm:$0xf]
    %v1156 = vld [vmem:[%s1138 + $0x44] sm:$0xf]
    %v1157 = vld [vmem:[%s1138 + $0x48] sm:$0xf]
    %v1158 = vld [vmem:[%s1138 + $0x4c] sm:$0xf]
    %v1159 = vld [vmem:[%s1138 + $0x50] sm:$0xf]
    %v1160 = vld [vmem:[%s1138 + $0x54] sm:$0xf]
    %v1161 = vld [vmem:[%s1138 + $0x58] sm:$0xf]
    %v1162 = vld [vmem:[%s1138 + $0x5c] sm:$0xf]
    %v1163 = vld [vmem:[%s1138 + $0x60] sm:$0xf]
    %v1164 = vld [vmem:[%s1138 + $0x64] sm:$0xf]
    %v1165 = vld [vmem:[%s1138 + $0x68] sm:$0xf]
    %v1166 = vld [vmem:[%s1138 + $0x6c] sm:$0xf]
    %v1167 = vld [vmem:[%s1138 + $0x70] sm:$0xf]
    %v1168 = vld [vmem:[%s1138 + $0x74] sm:$0xf]
    %v1169 = vld [vmem:[%s1138 + $0x78] sm:$0xf]
    %v1170 = vld [vmem:[%s1138 + $0x7c] sm:$0xf]
    %s1171 = scalar_lea.vmem %s6, 3
    %v1172 = vld [vmem:[%s1171] sm:$0x1]
    %v1174 = vlaneseq
    %v1175 = vshrl.u32 %v1174, 7
    %v1176 = vsub.s32 0, %v1175
    %v1177 = vrot.slane %v1172, %v1176
    %v1211 = vunpack.c.l.b16 %v1139
    %v1212 = vunpack.c.l.b16 %v1140
    %v1213 = vunpack.c.l.b16 %v1141
    %v1214 = vunpack.c.l.b16 %v1142
    %v1215 = vunpack.c.l.b16 %v1143
    %v1216 = vunpack.c.l.b16 %v1144
    %v1217 = vunpack.c.l.b16 %v1145
    %v1218 = vunpack.c.l.b16 %v1146
    %v1219 = vunpack.c.l.b16 %v1147
    %v1220 = vunpack.c.l.b16 %v1148
    %v1221 = vunpack.c.l.b16 %v1149
    %v1222 = vunpack.c.l.b16 %v1150
    %v1223 = vunpack.c.l.b16 %v1151
    %v1224 = vunpack.c.l.b16 %v1152
    %v1225 = vunpack.c.l.b16 %v1153
    %v1226 = vunpack.c.l.b16 %v1154
    %v1227 = vunpack.c.l.b16 %v1155
    %v1228 = vunpack.c.l.b16 %v1156
    %v1229 = vunpack.c.l.b16 %v1157
    %v1230 = vunpack.c.l.b16 %v1158
    %v1231 = vunpack.c.l.b16 %v1159
    %v1232 = vunpack.c.l.b16 %v1160
    %v1233 = vunpack.c.l.b16 %v1161
    %v1234 = vunpack.c.l.b16 %v1162
    %v1235 = vunpack.c.l.b16 %v1163
    %v1236 = vunpack.c.l.b16 %v1164
    %v1237 = vunpack.c.l.b16 %v1165
    %v1238 = vunpack.c.l.b16 %v1166
    %v1239 = vunpack.c.l.b16 %v1167
    %v1240 = vunpack.c.l.b16 %v1168
    %v1241 = vunpack.c.l.b16 %v1169
    %v1242 = vunpack.c.l.b16 %v1170
    %v1243 = vpack.c.b16 %v1212, %v1211
    %v1244 = vpack.c.b16 %v1214, %v1213
    %v1245 = vpack.c.b16 %v1216, %v1215
    %v1246 = vpack.c.b16 %v1218, %v1217
    %v1247 = vpack.c.b16 %v1220, %v1219
    %v1248 = vpack.c.b16 %v1222, %v1221
    %v1249 = vpack.c.b16 %v1224, %v1223
    %v1250 = vpack.c.b16 %v1226, %v1225
    %v1251 = vpack.c.b16 %v1228, %v1227
    %v1252 = vpack.c.b16 %v1230, %v1229
    %v1253 = vpack.c.b16 %v1232, %v1231
    %v1254 = vpack.c.b16 %v1234, %v1233
    %v1255 = vpack.c.b16 %v1236, %v1235
    %v1256 = vpack.c.b16 %v1238, %v1237
    %v1257 = vpack.c.b16 %v1240, %v1239
    %v1258 = vpack.c.b16 %v1242, %v1241
    %1275 = vmatprep.subr.bf16.mxu0 0
    %1276 = vmatpush1.bf16.msra.mxu0 %v1243
    %1277 = vmatprep.subr.bf16.mxu0 0
    %1278 = vmatpush1.bf16.msra.mxu0 %v1244
    %1279 = vmatprep.subr.bf16.mxu0 0
    %1280 = vmatpush1.bf16.msra.mxu0 %v1245
    %1281 = vmatprep.subr.bf16.mxu0 0
    %1282 = vmatpush1.bf16.msra.mxu0 %v1246
    %1283 = vmatprep.subr.bf16.mxu0 0
    %1284 = vmatpush1.bf16.msra.mxu0 %v1247
    %1285 = vmatprep.subr.bf16.mxu0 0
    %1286 = vmatpush1.bf16.msra.mxu0 %v1248
    %1287 = vmatprep.subr.bf16.mxu0 0
    %1288 = vmatpush1.bf16.msra.mxu0 %v1249
    %1289 = vmatprep.subr.bf16.mxu0 0
    %1290 = vmatpush1.bf16.msra.mxu0 %v1250
    %1291 = vmatprep.subr.bf16.mxu0 0
    %1292 = vmatpush1.bf16.msra.mxu0 %v1251
    %1293 = vmatprep.subr.bf16.mxu0 0
    %1294 = vmatpush1.bf16.msra.mxu0 %v1252
    %1295 = vmatprep.subr.bf16.mxu0 0
    %1296 = vmatpush1.bf16.msra.mxu0 %v1253
    %1297 = vmatprep.subr.bf16.mxu0 0
    %1298 = vmatpush1.bf16.msra.mxu0 %v1254
    %1299 = vmatprep.subr.bf16.mxu0 0
    %1300 = vmatpush1.bf16.msra.mxu0 %v1255
    %1301 = vmatprep.subr.bf16.mxu0 0
    %1302 = vmatpush1.bf16.msra.mxu0 %v1256
    %1303 = vmatprep.subr.bf16.mxu0 0
    %1304 = vmatpush1.bf16.msra.mxu0 %v1257
    %1305 = vmatprep.subr.bf16.mxu0 0
    %1306 = vmatpush1.bf16.msra.mxu0 %v1258
    %1307 = vmatprep.mubr.bf16.mxu0 %v418
    %1308 = vmatmul.mubr.bf16.gmra.mrb[0].mxu0 %v1010
    %v1309 = vpop.f32.mrb[0].mxu0
    %v1310 = vadd.f32 %v1177, %v1309
    %v1311 = vpop.f32.mrb[0].mxu0
    %v1312 = vpop.f32.mrb[0].mxu0
    %v1313 = vpop.f32.mrb[0].mxu0
    %1314 = vdwg.mxu0
    %v1315 = vtanh.pop %v1310
    %v1316 = vpack.c.bf16 %v1315, %v1315
    %v1317 = vld [vmem:[%s7] sm:$0xf]
    %v1318 = vld [vmem:[%s7 + $0x4] sm:$0xf]
    %v1319 = vld [vmem:[%s7 + $0x8] sm:$0xf]
    %v1320 = vld [vmem:[%s7 + $0xc] sm:$0xf]
    %v1321 = vld [vmem:[%s7 + $0x10] sm:$0xf]
    %v1322 = vld [vmem:[%s7 + $0x14] sm:$0xf]
    %v1323 = vld [vmem:[%s7 + $0x18] sm:$0xf]
    %v1324 = vld [vmem:[%s7 + $0x1c] sm:$0xf]
    %v1325 = vld [vmem:[%s7 + $0x20] sm:$0xf]
    %v1326 = vld [vmem:[%s7 + $0x24] sm:$0xf]
    %v1327 = vld [vmem:[%s7 + $0x28] sm:$0xf]
    %v1328 = vld [vmem:[%s7 + $0x2c] sm:$0xf]
    %v1329 = vld [vmem:[%s7 + $0x30] sm:$0xf]
    %v1330 = vld [vmem:[%s7 + $0x34] sm:$0xf]
    %v1331 = vld [vmem:[%s7 + $0x38] sm:$0xf]
    %v1332 = vld [vmem:[%s7 + $0x3c] sm:$0xf]
    %v1333 = vld [vmem:[%s8] sm:$0x1]
    %v1335 = vlaneseq
    %v1336 = vshrl.u32 %v1335, 7
    %v1337 = vsub.s32 0, %v1336
    %v1338 = vrot.slane %v1333, %v1337
    %v1356 = vunpack.c.l.b16 %v1317
    %v1357 = vunpack.c.l.b16 %v1318
    %v1358 = vunpack.c.l.b16 %v1319
    %v1359 = vunpack.c.l.b16 %v1320
    %v1360 = vunpack.c.l.b16 %v1321
    %v1361 = vunpack.c.l.b16 %v1322
    %v1362 = vunpack.c.l.b16 %v1323
    %v1363 = vunpack.c.l.b16 %v1324
    %v1364 = vunpack.c.l.b16 %v1325
    %v1365 = vunpack.c.l.b16 %v1326
    %v1366 = vunpack.c.l.b16 %v1327
    %v1367 = vunpack.c.l.b16 %v1328
    %v1368 = vunpack.c.l.b16 %v1329
    %v1369 = vunpack.c.l.b16 %v1330
    %v1370 = vunpack.c.l.b16 %v1331
    %v1371 = vunpack.c.l.b16 %v1332
    %v1372 = vpack.c.b16 %v1357, %v1356
    %v1373 = vpack.c.b16 %v1359, %v1358
    %v1374 = vpack.c.b16 %v1361, %v1360
    %v1375 = vpack.c.b16 %v1363, %v1362
    %v1376 = vpack.c.b16 %v1365, %v1364
    %v1377 = vpack.c.b16 %v1367, %v1366
    %v1378 = vpack.c.b16 %v1369, %v1368
    %v1379 = vpack.c.b16 %v1371, %v1370
    %1388 = vmatprep.subr.bf16.mxu0 0
    %1389 = vmatpush1.bf16.msra.mxu0 %v1372
    %1390 = vmatprep.subr.bf16.mxu0 0
    %1391 = vmatpush1.bf16.msra.mxu0 %v1373
    %1392 = vmatprep.subr.bf16.mxu0 0
    %1393 = vmatpush1.bf16.msra.mxu0 %v1374
    %1394 = vmatprep.subr.bf16.mxu0 0
    %1395 = vmatpush1.bf16.msra.mxu0 %v1375
    %1396 = vmatprep.subr.bf16.mxu0 0
    %1397 = vmatpush1.bf16.msra.mxu0 %v1376
    %1398 = vmatprep.subr.bf16.mxu0 0
    %1399 = vmatpush1.bf16.msra.mxu0 %v1377
    %1400 = vmatprep.subr.bf16.mxu0 0
    %1401 = vmatpush1.bf16.msra.mxu0 %v1378
    %1402 = vmatprep.subr.bf16.mxu0 0
    %1403 = vmatpush1.bf16.msra.mxu0 %v1379
    %1404 = vmatprep.subr.bf16.mxu0 0
    %1405 = vmatpush1.bf16.msra.mxu0 0
    %1406 = vmatprep.subr.bf16.mxu0 0
    %1407 = vmatpush1.bf16.msra.mxu0 0
    %1408 = vmatprep.subr.bf16.mxu0 0
    %1409 = vmatpush1.bf16.msra.mxu0 0
    %1410 = vmatprep.subr.bf16.mxu0 0
    %1411 = vmatpush1.bf16.msra.mxu0 0
    %1412 = vmatprep.subr.bf16.mxu0 0
    %1413 = vmatpush1.bf16.msra.mxu0 0
    %1414 = vmatprep.subr.bf16.mxu0 0
    %1415 = vmatpush1.bf16.msra.mxu0 0
    %1416 = vmatprep.subr.bf16.mxu0 0
    %1417 = vmatpush1.bf16.msra.mxu0 0
    %1418 = vmatprep.subr.bf16.mxu0 0
    %1419 = vmatpush1.bf16.msra.mxu0 0
    %1420 = vmatprep.mubr.bf16.mxu0 0
    %1421 = vmatmul.mubr.bf16.gmra.mrb[0].mxu0 %v1316
    %v1422 = vpop.f32.mrb[0].mxu0
    %v1423 = vadd.f32 %v1338, %v1422
    %v1424 = vpop.f32.mrb[0].mxu0
    %v1425 = vpop.f32.mrb[0].mxu0
    %v1426 = vpop.f32.mrb[0].mxu0
    %1427 = vdwg.mxu0
    %v1429 = vcombine.high %v1423, %v1423
    %v1431 = vunpack.c.l.s4 1966171168
    %v1432 = vunpack.c.0.s8 %v1431
    %v1433 = vlaneseq
    %v1434 = vshrl.u32 %v1433, 7
    %v1435 = vsub.s32 %v1432, %v1434
    %v1436 = vrot.slane %v1423, %v1435
    %v1438 = vunpack.c.l.s4 1966171168
    %v1439 = vunpack.c.0.s8 %v1438
    %v1440 = vlaneseq
    %v1441 = vshrl.u32 %v1440, 7
    %v1442 = vsub.s32 %v1439, %v1441
    %v1443 = vrot.slane %v1429, %v1442
    %v1444 = vcombine.high %v1436, %v1436
    %v1445 = vcombine.high %v1443, %v1443
    %v1447 = vunpack.c.l.s4 1966171168
    %v1448 = vunpack.c.0.s8 %v1447
    %v1449 = vlaneseq
    %v1450 = vshrl.u32 %v1449, 7
    %v1451 = vsub.s32 %v1448, %v1450
    %v1452 = vrot.slane %v1436, %v1451
    %v1454 = vunpack.c.l.s4 1966171168
    %v1455 = vunpack.c.0.s8 %v1454
    %v1456 = vlaneseq
    %v1457 = vshrl.u32 %v1456, 7
    %v1458 = vsub.s32 %v1455, %v1457
    %v1459 = vrot.slane %v1443, %v1458
    %v1461 = vunpack.c.l.s4 1966171168
    %v1462 = vunpack.c.0.s8 %v1461
    %v1463 = vlaneseq
    %v1464 = vshrl.u32 %v1463, 7
    %v1465 = vsub.s32 %v1462, %v1464
    %v1466 = vrot.slane %v1444, %v1465
    %v1468 = vunpack.c.l.s4 1966171168
    %v1469 = vunpack.c.0.s8 %v1468
    %v1470 = vlaneseq
    %v1471 = vshrl.u32 %v1470, 7
    %v1472 = vsub.s32 %v1469, %v1471
    %v1473 = vrot.slane %v1445, %v1472
    %v1474 = vcombine.high %v1452, %v1452
    %v1475 = vcombine.high %v1459, %v1459
    %v1476 = vcombine.high %v1466, %v1466
    %v1477 = vcombine.high %v1473, %v1473
    %1486 = vst [vmem:[#allocation8] sm:$0x1] %v1452
    %1487 = vst [vmem:[#allocation8 + $0x8] sm:$0x1] %v1466
    %1488 = vst [vmem:[#allocation8 + $0x10] sm:$0x1] %v1474
    %1489 = vst [vmem:[#allocation8 + $0x18] sm:$0x1] %v1476
    %1490 = vst [vmem:[#allocation8 + $0x20] sm:$0x1] %v1459
    %1491 = vst [vmem:[#allocation8 + $0x28] sm:$0x1] %v1473
    %1492 = vst [vmem:[#allocation8 + $0x30] sm:$0x1] %v1475
    %1493 = vst [vmem:[#allocation8 + $0x38] sm:$0x1] %v1477
    %v1494 = vld [vmem:[#allocation5] sm:$0xf]
    %v1495 = vld [vmem:[#allocation5 + $0x4] sm:$0xf]
    %v1496 = vld [vmem:[#allocation5 + $0x8] sm:$0xf]
    %v1497 = vld [vmem:[#allocation5 + $0xc] sm:$0xf]
    %v1498 = vld [vmem:[#allocation5 + $0x10] sm:$0xf]
    %v1499 = vld [vmem:[#allocation5 + $0x14] sm:$0xf]
    %v1500 = vld [vmem:[#allocation5 + $0x18] sm:$0xf]
    %v1501 = vld [vmem:[#allocation5 + $0x1c] sm:$0xf]
    %v1502 = vld [vmem:[#allocation5 + $0x20] sm:$0xf]
    %v1503 = vld [vmem:[#allocation5 + $0x24] sm:$0xf]
    %v1504 = vld [vmem:[#allocation5 + $0x28] sm:$0xf]
    %v1505 = vld [vmem:[#allocation5 + $0x2c] sm:$0xf]
    %v1506 = vld [vmem:[#allocation5 + $0x30] sm:$0xf]
    %v1507 = vld [vmem:[#allocation5 + $0x34] sm:$0xf]
    %v1508 = vld [vmem:[#allocation5 + $0x38] sm:$0xf]
    %v1509 = vld [vmem:[#allocation5 + $0x3c] sm:$0xf]
    %v1526 = vunpack.c.l.b16 %v1494
    %v1527 = vunpack.c.l.b16 %v1495
    %v1528 = vunpack.c.l.b16 %v1496
    %v1529 = vunpack.c.l.b16 %v1497
    %v1530 = vunpack.c.l.b16 %v1498
    %v1531 = vunpack.c.l.b16 %v1499
    %v1532 = vunpack.c.l.b16 %v1500
    %v1533 = vunpack.c.l.b16 %v1501
    %v1534 = vunpack.c.l.b16 %v1502
    %v1535 = vunpack.c.l.b16 %v1503
    %v1536 = vunpack.c.l.b16 %v1504
    %v1537 = vunpack.c.l.b16 %v1505
    %v1538 = vunpack.c.l.b16 %v1506
    %v1539 = vunpack.c.l.b16 %v1507
    %v1540 = vunpack.c.l.b16 %v1508
    %v1541 = vunpack.c.l.b16 %v1509
    %v1542 = vpack.c.b16 %v1527, %v1526
    %v1543 = vpack.c.b16 %v1529, %v1528
    %v1544 = vpack.c.b16 %v1531, %v1530
    %v1545 = vpack.c.b16 %v1533, %v1532
    %v1546 = vpack.c.b16 %v1535, %v1534
    %v1547 = vpack.c.b16 %v1537, %v1536
    %v1548 = vpack.c.b16 %v1539, %v1538
    %v1549 = vpack.c.b16 %v1541, %v1540
    %1558 = vmatprep.subr.bf16.mxu0 0
    %1559 = vmatpush1.bf16.msra.mxu0 %v1542
    %1560 = vmatprep.subr.bf16.mxu0 0
    %1561 = vmatpush1.bf16.msra.mxu0 %v1543
    %1562 = vmatprep.subr.bf16.mxu0 0
    %1563 = vmatpush1.bf16.msra.mxu0 %v1544
    %1564 = vmatprep.subr.bf16.mxu0 0
    %1565 = vmatpush1.bf16.msra.mxu0 %v1545
    %1566 = vmatprep.subr.bf16.mxu0 0
    %1567 = vmatpush1.bf16.msra.mxu0 %v1546
    %1568 = vmatprep.subr.bf16.mxu0 0
    %1569 = vmatpush1.bf16.msra.mxu0 %v1547
    %1570 = vmatprep.subr.bf16.mxu0 0
    %1571 = vmatpush1.bf16.msra.mxu0 %v1548
    %1572 = vmatprep.subr.bf16.mxu0 0
    %1573 = vmatpush1.bf16.msra.mxu0 %v1549
    %1574 = vmatprep.subr.bf16.mxu0 0
    %1575 = vmatpush1.bf16.msra.mxu0 0
    %1576 = vmatprep.subr.bf16.mxu0 0
    %1577 = vmatpush1.bf16.msra.mxu0 0
    %1578 = vmatprep.subr.bf16.mxu0 0
    %1579 = vmatpush1.bf16.msra.mxu0 0
    %1580 = vmatprep.subr.bf16.mxu0 0
    %1581 = vmatpush1.bf16.msra.mxu0 0
    %1582 = vmatprep.subr.bf16.mxu0 0
    %1583 = vmatpush1.bf16.msra.mxu0 0
    %1584 = vmatprep.subr.bf16.mxu0 0
    %1585 = vmatpush1.bf16.msra.mxu0 0
    %1586 = vmatprep.subr.bf16.mxu0 0
    %1587 = vmatpush1.bf16.msra.mxu0 0
    %1588 = vmatprep.subr.bf16.mxu0 0
    %1589 = vmatpush1.bf16.msra.mxu0 0
    %1590 = vmatprep.mubr.bf16.mxu0 0
    %1591 = vmatmul.mubr.bf16.gmra.mrb[0].mxu0 %v1053
    %v1592 = vpop.f32.mrb[0].mxu0
    %v1593 = vadd.f32 0.0, %v1592
    %v1594 = vpop.f32.mrb[0].mxu0
    %v1595 = vpop.f32.mrb[0].mxu0
    %v1596 = vpop.f32.mrb[0].mxu0
    %1597 = vdwg.mxu0
    %v1598 = vadd.f32 %v394, %v1593
    %v1599 = vtanh.pop %v1598
    %v1600 = vpack.c.bf16 %v1599, %v1599
    %v1601 = vld [vmem:[#allocation7] sm:$0xf]
    %v1602 = vld [vmem:[#allocation7 + $0x4] sm:$0xf]
    %v1603 = vld [vmem:[#allocation7 + $0x8] sm:$0xf]
    %v1604 = vld [vmem:[#allocation7 + $0xc] sm:$0xf]
    %v1605 = vld [vmem:[#allocation7 + $0x10] sm:$0xf]
    %v1606 = vld [vmem:[#allocation7 + $0x14] sm:$0xf]
    %v1607 = vld [vmem:[#allocation7 + $0x18] sm:$0xf]
    %v1608 = vld [vmem:[#allocation7 + $0x1c] sm:$0xf]
    %v1609 = vld [vmem:[#allocation7 + $0x20] sm:$0xf]
    %v1610 = vld [vmem:[#allocation7 + $0x24] sm:$0xf]
    %v1611 = vld [vmem:[#allocation7 + $0x28] sm:$0xf]
    %v1612 = vld [vmem:[#allocation7 + $0x2c] sm:$0xf]
    %v1613 = vld [vmem:[#allocation7 + $0x30] sm:$0xf]
    %v1614 = vld [vmem:[#allocation7 + $0x34] sm:$0xf]
    %v1615 = vld [vmem:[#allocation7 + $0x38] sm:$0xf]
    %v1616 = vld [vmem:[#allocation7 + $0x3c] sm:$0xf]
    %v1617 = vld [vmem:[#allocation7 + $0x40] sm:$0xf]
    %v1618 = vld [vmem:[#allocation7 + $0x44] sm:$0xf]
    %v1619 = vld [vmem:[#allocation7 + $0x48] sm:$0xf]
    %v1620 = vld [vmem:[#allocation7 + $0x4c] sm:$0xf]
    %v1621 = vld [vmem:[#allocation7 + $0x50] sm:$0xf]
    %v1622 = vld [vmem:[#allocation7 + $0x54] sm:$0xf]
    %v1623 = vld [vmem:[#allocation7 + $0x58] sm:$0xf]
    %v1624 = vld [vmem:[#allocation7 + $0x5c] sm:$0xf]
    %v1625 = vld [vmem:[#allocation7 + $0x60] sm:$0xf]
    %v1626 = vld [vmem:[#allocation7 + $0x64] sm:$0xf]
    %v1627 = vld [vmem:[#allocation7 + $0x68] sm:$0xf]
    %v1628 = vld [vmem:[#allocation7 + $0x6c] sm:$0xf]
    %v1629 = vld [vmem:[#allocation7 + $0x70] sm:$0xf]
    %v1630 = vld [vmem:[#allocation7 + $0x74] sm:$0xf]
    %v1631 = vld [vmem:[#allocation7 + $0x78] sm:$0xf]
    %v1632 = vld [vmem:[#allocation7 + $0x7c] sm:$0xf]
    %v1633 = vld [vmem:[%s601] sm:$0x1]
    %v1635 = vlaneseq
    %v1636 = vshrl.u32 %v1635, 7
    %v1637 = vsub.s32 0, %v1636
    %v1638 = vrot.slane %v1633, %v1637
    %v1672 = vunpack.c.l.b16 %v1601
    %v1673 = vunpack.c.l.b16 %v1602
    %v1674 = vunpack.c.l.b16 %v1603
    %v1675 = vunpack.c.l.b16 %v1604
    %v1676 = vunpack.c.l.b16 %v1605
    %v1677 = vunpack.c.l.b16 %v1606
    %v1678 = vunpack.c.l.b16 %v1607
    %v1679 = vunpack.c.l.b16 %v1608
    %v1680 = vunpack.c.l.b16 %v1609
    %v1681 = vunpack.c.l.b16 %v1610
    %v1682 = vunpack.c.l.b16 %v1611
    %v1683 = vunpack.c.l.b16 %v1612
    %v1684 = vunpack.c.l.b16 %v1613
    %v1685 = vunpack.c.l.b16 %v1614
    %v1686 = vunpack.c.l.b16 %v1615
    %v1687 = vunpack.c.l.b16 %v1616
    %v1688 = vunpack.c.l.b16 %v1617
    %v1689 = vunpack.c.l.b16 %v1618
    %v1690 = vunpack.c.l.b16 %v1619
    %v1691 = vunpack.c.l.b16 %v1620
    %v1692 = vunpack.c.l.b16 %v1621
    %v1693 = vunpack.c.l.b16 %v1622
    %v1694 = vunpack.c.l.b16 %v1623
    %v1695 = vunpack.c.l.b16 %v1624
    %v1696 = vunpack.c.l.b16 %v1625
    %v1697 = vunpack.c.l.b16 %v1626
    %v1698 = vunpack.c.l.b16 %v1627
    %v1699 = vunpack.c.l.b16 %v1628
    %v1700 = vunpack.c.l.b16 %v1629
    %v1701 = vunpack.c.l.b16 %v1630
    %v1702 = vunpack.c.l.b16 %v1631
    %v1703 = vunpack.c.l.b16 %v1632
    %v1704 = vpack.c.b16 %v1673, %v1672
    %v1705 = vpack.c.b16 %v1675, %v1674
    %v1706 = vpack.c.b16 %v1677, %v1676
    %v1707 = vpack.c.b16 %v1679, %v1678
    %v1708 = vpack.c.b16 %v1681, %v1680
    %v1709 = vpack.c.b16 %v1683, %v1682
    %v1710 = vpack.c.b16 %v1685, %v1684
    %v1711 = vpack.c.b16 %v1687, %v1686
    %v1712 = vpack.c.b16 %v1689, %v1688
    %v1713 = vpack.c.b16 %v1691, %v1690
    %v1714 = vpack.c.b16 %v1693, %v1692
    %v1715 = vpack.c.b16 %v1695, %v1694
    %v1716 = vpack.c.b16 %v1697, %v1696
    %v1717 = vpack.c.b16 %v1699, %v1698
    %v1718 = vpack.c.b16 %v1701, %v1700
    %v1719 = vpack.c.b16 %v1703, %v1702
    %1736 = vmatprep.subr.bf16.mxu0 0
    %1737 = vmatpush1.bf16.msra.mxu0 %v1704
    %1738 = vmatprep.subr.bf16.mxu0 0
    %1739 = vmatpush1.bf16.msra.mxu0 %v1705
    %1740 = vmatprep.subr.bf16.mxu0 0
    %1741 = vmatpush1.bf16.msra.mxu0 %v1706
    %1742 = vmatprep.subr.bf16.mxu0 0
    %1743 = vmatpush1.bf16.msra.mxu0 %v1707
    %1744 = vmatprep.subr.bf16.mxu0 0
    %1745 = vmatpush1.bf16.msra.mxu0 %v1708
    %1746 = vmatprep.subr.bf16.mxu0 0
    %1747 = vmatpush1.bf16.msra.mxu0 %v1709
    %1748 = vmatprep.subr.bf16.mxu0 0
    %1749 = vmatpush1.bf16.msra.mxu0 %v1710
    %1750 = vmatprep.subr.bf16.mxu0 0
    %1751 = vmatpush1.bf16.msra.mxu0 %v1711
    %1752 = vmatprep.subr.bf16.mxu0 0
    %1753 = vmatpush1.bf16.msra.mxu0 %v1712
    %1754 = vmatprep.subr.bf16.mxu0 0
    %1755 = vmatpush1.bf16.msra.mxu0 %v1713
    %1756 = vmatprep.subr.bf16.mxu0 0
    %1757 = vmatpush1.bf16.msra.mxu0 %v1714
    %1758 = vmatprep.subr.bf16.mxu0 0
    %1759 = vmatpush1.bf16.msra.mxu0 %v1715
    %1760 = vmatprep.subr.bf16.mxu0 0
    %1761 = vmatpush1.bf16.msra.mxu0 %v1716
    %1762 = vmatprep.subr.bf16.mxu0 0
    %1763 = vmatpush1.bf16.msra.mxu0 %v1717
    %1764 = vmatprep.subr.bf16.mxu0 0
    %1765 = vmatpush1.bf16.msra.mxu0 %v1718
    %1766 = vmatprep.subr.bf16.mxu0 0
    %1767 = vmatpush1.bf16.msra.mxu0 %v1719
    %1768 = vmatprep.mubr.bf16.mxu0 %v1095
    %1769 = vmatmul.mubr.bf16.gmra.mrb[0].mxu0 %v1053
    %v1770 = vpop.f32.mrb[0].mxu0
    %v1771 = vadd.f32 %v1638, %v1770
    %v1772 = vpop.f32.mrb[0].mxu0
    %v1773 = vpop.f32.mrb[0].mxu0
    %v1774 = vpop.f32.mrb[0].mxu0
    %1775 = vdwg.mxu0
    %v1776 = vtanh.pop %v1771
    %v1777 = vpack.c.bf16 %v1776, %v1776
    %v1778 = vld [vmem:[%s832] sm:$0xf]
    %v1779 = vld [vmem:[%s832 + $0x4] sm:$0xf]
    %v1780 = vld [vmem:[%s832 + $0x8] sm:$0xf]
    %v1781 = vld [vmem:[%s832 + $0xc] sm:$0xf]
    %v1782 = vld [vmem:[%s832 + $0x10] sm:$0xf]
    %v1783 = vld [vmem:[%s832 + $0x14] sm:$0xf]
    %v1784 = vld [vmem:[%s832 + $0x18] sm:$0xf]
    %v1785 = vld [vmem:[%s832 + $0x1c] sm:$0xf]
    %v1786 = vld [vmem:[%s832 + $0x20] sm:$0xf]
    %v1787 = vld [vmem:[%s832 + $0x24] sm:$0xf]
    %v1788 = vld [vmem:[%s832 + $0x28] sm:$0xf]
    %v1789 = vld [vmem:[%s832 + $0x2c] sm:$0xf]
    %v1790 = vld [vmem:[%s832 + $0x30] sm:$0xf]
    %v1791 = vld [vmem:[%s832 + $0x34] sm:$0xf]
    %v1792 = vld [vmem:[%s832 + $0x38] sm:$0xf]
    %v1793 = vld [vmem:[%s832 + $0x3c] sm:$0xf]
    %v1794 = vld [vmem:[%s832 + $0x40] sm:$0xf]
    %v1795 = vld [vmem:[%s832 + $0x44] sm:$0xf]
    %v1796 = vld [vmem:[%s832 + $0x48] sm:$0xf]
    %v1797 = vld [vmem:[%s832 + $0x4c] sm:$0xf]
    %v1798 = vld [vmem:[%s832 + $0x50] sm:$0xf]
    %v1799 = vld [vmem:[%s832 + $0x54] sm:$0xf]
    %v1800 = vld [vmem:[%s832 + $0x58] sm:$0xf]
    %v1801 = vld [vmem:[%s832 + $0x5c] sm:$0xf]
    %v1802 = vld [vmem:[%s832 + $0x60] sm:$0xf]
    %v1803 = vld [vmem:[%s832 + $0x64] sm:$0xf]
    %v1804 = vld [vmem:[%s832 + $0x68] sm:$0xf]
    %v1805 = vld [vmem:[%s832 + $0x6c] sm:$0xf]
    %v1806 = vld [vmem:[%s832 + $0x70] sm:$0xf]
    %v1807 = vld [vmem:[%s832 + $0x74] sm:$0xf]
    %v1808 = vld [vmem:[%s832 + $0x78] sm:$0xf]
    %v1809 = vld [vmem:[%s832 + $0x7c] sm:$0xf]
    %v1810 = vld [vmem:[%s865] sm:$0x1]
    %v1812 = vlaneseq
    %v1813 = vshrl.u32 %v1812, 7
    %v1814 = vsub.s32 0, %v1813
    %v1815 = vrot.slane %v1810, %v1814
    %v1849 = vunpack.c.l.b16 %v1778
    %v1850 = vunpack.c.l.b16 %v1779
    %v1851 = vunpack.c.l.b16 %v1780
    %v1852 = vunpack.c.l.b16 %v1781
    %v1853 = vunpack.c.l.b16 %v1782
    %v1854 = vunpack.c.l.b16 %v1783
    %v1855 = vunpack.c.l.b16 %v1784
    %v1856 = vunpack.c.l.b16 %v1785
    %v1857 = vunpack.c.l.b16 %v1786
    %v1858 = vunpack.c.l.b16 %v1787
    %v1859 = vunpack.c.l.b16 %v1788
    %v1860 = vunpack.c.l.b16 %v1789
    %v1861 = vunpack.c.l.b16 %v1790
    %v1862 = vunpack.c.l.b16 %v1791
    %v1863 = vunpack.c.l.b16 %v1792
    %v1864 = vunpack.c.l.b16 %v1793
    %v1865 = vunpack.c.l.b16 %v1794
    %v1866 = vunpack.c.l.b16 %v1795
    %v1867 = vunpack.c.l.b16 %v1796
    %v1868 = vunpack.c.l.b16 %v1797
    %v1869 = vunpack.c.l.b16 %v1798
    %v1870 = vunpack.c.l.b16 %v1799
    %v1871 = vunpack.c.l.b16 %v1800
    %v1872 = vunpack.c.l.b16 %v1801
    %v1873 = vunpack.c.l.b16 %v1802
    %v1874 = vunpack.c.l.b16 %v1803
    %v1875 = vunpack.c.l.b16 %v1804
    %v1876 = vunpack.c.l.b16 %v1805
    %v1877 = vunpack.c.l.b16 %v1806
    %v1878 = vunpack.c.l.b16 %v1807
    %v1879 = vunpack.c.l.b16 %v1808
    %v1880 = vunpack.c.l.b16 %v1809
    %v1881 = vpack.c.b16 %v1850, %v1849
    %v1882 = vpack.c.b16 %v1852, %v1851
    %v1883 = vpack.c.b16 %v1854, %v1853
    %v1884 = vpack.c.b16 %v1856, %v1855
    %v1885 = vpack.c.b16 %v1858, %v1857
    %v1886 = vpack.c.b16 %v1860, %v1859
    %v1887 = vpack.c.b16 %v1862, %v1861
    %v1888 = vpack.c.b16 %v1864, %v1863
    %v1889 = vpack.c.b16 %v1866, %v1865
    %v1890 = vpack.c.b16 %v1868, %v1867
    %v1891 = vpack.c.b16 %v1870, %v1869
    %v1892 = vpack.c.b16 %v1872, %v1871
    %v1893 = vpack.c.b16 %v1874, %v1873
    %v1894 = vpack.c.b16 %v1876, %v1875
    %v1895 = vpack.c.b16 %v1878, %v1877
    %v1896 = vpack.c.b16 %v1880, %v1879
    %1913 = vmatprep.subr.bf16.mxu0 0
    %1914 = vmatpush1.bf16.msra.mxu0 %v1881
    %1915 = vmatprep.subr.bf16.mxu0 0
    %1916 = vmatpush1.bf16.msra.mxu0 %v1882
    %1917 = vmatprep.subr.bf16.mxu0 0
    %1918 = vmatpush1.bf16.msra.mxu0 %v1883
    %1919 = vmatprep.subr.bf16.mxu0 0
    %1920 = vmatpush1.bf16.msra.mxu0 %v1884
    %1921 = vmatprep.subr.bf16.mxu0 0
    %1922 = vmatpush1.bf16.msra.mxu0 %v1885
    %1923 = vmatprep.subr.bf16.mxu0 0
    %1924 = vmatpush1.bf16.msra.mxu0 %v1886
    %1925 = vmatprep.subr.bf16.mxu0 0
    %1926 = vmatpush1.bf16.msra.mxu0 %v1887
    %1927 = vmatprep.subr.bf16.mxu0 0
    %1928 = vmatpush1.bf16.msra.mxu0 %v1888
    %1929 = vmatprep.subr.bf16.mxu0 0
    %1930 = vmatpush1.bf16.msra.mxu0 %v1889
    %1931 = vmatprep.subr.bf16.mxu0 0
    %1932 = vmatpush1.bf16.msra.mxu0 %v1890
    %1933 = vmatprep.subr.bf16.mxu0 0
    %1934 = vmatpush1.bf16.msra.mxu0 %v1891
    %1935 = vmatprep.subr.bf16.mxu0 0
    %1936 = vmatpush1.bf16.msra.mxu0 %v1892
    %1937 = vmatprep.subr.bf16.mxu0 0
    %1938 = vmatpush1.bf16.msra.mxu0 %v1893
    %1939 = vmatprep.subr.bf16.mxu0 0
    %1940 = vmatpush1.bf16.msra.mxu0 %v1894
    %1941 = vmatprep.subr.bf16.mxu0 0
    %1942 = vmatpush1.bf16.msra.mxu0 %v1895
    %1943 = vmatprep.subr.bf16.mxu0 0
    %1944 = vmatpush1.bf16.msra.mxu0 %v1896
    %1945 = vmatprep.mubr.bf16.mxu0 %v1137
    %1946 = vmatmul.mubr.bf16.gmra.mrb[0].mxu0 %v1095
    %v1947 = vpop.f32.mrb[0].mxu0
    %v1948 = vadd.f32 %v1815, %v1947
    %v1949 = vpop.f32.mrb[0].mxu0
    %v1950 = vpop.f32.mrb[0].mxu0
    %v1951 = vpop.f32.mrb[0].mxu0
    %1952 = vdwg.mxu0
    %v1953 = vtanh.pop %v1948
    %v1954 = vpack.c.bf16 %v1953, %v1953
    %v1955 = vld [vmem:[%s1138] sm:$0xf]
    %v1956 = vld [vmem:[%s1138 + $0x4] sm:$0xf]
    %v1957 = vld [vmem:[%s1138 + $0x8] sm:$0xf]
    %v1958 = vld [vmem:[%s1138 + $0xc] sm:$0xf]
    %v1959 = vld [vmem:[%s1138 + $0x10] sm:$0xf]
    %v1960 = vld [vmem:[%s1138 + $0x14] sm:$0xf]
    %v1961 = vld [vmem:[%s1138 + $0x18] sm:$0xf]
    %v1962 = vld [vmem:[%s1138 + $0x1c] sm:$0xf]
    %v1963 = vld [vmem:[%s1138 + $0x20] sm:$0xf]
    %v1964 = vld [vmem:[%s1138 + $0x24] sm:$0xf]
    %v1965 = vld [vmem:[%s1138 + $0x28] sm:$0xf]
    %v1966 = vld [vmem:[%s1138 + $0x2c] sm:$0xf]
    %v1967 = vld [vmem:[%s1138 + $0x30] sm:$0xf]
    %v1968 = vld [vmem:[%s1138 + $0x34] sm:$0xf]
    %v1969 = vld [vmem:[%s1138 + $0x38] sm:$0xf]
    %v1970 = vld [vmem:[%s1138 + $0x3c] sm:$0xf]
    %v1971 = vld [vmem:[%s1138 + $0x40] sm:$0xf]
    %v1972 = vld [vmem:[%s1138 + $0x44] sm:$0xf]
    %v1973 = vld [vmem:[%s1138 + $0x48] sm:$0xf]
    %v1974 = vld [vmem:[%s1138 + $0x4c] sm:$0xf]
    %v1975 = vld [vmem:[%s1138 + $0x50] sm:$0xf]
    %v1976 = vld [vmem:[%s1138 + $0x54] sm:$0xf]
    %v1977 = vld [vmem:[%s1138 + $0x58] sm:$0xf]
    %v1978 = vld [vmem:[%s1138 + $0x5c] sm:$0xf]
    %v1979 = vld [vmem:[%s1138 + $0x60] sm:$0xf]
    %v1980 = vld [vmem:[%s1138 + $0x64] sm:$0xf]
    %v1981 = vld [vmem:[%s1138 + $0x68] sm:$0xf]
    %v1982 = vld [vmem:[%s1138 + $0x6c] sm:$0xf]
    %v1983 = vld [vmem:[%s1138 + $0x70] sm:$0xf]
    %v1984 = vld [vmem:[%s1138 + $0x74] sm:$0xf]
    %v1985 = vld [vmem:[%s1138 + $0x78] sm:$0xf]
    %v1986 = vld [vmem:[%s1138 + $0x7c] sm:$0xf]
    %v1987 = vld [vmem:[%s1171] sm:$0x1]
    %v1989 = vlaneseq
    %v1990 = vshrl.u32 %v1989, 7
    %v1991 = vsub.s32 0, %v1990
    %v1992 = vrot.slane %v1987, %v1991
    %v2026 = vunpack.c.l.b16 %v1955
    %v2027 = vunpack.c.l.b16 %v1956
    %v2028 = vunpack.c.l.b16 %v1957
    %v2029 = vunpack.c.l.b16 %v1958
    %v2030 = vunpack.c.l.b16 %v1959
    %v2031 = vunpack.c.l.b16 %v1960
    %v2032 = vunpack.c.l.b16 %v1961
    %v2033 = vunpack.c.l.b16 %v1962
    %v2034 = vunpack.c.l.b16 %v1963
    %v2035 = vunpack.c.l.b16 %v1964
    %v2036 = vunpack.c.l.b16 %v1965
    %v2037 = vunpack.c.l.b16 %v1966
    %v2038 = vunpack.c.l.b16 %v1967
    %v2039 = vunpack.c.l.b16 %v1968
    %v2040 = vunpack.c.l.b16 %v1969
    %v2041 = vunpack.c.l.b16 %v1970
    %v2042 = vunpack.c.l.b16 %v1971
    %v2043 = vunpack.c.l.b16 %v1972
    %v2044 = vunpack.c.l.b16 %v1973
    %v2045 = vunpack.c.l.b16 %v1974
    %v2046 = vunpack.c.l.b16 %v1975
    %v2047 = vunpack.c.l.b16 %v1976
    %v2048 = vunpack.c.l.b16 %v1977
    %v2049 = vunpack.c.l.b16 %v1978
    %v2050 = vunpack.c.l.b16 %v1979
    %v2051 = vunpack.c.l.b16 %v1980
    %v2052 = vunpack.c.l.b16 %v1981
    %v2053 = vunpack.c.l.b16 %v1982
    %v2054 = vunpack.c.l.b16 %v1983
    %v2055 = vunpack.c.l.b16 %v1984
    %v2056 = vunpack.c.l.b16 %v1985
    %v2057 = vunpack.c.l.b16 %v1986
    %v2058 = vpack.c.b16 %v2027, %v2026
    %v2059 = vpack.c.b16 %v2029, %v2028
    %v2060 = vpack.c.b16 %v2031, %v2030
    %v2061 = vpack.c.b16 %v2033, %v2032
    %v2062 = vpack.c.b16 %v2035, %v2034
    %v2063 = vpack.c.b16 %v2037, %v2036
    %v2064 = vpack.c.b16 %v2039, %v2038
    %v2065 = vpack.c.b16 %v2041, %v2040
    %v2066 = vpack.c.b16 %v2043, %v2042
    %v2067 = vpack.c.b16 %v2045, %v2044
    %v2068 = vpack.c.b16 %v2047, %v2046
    %v2069 = vpack.c.b16 %v2049, %v2048
    %v2070 = vpack.c.b16 %v2051, %v2050
    %v2071 = vpack.c.b16 %v2053, %v2052
    %v2072 = vpack.c.b16 %v2055, %v2054
    %v2073 = vpack.c.b16 %v2057, %v2056
    %2090 = vmatprep.subr.bf16.mxu0 0
    %2091 = vmatpush1.bf16.msra.mxu0 %v2058
    %2092 = vmatprep.subr.bf16.mxu0 0
    %2093 = vmatpush1.bf16.msra.mxu0 %v2059
    %2094 = vmatprep.subr.bf16.mxu0 0
    %2095 = vmatpush1.bf16.msra.mxu0 %v2060
    %2096 = vmatprep.subr.bf16.mxu0 0
    %2097 = vmatpush1.bf16.msra.mxu0 %v2061
    %2098 = vmatprep.subr.bf16.mxu0 0
    %2099 = vmatpush1.bf16.msra.mxu0 %v2062
    %2100 = vmatprep.subr.bf16.mxu0 0
    %2101 = vmatpush1.bf16.msra.mxu0 %v2063
    %2102 = vmatprep.subr.bf16.mxu0 0
    %2103 = vmatpush1.bf16.msra.mxu0 %v2064
    %2104 = vmatprep.subr.bf16.mxu0 0
    %2105 = vmatpush1.bf16.msra.mxu0 %v2065
    %2106 = vmatprep.subr.bf16.mxu0 0
    %2107 = vmatpush1.bf16.msra.mxu0 %v2066
    %2108 = vmatprep.subr.bf16.mxu0 0
    %2109 = vmatpush1.bf16.msra.mxu0 %v2067
    %2110 = vmatprep.subr.bf16.mxu0 0
    %2111 = vmatpush1.bf16.msra.mxu0 %v2068
    %2112 = vmatprep.subr.bf16.mxu0 0
    %2113 = vmatpush1.bf16.msra.mxu0 %v2069
    %2114 = vmatprep.subr.bf16.mxu0 0
    %2115 = vmatpush1.bf16.msra.mxu0 %v2070
    %2116 = vmatprep.subr.bf16.mxu0 0
    %2117 = vmatpush1.bf16.msra.mxu0 %v2071
    %2118 = vmatprep.subr.bf16.mxu0 0
    %2119 = vmatpush1.bf16.msra.mxu0 %v2072
    %2120 = vmatprep.subr.bf16.mxu0 0
    %2121 = vmatpush1.bf16.msra.mxu0 %v2073
    %2122 = vmatprep.mubr.bf16.mxu0 %v1316
    %2123 = vmatmul.mubr.bf16.gmra.mrb[0].mxu0 %v1137
    %v2124 = vpop.f32.mrb[0].mxu0
    %v2125 = vadd.f32 %v1992, %v2124
    %v2126 = vpop.f32.mrb[0].mxu0
    %v2127 = vpop.f32.mrb[0].mxu0
    %v2128 = vpop.f32.mrb[0].mxu0
    %2129 = vdwg.mxu0
    %v2130 = vtanh.pop %v2125
    %v2131 = vpack.c.bf16 %v2130, %v2130
    %v2132 = vld [vmem:[%s7] sm:$0xf]
    %v2133 = vld [vmem:[%s7 + $0x4] sm:$0xf]
    %v2134 = vld [vmem:[%s7 + $0x8] sm:$0xf]
    %v2135 = vld [vmem:[%s7 + $0xc] sm:$0xf]
    %v2136 = vld [vmem:[%s7 + $0x10] sm:$0xf]
    %v2137 = vld [vmem:[%s7 + $0x14] sm:$0xf]
    %v2138 = vld [vmem:[%s7 + $0x18] sm:$0xf]
    %v2139 = vld [vmem:[%s7 + $0x1c] sm:$0xf]
    %v2140 = vld [vmem:[%s7 + $0x20] sm:$0xf]
    %v2141 = vld [vmem:[%s7 + $0x24] sm:$0xf]
    %v2142 = vld [vmem:[%s7 + $0x28] sm:$0xf]
    %v2143 = vld [vmem:[%s7 + $0x2c] sm:$0xf]
    %v2144 = vld [vmem:[%s7 + $0x30] sm:$0xf]
    %v2145 = vld [vmem:[%s7 + $0x34] sm:$0xf]
    %v2146 = vld [vmem:[%s7 + $0x38] sm:$0xf]
    %v2147 = vld [vmem:[%s7 + $0x3c] sm:$0xf]
    %v2148 = vld [vmem:[%s8] sm:$0x1]
    %v2150 = vlaneseq
    %v2151 = vshrl.u32 %v2150, 7
    %v2152 = vsub.s32 0, %v2151
    %v2153 = vrot.slane %v2148, %v2152
    %v2171 = vunpack.c.l.b16 %v2132
    %v2172 = vunpack.c.l.b16 %v2133
    %v2173 = vunpack.c.l.b16 %v2134
    %v2174 = vunpack.c.l.b16 %v2135
    %v2175 = vunpack.c.l.b16 %v2136
    %v2176 = vunpack.c.l.b16 %v2137
    %v2177 = vunpack.c.l.b16 %v2138
    %v2178 = vunpack.c.l.b16 %v2139
    %v2179 = vunpack.c.l.b16 %v2140
    %v2180 = vunpack.c.l.b16 %v2141
    %v2181 = vunpack.c.l.b16 %v2142
    %v2182 = vunpack.c.l.b16 %v2143
    %v2183 = vunpack.c.l.b16 %v2144
    %v2184 = vunpack.c.l.b16 %v2145
    %v2185 = vunpack.c.l.b16 %v2146
    %v2186 = vunpack.c.l.b16 %v2147
    %v2187 = vpack.c.b16 %v2172, %v2171
    %v2188 = vpack.c.b16 %v2174, %v2173
    %v2189 = vpack.c.b16 %v2176, %v2175
    %v2190 = vpack.c.b16 %v2178, %v2177
    %v2191 = vpack.c.b16 %v2180, %v2179
    %v2192 = vpack.c.b16 %v2182, %v2181
    %v2193 = vpack.c.b16 %v2184, %v2183
    %v2194 = vpack.c.b16 %v2186, %v2185
    %2203 = vmatprep.subr.bf16.mxu0 0
    %2204 = vmatpush1.bf16.msra.mxu0 %v2187
    %2205 = vmatprep.subr.bf16.mxu0 0
    %2206 = vmatpush1.bf16.msra.mxu0 %v2188
    %2207 = vmatprep.subr.bf16.mxu0 0
    %2208 = vmatpush1.bf16.msra.mxu0 %v2189
    %2209 = vmatprep.subr.bf16.mxu0 0
    %2210 = vmatpush1.bf16.msra.mxu0 %v2190
    %2211 = vmatprep.subr.bf16.mxu0 0
    %2212 = vmatpush1.bf16.msra.mxu0 %v2191
    %2213 = vmatprep.subr.bf16.mxu0 0
    %2214 = vmatpush1.bf16.msra.mxu0 %v2192
    %2215 = vmatprep.subr.bf16.mxu0 0
    %2216 = vmatpush1.bf16.msra.mxu0 %v2193
    %2217 = vmatprep.subr.bf16.mxu0 0
    %2218 = vmatpush1.bf16.msra.mxu0 %v2194
    %2219 = vmatprep.subr.bf16.mxu0 0
    %2220 = vmatpush1.bf16.msra.mxu0 0
    %2221 = vmatprep.subr.bf16.mxu0 0
    %2222 = vmatpush1.bf16.msra.mxu0 0
    %2223 = vmatprep.subr.bf16.mxu0 0
    %2224 = vmatpush1.bf16.msra.mxu0 0
    %2225 = vmatprep.subr.bf16.mxu0 0
    %2226 = vmatpush1.bf16.msra.mxu0 0
    %2227 = vmatprep.subr.bf16.mxu0 0
    %2228 = vmatpush1.bf16.msra.mxu0 0
    %2229 = vmatprep.subr.bf16.mxu0 0
    %2230 = vmatpush1.bf16.msra.mxu0 0
    %2231 = vmatprep.subr.bf16.mxu0 0
    %2232 = vmatpush1.bf16.msra.mxu0 0
    %2233 = vmatprep.subr.bf16.mxu0 0
    %2234 = vmatpush1.bf16.msra.mxu0 0
    %2235 = vmatprep.mubr.bf16.mxu0 0
    %2236 = vmatmul.mubr.bf16.gmra.mrb[0].mxu0 %v2131
    %v2237 = vpop.f32.mrb[0].mxu0
    %v2238 = vadd.f32 %v2153, %v2237
    %v2239 = vpop.f32.mrb[0].mxu0
    %v2240 = vpop.f32.mrb[0].mxu0
    %v2241 = vpop.f32.mrb[0].mxu0
    %2242 = vdwg.mxu0
    %v2244 = vcombine.high %v2238, %v2238
    %v2246 = vunpack.c.l.s4 1966171168
    %v2247 = vunpack.c.0.s8 %v2246
    %v2248 = vlaneseq
    %v2249 = vshrl.u32 %v2248, 7
    %v2250 = vsub.s32 %v2247, %v2249
    %v2251 = vrot.slane %v2238, %v2250
    %v2253 = vunpack.c.l.s4 1966171168
    %v2254 = vunpack.c.0.s8 %v2253
    %v2255 = vlaneseq
    %v2256 = vshrl.u32 %v2255, 7
    %v2257 = vsub.s32 %v2254, %v2256
    %v2258 = vrot.slane %v2244, %v2257
    %v2259 = vcombine.high %v2251, %v2251
    %v2260 = vcombine.high %v2258, %v2258
    %v2262 = vunpack.c.l.s4 1966171168
    %v2263 = vunpack.c.0.s8 %v2262
    %v2264 = vlaneseq
    %v2265 = vshrl.u32 %v2264, 7
    %v2266 = vsub.s32 %v2263, %v2265
    %v2267 = vrot.slane %v2251, %v2266
    %v2269 = vunpack.c.l.s4 1966171168
    %v2270 = vunpack.c.0.s8 %v2269
    %v2271 = vlaneseq
    %v2272 = vshrl.u32 %v2271, 7
    %v2273 = vsub.s32 %v2270, %v2272
    %v2274 = vrot.slane %v2258, %v2273
    %v2276 = vunpack.c.l.s4 1966171168
    %v2277 = vunpack.c.0.s8 %v2276
    %v2278 = vlaneseq
    %v2279 = vshrl.u32 %v2278, 7
    %v2280 = vsub.s32 %v2277, %v2279
    %v2281 = vrot.slane %v2259, %v2280
    %v2283 = vunpack.c.l.s4 1966171168
    %v2284 = vunpack.c.0.s8 %v2283
    %v2285 = vlaneseq
    %v2286 = vshrl.u32 %v2285, 7
    %v2287 = vsub.s32 %v2284, %v2286
    %v2288 = vrot.slane %v2260, %v2287
    %v2289 = vcombine.high %v2267, %v2267
    %v2290 = vcombine.high %v2274, %v2274
    %v2291 = vcombine.high %v2281, %v2281
    %v2292 = vcombine.high %v2288, %v2288
    %2301 = vst [vmem:[#allocation8 + $0x1] sm:$0x1] %v2267
    %2302 = vst [vmem:[#allocation8 + $0x9] sm:$0x1] %v2281
    %2303 = vst [vmem:[#allocation8 + $0x11] sm:$0x1] %v2289
    %2304 = vst [vmem:[#allocation8 + $0x19] sm:$0x1] %v2291
    %2305 = vst [vmem:[#allocation8 + $0x21] sm:$0x1] %v2274
    %2306 = vst [vmem:[#allocation8 + $0x29] sm:$0x1] %v2288
    %2307 = vst [vmem:[#allocation8 + $0x31] sm:$0x1] %v2290
    %2308 = vst [vmem:[#allocation8 + $0x39] sm:$0x1] %v2292
    %v2309 = vld [vmem:[#allocation5] sm:$0xf]
    %v2310 = vld [vmem:[#allocation5 + $0x4] sm:$0xf]
    %v2311 = vld [vmem:[#allocation5 + $0x8] sm:$0xf]
    %v2312 = vld [vmem:[#allocation5 + $0xc] sm:$0xf]
    %v2313 = vld [vmem:[#allocation5 + $0x10] sm:$0xf]
    %v2314 = vld [vmem:[#allocation5 + $0x14] sm:$0xf]
    %v2315 = vld [vmem:[#allocation5 + $0x18] sm:$0xf]
    %v2316 = vld [vmem:[#allocation5 + $0x1c] sm:$0xf]
    %v2317 = vld [vmem:[#allocation5 + $0x20] sm:$0xf]
    %v2318 = vld [vmem:[#allocation5 + $0x24] sm:$0xf]
    %v2319 = vld [vmem:[#allocation5 + $0x28] sm:$0xf]
    %v2320 = vld [vmem:[#allocation5 + $0x2c] sm:$0xf]
    %v2321 = vld [vmem:[#allocation5 + $0x30] sm:$0xf]
    %v2322 = vld [vmem:[#allocation5 + $0x34] sm:$0xf]
    %v2323 = vld [vmem:[#allocation5 + $0x38] sm:$0xf]
    %v2324 = vld [vmem:[#allocation5 + $0x3c] sm:$0xf]
    %v2341 = vunpack.c.l.b16 %v2309
    %v2342 = vunpack.c.l.b16 %v2310
    %v2343 = vunpack.c.l.b16 %v2311
    %v2344 = vunpack.c.l.b16 %v2312
    %v2345 = vunpack.c.l.b16 %v2313
    %v2346 = vunpack.c.l.b16 %v2314
    %v2347 = vunpack.c.l.b16 %v2315
    %v2348 = vunpack.c.l.b16 %v2316
    %v2349 = vunpack.c.l.b16 %v2317
    %v2350 = vunpack.c.l.b16 %v2318
    %v2351 = vunpack.c.l.b16 %v2319
    %v2352 = vunpack.c.l.b16 %v2320
    %v2353 = vunpack.c.l.b16 %v2321
    %v2354 = vunpack.c.l.b16 %v2322
    %v2355 = vunpack.c.l.b16 %v2323
    %v2356 = vunpack.c.l.b16 %v2324
    %v2357 = vpack.c.b16 %v2342, %v2341
    %v2358 = vpack.c.b16 %v2344, %v2343
    %v2359 = vpack.c.b16 %v2346, %v2345
    %v2360 = vpack.c.b16 %v2348, %v2347
    %v2361 = vpack.c.b16 %v2350, %v2349
    %v2362 = vpack.c.b16 %v2352, %v2351
    %v2363 = vpack.c.b16 %v2354, %v2353
    %v2364 = vpack.c.b16 %v2356, %v2355
    %2373 = vmatprep.subr.bf16.mxu0 0
    %2374 = vmatpush1.bf16.msra.mxu0 %v2357
    %2375 = vmatprep.subr.bf16.mxu0 0
    %2376 = vmatpush1.bf16.msra.mxu0 %v2358
    %2377 = vmatprep.subr.bf16.mxu0 0
    %2378 = vmatpush1.bf16.msra.mxu0 %v2359
    %2379 = vmatprep.subr.bf16.mxu0 0
    %2380 = vmatpush1.bf16.msra.mxu0 %v2360
    %2381 = vmatprep.subr.bf16.mxu0 0
    %2382 = vmatpush1.bf16.msra.mxu0 %v2361
    %2383 = vmatprep.subr.bf16.mxu0 0
    %2384 = vmatpush1.bf16.msra.mxu0 %v2362
    %2385 = vmatprep.subr.bf16.mxu0 0
    %2386 = vmatpush1.bf16.msra.mxu0 %v2363
    %2387 = vmatprep.subr.bf16.mxu0 0
    %2388 = vmatpush1.bf16.msra.mxu0 %v2364
    %2389 = vmatprep.subr.bf16.mxu0 0
    %2390 = vmatpush1.bf16.msra.mxu0 0
    %2391 = vmatprep.subr.bf16.mxu0 0
    %2392 = vmatpush1.bf16.msra.mxu0 0
    %2393 = vmatprep.subr.bf16.mxu0 0
    %2394 = vmatpush1.bf16.msra.mxu0 0
    %2395 = vmatprep.subr.bf16.mxu0 0
    %2396 = vmatpush1.bf16.msra.mxu0 0
    %2397 = vmatprep.subr.bf16.mxu0 0
    %2398 = vmatpush1.bf16.msra.mxu0 0
    %2399 = vmatprep.subr.bf16.mxu0 0
    %2400 = vmatpush1.bf16.msra.mxu0 0
    %2401 = vmatprep.subr.bf16.mxu0 0
    %2402 = vmatpush1.bf16.msra.mxu0 0
    %2403 = vmatprep.subr.bf16.mxu0 0
    %2404 = vmatpush1.bf16.msra.mxu0 0
    %2405 = vmatprep.mubr.bf16.mxu0 0
    %2406 = vmatmul.mubr.bf16.gmra.mrb[0].mxu0 %v1600
    %v2407 = vpop.f32.mrb[0].mxu0
    %v2408 = vadd.f32 0.0, %v2407
    %v2409 = vpop.f32.mrb[0].mxu0
    %v2410 = vpop.f32.mrb[0].mxu0
    %v2411 = vpop.f32.mrb[0].mxu0
    %2412 = vdwg.mxu0
    %v2413 = vadd.f32 %v397, %v2408
    %v2414 = vtanh.pop %v2413
    %v2415 = vpack.c.bf16 %v2414, %v2414
    %v2416 = vld [vmem:[#allocation7] sm:$0xf]
    %v2417 = vld [vmem:[#allocation7 + $0x4] sm:$0xf]
    %v2418 = vld [vmem:[#allocation7 + $0x8] sm:$0xf]
    %v2419 = vld [vmem:[#allocation7 + $0xc] sm:$0xf]
    %v2420 = vld [vmem:[#allocation7 + $0x10] sm:$0xf]
    %v2421 = vld [vmem:[#allocation7 + $0x14] sm:$0xf]
    %v2422 = vld [vmem:[#allocation7 + $0x18] sm:$0xf]
    %v2423 = vld [vmem:[#allocation7 + $0x1c] sm:$0xf]
    %v2424 = vld [vmem:[#allocation7 + $0x20] sm:$0xf]
    %v2425 = vld [vmem:[#allocation7 + $0x24] sm:$0xf]
    %v2426 = vld [vmem:[#allocation7 + $0x28] sm:$0xf]
    %v2427 = vld [vmem:[#allocation7 + $0x2c] sm:$0xf]
    %v2428 = vld [vmem:[#allocation7 + $0x30] sm:$0xf]
    %v2429 = vld [vmem:[#allocation7 + $0x34] sm:$0xf]
    %v2430 = vld [vmem:[#allocation7 + $0x38] sm:$0xf]
    %v2431 = vld [vmem:[#allocation7 + $0x3c] sm:$0xf]
    %v2432 = vld [vmem:[#allocation7 + $0x40] sm:$0xf]
    %v2433 = vld [vmem:[#allocation7 + $0x44] sm:$0xf]
    %v2434 = vld [vmem:[#allocation7 + $0x48] sm:$0xf]
    %v2435 = vld [vmem:[#allocation7 + $0x4c] sm:$0xf]
    %v2436 = vld [vmem:[#allocation7 + $0x50] sm:$0xf]
    %v2437 = vld [vmem:[#allocation7 + $0x54] sm:$0xf]
    %v2438 = vld [vmem:[#allocation7 + $0x58] sm:$0xf]
    %v2439 = vld [vmem:[#allocation7 + $0x5c] sm:$0xf]
    %v2440 = vld [vmem:[#allocation7 + $0x60] sm:$0xf]
    %v2441 = vld [vmem:[#allocation7 + $0x64] sm:$0xf]
    %v2442 = vld [vmem:[#allocation7 + $0x68] sm:$0xf]
    %v2443 = vld [vmem:[#allocation7 + $0x6c] sm:$0xf]
    %v2444 = vld [vmem:[#allocation7 + $0x70] sm:$0xf]
    %v2445 = vld [vmem:[#allocation7 + $0x74] sm:$0xf]
    %v2446 = vld [vmem:[#allocation7 + $0x78] sm:$0xf]
    %v2447 = vld [vmem:[#allocation7 + $0x7c] sm:$0xf]
    %v2448 = vld [vmem:[%s601] sm:$0x1]
    %v2450 = vlaneseq
    %v2451 = vshrl.u32 %v2450, 7
    %v2452 = vsub.s32 0, %v2451
    %v2453 = vrot.slane %v2448, %v2452
    %v2487 = vunpack.c.l.b16 %v2416
    %v2488 = vunpack.c.l.b16 %v2417
    %v2489 = vunpack.c.l.b16 %v2418
    %v2490 = vunpack.c.l.b16 %v2419
    %v2491 = vunpack.c.l.b16 %v2420
    %v2492 = vunpack.c.l.b16 %v2421
    %v2493 = vunpack.c.l.b16 %v2422
    %v2494 = vunpack.c.l.b16 %v2423
    %v2495 = vunpack.c.l.b16 %v2424
    %v2496 = vunpack.c.l.b16 %v2425
    %v2497 = vunpack.c.l.b16 %v2426
    %v2498 = vunpack.c.l.b16 %v2427
    %v2499 = vunpack.c.l.b16 %v2428
    %v2500 = vunpack.c.l.b16 %v2429
    %v2501 = vunpack.c.l.b16 %v2430
    %v2502 = vunpack.c.l.b16 %v2431
    %v2503 = vunpack.c.l.b16 %v2432
    %v2504 = vunpack.c.l.b16 %v2433
    %v2505 = vunpack.c.l.b16 %v2434
    %v2506 = vunpack.c.l.b16 %v2435
    %v2507 = vunpack.c.l.b16 %v2436
    %v2508 = vunpack.c.l.b16 %v2437
    %v2509 = vunpack.c.l.b16 %v2438
    %v2510 = vunpack.c.l.b16 %v2439
    %v2511 = vunpack.c.l.b16 %v2440
    %v2512 = vunpack.c.l.b16 %v2441
    %v2513 = vunpack.c.l.b16 %v2442
    %v2514 = vunpack.c.l.b16 %v2443
    %v2515 = vunpack.c.l.b16 %v2444
    %v2516 = vunpack.c.l.b16 %v2445
    %v2517 = vunpack.c.l.b16 %v2446
    %v2518 = vunpack.c.l.b16 %v2447
    %v2519 = vpack.c.b16 %v2488, %v2487
    %v2520 = vpack.c.b16 %v2490, %v2489
    %v2521 = vpack.c.b16 %v2492, %v2491
    %v2522 = vpack.c.b16 %v2494, %v2493
    %v2523 = vpack.c.b16 %v2496, %v2495
    %v2524 = vpack.c.b16 %v2498, %v2497
    %v2525 = vpack.c.b16 %v2500, %v2499
    %v2526 = vpack.c.b16 %v2502, %v2501
    %v2527 = vpack.c.b16 %v2504, %v2503
    %v2528 = vpack.c.b16 %v2506, %v2505
    %v2529 = vpack.c.b16 %v2508, %v2507
    %v2530 = vpack.c.b16 %v2510, %v2509
    %v2531 = vpack.c.b16 %v2512, %v2511
    %v2532 = vpack.c.b16 %v2514, %v2513
    %v2533 = vpack.c.b16 %v2516, %v2515
    %v2534 = vpack.c.b16 %v2518, %v2517
    %2551 = vmatprep.subr.bf16.mxu0 0
    %2552 = vmatpush1.bf16.msra.mxu0 %v2519
    %2553 = vmatprep.subr.bf16.mxu0 0
    %2554 = vmatpush1.bf16.msra.mxu0 %v2520
    %2555 = vmatprep.subr.bf16.mxu0 0
    %2556 = vmatpush1.bf16.msra.mxu0 %v2521
    %2557 = vmatprep.subr.bf16.mxu0 0
    %2558 = vmatpush1.bf16.msra.mxu0 %v2522
    %2559 = vmatprep.subr.bf16.mxu0 0
    %2560 = vmatpush1.bf16.msra.mxu0 %v2523
    %2561 = vmatprep.subr.bf16.mxu0 0
    %2562 = vmatpush1.bf16.msra.mxu0 %v2524
    %2563 = vmatprep.subr.bf16.mxu0 0
    %2564 = vmatpush1.bf16.msra.mxu0 %v2525
    %2565 = vmatprep.subr.bf16.mxu0 0
    %2566 = vmatpush1.bf16.msra.mxu0 %v2526
    %2567 = vmatprep.subr.bf16.mxu0 0
    %2568 = vmatpush1.bf16.msra.mxu0 %v2527
    %2569 = vmatprep.subr.bf16.mxu0 0
    %2570 = vmatpush1.bf16.msra.mxu0 %v2528
    %2571 = vmatprep.subr.bf16.mxu0 0
    %2572 = vmatpush1.bf16.msra.mxu0 %v2529
    %2573 = vmatprep.subr.bf16.mxu0 0
    %2574 = vmatpush1.bf16.msra.mxu0 %v2530
    %2575 = vmatprep.subr.bf16.mxu0 0
    %2576 = vmatpush1.bf16.msra.mxu0 %v2531
    %2577 = vmatprep.subr.bf16.mxu0 0
    %2578 = vmatpush1.bf16.msra.mxu0 %v2532
    %2579 = vmatprep.subr.bf16.mxu0 0
    %2580 = vmatpush1.bf16.msra.mxu0 %v2533
    %2581 = vmatprep.subr.bf16.mxu0 0
    %2582 = vmatpush1.bf16.msra.mxu0 %v2534
    %2583 = vmatprep.mubr.bf16.mxu0 %v1777
    %2584 = vmatmul.mubr.bf16.gmra.mrb[0].mxu0 %v1600
    %v2585 = vpop.f32.mrb[0].mxu0
    %v2586 = vadd.f32 %v2453, %v2585
    %v2587 = vpop.f32.mrb[0].mxu0
    %v2588 = vpop.f32.mrb[0].mxu0
    %v2589 = vpop.f32.mrb[0].mxu0
    %2590 = vdwg.mxu0
    %v2591 = vtanh.pop %v2586
    %v2592 = vpack.c.bf16 %v2591, %v2591
    %v2593 = vld [vmem:[%s832] sm:$0xf]
    %v2594 = vld [vmem:[%s832 + $0x4] sm:$0xf]
    %v2595 = vld [vmem:[%s832 + $0x8] sm:$0xf]
    %v2596 = vld [vmem:[%s832 + $0xc] sm:$0xf]
    %v2597 = vld [vmem:[%s832 + $0x10] sm:$0xf]
    %v2598 = vld [vmem:[%s832 + $0x14] sm:$0xf]
    %v2599 = vld [vmem:[%s832 + $0x18] sm:$0xf]
    %v2600 = vld [vmem:[%s832 + $0x1c] sm:$0xf]
    %v2601 = vld [vmem:[%s832 + $0x20] sm:$0xf]
    %v2602 = vld [vmem:[%s832 + $0x24] sm:$0xf]
    %v2603 = vld [vmem:[%s832 + $0x28] sm:$0xf]
    %v2604 = vld [vmem:[%s832 + $0x2c] sm:$0xf]
    %v2605 = vld [vmem:[%s832 + $0x30] sm:$0xf]
    %v2606 = vld [vmem:[%s832 + $0x34] sm:$0xf]
    %v2607 = vld [vmem:[%s832 + $0x38] sm:$0xf]
    %v2608 = vld [vmem:[%s832 + $0x3c] sm:$0xf]
    %v2609 = vld [vmem:[%s832 + $0x40] sm:$0xf]
    %v2610 = vld [vmem:[%s832 + $0x44] sm:$0xf]
    %v2611 = vld [vmem:[%s832 + $0x48] sm:$0xf]
    %v2612 = vld [vmem:[%s832 + $0x4c] sm:$0xf]
    %v2613 = vld [vmem:[%s832 + $0x50] sm:$0xf]
    %v2614 = vld [vmem:[%s832 + $0x54] sm:$0xf]
    %v2615 = vld [vmem:[%s832 + $0x58] sm:$0xf]
    %v2616 = vld [vmem:[%s832 + $0x5c] sm:$0xf]
    %v2617 = vld [vmem:[%s832 + $0x60] sm:$0xf]
    %v2618 = vld [vmem:[%s832 + $0x64] sm:$0xf]
    %v2619 = vld [vmem:[%s832 + $0x68] sm:$0xf]
    %v2620 = vld [vmem:[%s832 + $0x6c] sm:$0xf]
    %v2621 = vld [vmem:[%s832 + $0x70] sm:$0xf]
    %v2622 = vld [vmem:[%s832 + $0x74] sm:$0xf]
    %v2623 = vld [vmem:[%s832 + $0x78] sm:$0xf]
    %v2624 = vld [vmem:[%s832 + $0x7c] sm:$0xf]
    %v2625 = vld [vmem:[%s865] sm:$0x1]
    %v2627 = vlaneseq
    %v2628 = vshrl.u32 %v2627, 7
    %v2629 = vsub.s32 0, %v2628
    %v2630 = vrot.slane %v2625, %v2629
    %v2664 = vunpack.c.l.b16 %v2593
    %v2665 = vunpack.c.l.b16 %v2594
    %v2666 = vunpack.c.l.b16 %v2595
    %v2667 = vunpack.c.l.b16 %v2596
    %v2668 = vunpack.c.l.b16 %v2597
    %v2669 = vunpack.c.l.b16 %v2598
    %v2670 = vunpack.c.l.b16 %v2599
    %v2671 = vunpack.c.l.b16 %v2600
    %v2672 = vunpack.c.l.b16 %v2601
    %v2673 = vunpack.c.l.b16 %v2602
    %v2674 = vunpack.c.l.b16 %v2603
    %v2675 = vunpack.c.l.b16 %v2604
    %v2676 = vunpack.c.l.b16 %v2605
    %v2677 = vunpack.c.l.b16 %v2606
    %v2678 = vunpack.c.l.b16 %v2607
    %v2679 = vunpack.c.l.b16 %v2608
    %v2680 = vunpack.c.l.b16 %v2609
    %v2681 = vunpack.c.l.b16 %v2610
    %v2682 = vunpack.c.l.b16 %v2611
    %v2683 = vunpack.c.l.b16 %v2612
    %v2684 = vunpack.c.l.b16 %v2613
    %v2685 = vunpack.c.l.b16 %v2614
    %v2686 = vunpack.c.l.b16 %v2615
    %v2687 = vunpack.c.l.b16 %v2616
    %v2688 = vunpack.c.l.b16 %v2617
    %v2689 = vunpack.c.l.b16 %v2618
    %v2690 = vunpack.c.l.b16 %v2619
    %v2691 = vunpack.c.l.b16 %v2620
    %v2692 = vunpack.c.l.b16 %v2621
    %v2693 = vunpack.c.l.b16 %v2622
    %v2694 = vunpack.c.l.b16 %v2623
    %v2695 = vunpack.c.l.b16 %v2624
    %v2696 = vpack.c.b16 %v2665, %v2664
    %v2697 = vpack.c.b16 %v2667, %v2666
    %v2698 = vpack.c.b16 %v2669, %v2668
    %v2699 = vpack.c.b16 %v2671, %v2670
    %v2700 = vpack.c.b16 %v2673, %v2672
    %v2701 = vpack.c.b16 %v2675, %v2674
    %v2702 = vpack.c.b16 %v2677, %v2676
    %v2703 = vpack.c.b16 %v2679, %v2678
    %v2704 = vpack.c.b16 %v2681, %v2680
    %v2705 = vpack.c.b16 %v2683, %v2682
    %v2706 = vpack.c.b16 %v2685, %v2684
    %v2707 = vpack.c.b16 %v2687, %v2686
    %v2708 = vpack.c.b16 %v2689, %v2688
    %v2709 = vpack.c.b16 %v2691, %v2690
    %v2710 = vpack.c.b16 %v2693, %v2692
    %v2711 = vpack.c.b16 %v2695, %v2694
    %2728 = vmatprep.subr.bf16.mxu0 0
    %2729 = vmatpush1.bf16.msra.mxu0 %v2696
    %2730 = vmatprep.subr.bf16.mxu0 0
    %2731 = vmatpush1.bf16.msra.mxu0 %v2697
    %2732 = vmatprep.subr.bf16.mxu0 0
    %2733 = vmatpush1.bf16.msra.mxu0 %v2698
    %2734 = vmatprep.subr.bf16.mxu0 0
    %2735 = vmatpush1.bf16.msra.mxu0 %v2699
    %2736 = vmatprep.subr.bf16.mxu0 0
    %2737 = vmatpush1.bf16.msra.mxu0 %v2700
    %2738 = vmatprep.subr.bf16.mxu0 0
    %2739 = vmatpush1.bf16.msra.mxu0 %v2701
    %2740 = vmatprep.subr.bf16.mxu0 0
    %2741 = vmatpush1.bf16.msra.mxu0 %v2702
    %2742 = vmatprep.subr.bf16.mxu0 0
    %2743 = vmatpush1.bf16.msra.mxu0 %v2703
    %2744 = vmatprep.subr.bf16.mxu0 0
    %2745 = vmatpush1.bf16.msra.mxu0 %v2704
    %2746 = vmatprep.subr.bf16.mxu0 0
    %2747 = vmatpush1.bf16.msra.mxu0 %v2705
    %2748 = vmatprep.subr.bf16.mxu0 0
    %2749 = vmatpush1.bf16.msra.mxu0 %v2706
    %2750 = vmatprep.subr.bf16.mxu0 0
    %2751 = vmatpush1.bf16.msra.mxu0 %v2707
    %2752 = vmatprep.subr.bf16.mxu0 0
    %2753 = vmatpush1.bf16.msra.mxu0 %v2708
    %2754 = vmatprep.subr.bf16.mxu0 0
    %2755 = vmatpush1.bf16.msra.mxu0 %v2709
    %2756 = vmatprep.subr.bf16.mxu0 0
    %2757 = vmatpush1.bf16.msra.mxu0 %v2710
    %2758 = vmatprep.subr.bf16.mxu0 0
    %2759 = vmatpush1.bf16.msra.mxu0 %v2711
    %2760 = vmatprep.mubr.bf16.mxu0 %v1954
    %2761 = vmatmul.mubr.bf16.gmra.mrb[0].mxu0 %v1777
    %v2762 = vpop.f32.mrb[0].mxu0
    %v2763 = vadd.f32 %v2630, %v2762
    %v2764 = vpop.f32.mrb[0].mxu0
    %v2765 = vpop.f32.mrb[0].mxu0
    %v2766 = vpop.f32.mrb[0].mxu0
    %2767 = vdwg.mxu0
    %v2768 = vtanh.pop %v2763
    %v2769 = vpack.c.bf16 %v2768, %v2768
    %v2770 = vld [vmem:[%s1138] sm:$0xf]
    %v2771 = vld [vmem:[%s1138 + $0x4] sm:$0xf]
    %v2772 = vld [vmem:[%s1138 + $0x8] sm:$0xf]
    %v2773 = vld [vmem:[%s1138 + $0xc] sm:$0xf]
    %v2774 = vld [vmem:[%s1138 + $0x10] sm:$0xf]
    %v2775 = vld [vmem:[%s1138 + $0x14] sm:$0xf]
    %v2776 = vld [vmem:[%s1138 + $0x18] sm:$0xf]
    %v2777 = vld [vmem:[%s1138 + $0x1c] sm:$0xf]
    %v2778 = vld [vmem:[%s1138 + $0x20] sm:$0xf]
    %v2779 = vld [vmem:[%s1138 + $0x24] sm:$0xf]
    %v2780 = vld [vmem:[%s1138 + $0x28] sm:$0xf]
    %v2781 = vld [vmem:[%s1138 + $0x2c] sm:$0xf]
    %v2782 = vld [vmem:[%s1138 + $0x30] sm:$0xf]
    %v2783 = vld [vmem:[%s1138 + $0x34] sm:$0xf]
    %v2784 = vld [vmem:[%s1138 + $0x38] sm:$0xf]
    %v2785 = vld [vmem:[%s1138 + $0x3c] sm:$0xf]
    %v2786 = vld [vmem:[%s1138 + $0x40] sm:$0xf]
    %v2787 = vld [vmem:[%s1138 + $0x44] sm:$0xf]
    %v2788 = vld [vmem:[%s1138 + $0x48] sm:$0xf]
    %v2789 = vld [vmem:[%s1138 + $0x4c] sm:$0xf]
    %v2790 = vld [vmem:[%s1138 + $0x50] sm:$0xf]
    %v2791 = vld [vmem:[%s1138 + $0x54] sm:$0xf]
    %v2792 = vld [vmem:[%s1138 + $0x58] sm:$0xf]
    %v2793 = vld [vmem:[%s1138 + $0x5c] sm:$0xf]
    %v2794 = vld [vmem:[%s1138 + $0x60] sm:$0xf]
    %v2795 = vld [vmem:[%s1138 + $0x64] sm:$0xf]
    %v2796 = vld [vmem:[%s1138 + $0x68] sm:$0xf]
    %v2797 = vld [vmem:[%s1138 + $0x6c] sm:$0xf]
    %v2798 = vld [vmem:[%s1138 + $0x70] sm:$0xf]
    %v2799 = vld [vmem:[%s1138 + $0x74] sm:$0xf]
    %v2800 = vld [vmem:[%s1138 + $0x78] sm:$0xf]
    %v2801 = vld [vmem:[%s1138 + $0x7c] sm:$0xf]
    %v2802 = vld [vmem:[%s1171] sm:$0x1]
    %v2804 = vlaneseq
    %v2805 = vshrl.u32 %v2804, 7
    %v2806 = vsub.s32 0, %v2805
    %v2807 = vrot.slane %v2802, %v2806
    %v2841 = vunpack.c.l.b16 %v2770
    %v2842 = vunpack.c.l.b16 %v2771
    %v2843 = vunpack.c.l.b16 %v2772
    %v2844 = vunpack.c.l.b16 %v2773
    %v2845 = vunpack.c.l.b16 %v2774
    %v2846 = vunpack.c.l.b16 %v2775
    %v2847 = vunpack.c.l.b16 %v2776
    %v2848 = vunpack.c.l.b16 %v2777
    %v2849 = vunpack.c.l.b16 %v2778
    %v2850 = vunpack.c.l.b16 %v2779
    %v2851 = vunpack.c.l.b16 %v2780
    %v2852 = vunpack.c.l.b16 %v2781
    %v2853 = vunpack.c.l.b16 %v2782
    %v2854 = vunpack.c.l.b16 %v2783
    %v2855 = vunpack.c.l.b16 %v2784
    %v2856 = vunpack.c.l.b16 %v2785
    %v2857 = vunpack.c.l.b16 %v2786
    %v2858 = vunpack.c.l.b16 %v2787
    %v2859 = vunpack.c.l.b16 %v2788
    %v2860 = vunpack.c.l.b16 %v2789
    %v2861 = vunpack.c.l.b16 %v2790
    %v2862 = vunpack.c.l.b16 %v2791
    %v2863 = vunpack.c.l.b16 %v2792
    %v2864 = vunpack.c.l.b16 %v2793
    %v2865 = vunpack.c.l.b16 %v2794
    %v2866 = vunpack.c.l.b16 %v2795
    %v2867 = vunpack.c.l.b16 %v2796
    %v2868 = vunpack.c.l.b16 %v2797
    %v2869 = vunpack.c.l.b16 %v2798
    %v2870 = vunpack.c.l.b16 %v2799
    %v2871 = vunpack.c.l.b16 %v2800
    %v2872 = vunpack.c.l.b16 %v2801
    %v2873 = vpack.c.b16 %v2842, %v2841
    %v2874 = vpack.c.b16 %v2844, %v2843
    %v2875 = vpack.c.b16 %v2846, %v2845
    %v2876 = vpack.c.b16 %v2848, %v2847
    %v2877 = vpack.c.b16 %v2850, %v2849
    %v2878 = vpack.c.b16 %v2852, %v2851
    %v2879 = vpack.c.b16 %v2854, %v2853
    %v2880 = vpack.c.b16 %v2856, %v2855
    %v2881 = vpack.c.b16 %v2858, %v2857
    %v2882 = vpack.c.b16 %v2860, %v2859
    %v2883 = vpack.c.b16 %v2862, %v2861
    %v2884 = vpack.c.b16 %v2864, %v2863
    %v2885 = vpack.c.b16 %v2866, %v2865
    %v2886 = vpack.c.b16 %v2868, %v2867
    %v2887 = vpack.c.b16 %v2870, %v2869
    %v2888 = vpack.c.b16 %v2872, %v2871
    %2905 = vmatprep.subr.bf16.mxu0 0
    %2906 = vmatpush1.bf16.msra.mxu0 %v2873
    %2907 = vmatprep.subr.bf16.mxu0 0
    %2908 = vmatpush1.bf16.msra.mxu0 %v2874
    %2909 = vmatprep.subr.bf16.mxu0 0
    %2910 = vmatpush1.bf16.msra.mxu0 %v2875
    %2911 = vmatprep.subr.bf16.mxu0 0
    %2912 = vmatpush1.bf16.msra.mxu0 %v2876
    %2913 = vmatprep.subr.bf16.mxu0 0
    %2914 = vmatpush1.bf16.msra.mxu0 %v2877
    %2915 = vmatprep.subr.bf16.mxu0 0
    %2916 = vmatpush1.bf16.msra.mxu0 %v2878
    %2917 = vmatprep.subr.bf16.mxu0 0
    %2918 = vmatpush1.bf16.msra.mxu0 %v2879
    %2919 = vmatprep.subr.bf16.mxu0 0
    %2920 = vmatpush1.bf16.msra.mxu0 %v2880
    %2921 = vmatprep.subr.bf16.mxu0 0
    %2922 = vmatpush1.bf16.msra.mxu0 %v2881
    %2923 = vmatprep.subr.bf16.mxu0 0
    %2924 = vmatpush1.bf16.msra.mxu0 %v2882
    %2925 = vmatprep.subr.bf16.mxu0 0
    %2926 = vmatpush1.bf16.msra.mxu0 %v2883
    %2927 = vmatprep.subr.bf16.mxu0 0
    %2928 = vmatpush1.bf16.msra.mxu0 %v2884
    %2929 = vmatprep.subr.bf16.mxu0 0
    %2930 = vmatpush1.bf16.msra.mxu0 %v2885
    %2931 = vmatprep.subr.bf16.mxu0 0
    %2932 = vmatpush1.bf16.msra.mxu0 %v2886
    %2933 = vmatprep.subr.bf16.mxu0 0
    %2934 = vmatpush1.bf16.msra.mxu0 %v2887
    %2935 = vmatprep.subr.bf16.mxu0 0
    %2936 = vmatpush1.bf16.msra.mxu0 %v2888
    %2937 = vmatprep.mubr.bf16.mxu0 %v2131
    %2938 = vmatmul.mubr.bf16.gmra.mrb[0].mxu0 %v1954
    %v2939 = vpop.f32.mrb[0].mxu0
    %v2940 = vadd.f32 %v2807, %v2939
    %v2941 = vpop.f32.mrb[0].mxu0
    %v2942 = vpop.f32.mrb[0].mxu0
    %v2943 = vpop.f32.mrb[0].mxu0
    %2944 = vdwg.mxu0
    %v2945 = vtanh.pop %v2940
    %v2946 = vpack.c.bf16 %v2945, %v2945
    %v2947 = vld [vmem:[%s7] sm:$0xf]
    %v2948 = vld [vmem:[%s7 + $0x4] sm:$0xf]
    %v2949 = vld [vmem:[%s7 + $0x8] sm:$0xf]
    %v2950 = vld [vmem:[%s7 + $0xc] sm:$0xf]
    %v2951 = vld [vmem:[%s7 + $0x10] sm:$0xf]
    %v2952 = vld [vmem:[%s7 + $0x14] sm:$0xf]
    %v2953 = vld [vmem:[%s7 + $0x18] sm:$0xf]
    %v2954 = vld [vmem:[%s7 + $0x1c] sm:$0xf]
    %v2955 = vld [vmem:[%s7 + $0x20] sm:$0xf]
    %v2956 = vld [vmem:[%s7 + $0x24] sm:$0xf]
    %v2957 = vld [vmem:[%s7 + $0x28] sm:$0xf]
    %v2958 = vld [vmem:[%s7 + $0x2c] sm:$0xf]
    %v2959 = vld [vmem:[%s7 + $0x30] sm:$0xf]
    %v2960 = vld [vmem:[%s7 + $0x34] sm:$0xf]
    %v2961 = vld [vmem:[%s7 + $0x38] sm:$0xf]
    %v2962 = vld [vmem:[%s7 + $0x3c] sm:$0xf]
    %v2963 = vld [vmem:[%s8] sm:$0x1]
    %v2965 = vlaneseq
    %v2966 = vshrl.u32 %v2965, 7
    %v2967 = vsub.s32 0, %v2966
    %v2968 = vrot.slane %v2963, %v2967
    %v2986 = vunpack.c.l.b16 %v2947
    %v2987 = vunpack.c.l.b16 %v2948
    %v2988 = vunpack.c.l.b16 %v2949
    %v2989 = vunpack.c.l.b16 %v2950
    %v2990 = vunpack.c.l.b16 %v2951
    %v2991 = vunpack.c.l.b16 %v2952
    %v2992 = vunpack.c.l.b16 %v2953
    %v2993 = vunpack.c.l.b16 %v2954
    %v2994 = vunpack.c.l.b16 %v2955
    %v2995 = vunpack.c.l.b16 %v2956
    %v2996 = vunpack.c.l.b16 %v2957
    %v2997 = vunpack.c.l.b16 %v2958
    %v2998 = vunpack.c.l.b16 %v2959
    %v2999 = vunpack.c.l.b16 %v2960
    %v3000 = vunpack.c.l.b16 %v2961
    %v3001 = vunpack.c.l.b16 %v2962
    %v3002 = vpack.c.b16 %v2987, %v2986
    %v3003 = vpack.c.b16 %v2989, %v2988
    %v3004 = vpack.c.b16 %v2991, %v2990
    %v3005 = vpack.c.b16 %v2993, %v2992
    %v3006 = vpack.c.b16 %v2995, %v2994
    %v3007 = vpack.c.b16 %v2997, %v2996
    %v3008 = vpack.c.b16 %v2999, %v2998
    %v3009 = vpack.c.b16 %v3001, %v3000
    %3018 = vmatprep.subr.bf16.mxu0 0
    %3019 = vmatpush1.bf16.msra.mxu0 %v3002
    %3020 = vmatprep.subr.bf16.mxu0 0
    %3021 = vmatpush1.bf16.msra.mxu0 %v3003
    %3022 = vmatprep.subr.bf16.mxu0 0
    %3023 = vmatpush1.bf16.msra.mxu0 %v3004
    %3024 = vmatprep.subr.bf16.mxu0 0
    %3025 = vmatpush1.bf16.msra.mxu0 %v3005
    %3026 = vmatprep.subr.bf16.mxu0 0
    %3027 = vmatpush1.bf16.msra.mxu0 %v3006
    %3028 = vmatprep.subr.bf16.mxu0 0
    %3029 = vmatpush1.bf16.msra.mxu0 %v3007
    %3030 = vmatprep.subr.bf16.mxu0 0
    %3031 = vmatpush1.bf16.msra.mxu0 %v3008
    %3032 = vmatprep.subr.bf16.mxu0 0
    %3033 = vmatpush1.bf16.msra.mxu0 %v3009
    %3034 = vmatprep.subr.bf16.mxu0 0
    %3035 = vmatpush1.bf16.msra.mxu0 0
    %3036 = vmatprep.subr.bf16.mxu0 0
    %3037 = vmatpush1.bf16.msra.mxu0 0
    %3038 = vmatprep.subr.bf16.mxu0 0
    %3039 = vmatpush1.bf16.msra.mxu0 0
    %3040 = vmatprep.subr.bf16.mxu0 0
    %3041 = vmatpush1.bf16.msra.mxu0 0
    %3042 = vmatprep.subr.bf16.mxu0 0
    %3043 = vmatpush1.bf16.msra.mxu0 0
    %3044 = vmatprep.subr.bf16.mxu0 0
    %3045 = vmatpush1.bf16.msra.mxu0 0
    %3046 = vmatprep.subr.bf16.mxu0 0
    %3047 = vmatpush1.bf16.msra.mxu0 0
    %3048 = vmatprep.subr.bf16.mxu0 0
    %3049 = vmatpush1.bf16.msra.mxu0 0
    %3050 = vmatprep.mubr.bf16.mxu0 0
    %3051 = vmatmul.mubr.bf16.gmra.mrb[0].mxu0 %v2946
    %v3052 = vpop.f32.mrb[0].mxu0
    %v3053 = vadd.f32 %v2968, %v3052
    %v3054 = vpop.f32.mrb[0].mxu0
    %v3055 = vpop.f32.mrb[0].mxu0
    %v3056 = vpop.f32.mrb[0].mxu0
    %3057 = vdwg.mxu0
    %v3059 = vcombine.high %v3053, %v3053
    %v3061 = vunpack.c.l.s4 1966171168
    %v3062 = vunpack.c.0.s8 %v3061
    %v3063 = vlaneseq
    %v3064 = vshrl.u32 %v3063, 7
    %v3065 = vsub.s32 %v3062, %v3064
    %v3066 = vrot.slane %v3053, %v3065
    %v3068 = vunpack.c.l.s4 1966171168
    %v3069 = vunpack.c.0.s8 %v3068
    %v3070 = vlaneseq
    %v3071 = vshrl.u32 %v3070, 7
    %v3072 = vsub.s32 %v3069, %v3071
    %v3073 = vrot.slane %v3059, %v3072
    %v3074 = vcombine.high %v3066, %v3066
    %v3075 = vcombine.high %v3073, %v3073
    %v3077 = vunpack.c.l.s4 1966171168
    %v3078 = vunpack.c.0.s8 %v3077
    %v3079 = vlaneseq
    %v3080 = vshrl.u32 %v3079, 7
    %v3081 = vsub.s32 %v3078, %v3080
    %v3082 = vrot.slane %v3066, %v3081
    %v3084 = vunpack.c.l.s4 1966171168
    %v3085 = vunpack.c.0.s8 %v3084
    %v3086 = vlaneseq
    %v3087 = vshrl.u32 %v3086, 7
    %v3088 = vsub.s32 %v3085, %v3087
    %v3089 = vrot.slane %v3073, %v3088
    %v3091 = vunpack.c.l.s4 1966171168
    %v3092 = vunpack.c.0.s8 %v3091
    %v3093 = vlaneseq
    %v3094 = vshrl.u32 %v3093, 7
    %v3095 = vsub.s32 %v3092, %v3094
    %v3096 = vrot.slane %v3074, %v3095
    %v3098 = vunpack.c.l.s4 1966171168
    %v3099 = vunpack.c.0.s8 %v3098
    %v3100 = vlaneseq
    %v3101 = vshrl.u32 %v3100, 7
    %v3102 = vsub.s32 %v3099, %v3101
    %v3103 = vrot.slane %v3075, %v3102
    %v3104 = vcombine.high %v3082, %v3082
    %v3105 = vcombine.high %v3089, %v3089
    %v3106 = vcombine.high %v3096, %v3096
    %v3107 = vcombine.high %v3103, %v3103
    %3116 = vst [vmem:[#allocation8 + $0x2] sm:$0x1] %v3082
    %3117 = vst [vmem:[#allocation8 + $0xa] sm:$0x1] %v3096
    %3118 = vst [vmem:[#allocation8 + $0x12] sm:$0x1] %v3104
    %3119 = vst [vmem:[#allocation8 + $0x1a] sm:$0x1] %v3106
    %3120 = vst [vmem:[#allocation8 + $0x22] sm:$0x1] %v3089
    %3121 = vst [vmem:[#allocation8 + $0x2a] sm:$0x1] %v3103
    %3122 = vst [vmem:[#allocation8 + $0x32] sm:$0x1] %v3105
    %3123 = vst [vmem:[#allocation8 + $0x3a] sm:$0x1] %v3107
    %v3124 = vld [vmem:[#allocation5] sm:$0xf]
    %v3125 = vld [vmem:[#allocation5 + $0x4] sm:$0xf]
    %v3126 = vld [vmem:[#allocation5 + $0x8] sm:$0xf]
    %v3127 = vld [vmem:[#allocation5 + $0xc] sm:$0xf]
    %v3128 = vld [vmem:[#allocation5 + $0x10] sm:$0xf]
    %v3129 = vld [vmem:[#allocation5 + $0x14] sm:$0xf]
    %v3130 = vld [vmem:[#allocation5 + $0x18] sm:$0xf]
    %v3131 = vld [vmem:[#allocation5 + $0x1c] sm:$0xf]
    %v3132 = vld [vmem:[#allocation5 + $0x20] sm:$0xf]
    %v3133 = vld [vmem:[#allocation5 + $0x24] sm:$0xf]
    %v3134 = vld [vmem:[#allocation5 + $0x28] sm:$0xf]
    %v3135 = vld [vmem:[#allocation5 + $0x2c] sm:$0xf]
    %v3136 = vld [vmem:[#allocation5 + $0x30] sm:$0xf]
    %v3137 = vld [vmem:[#allocation5 + $0x34] sm:$0xf]
    %v3138 = vld [vmem:[#allocation5 + $0x38] sm:$0xf]
    %v3139 = vld [vmem:[#allocation5 + $0x3c] sm:$0xf]
    %v3156 = vunpack.c.l.b16 %v3124
    %v3157 = vunpack.c.l.b16 %v3125
    %v3158 = vunpack.c.l.b16 %v3126
    %v3159 = vunpack.c.l.b16 %v3127
    %v3160 = vunpack.c.l.b16 %v3128
    %v3161 = vunpack.c.l.b16 %v3129
    %v3162 = vunpack.c.l.b16 %v3130
    %v3163 = vunpack.c.l.b16 %v3131
    %v3164 = vunpack.c.l.b16 %v3132
    %v3165 = vunpack.c.l.b16 %v3133
    %v3166 = vunpack.c.l.b16 %v3134
    %v3167 = vunpack.c.l.b16 %v3135
    %v3168 = vunpack.c.l.b16 %v3136
    %v3169 = vunpack.c.l.b16 %v3137
    %v3170 = vunpack.c.l.b16 %v3138
    %v3171 = vunpack.c.l.b16 %v3139
    %v3172 = vpack.c.b16 %v3157, %v3156
    %v3173 = vpack.c.b16 %v3159, %v3158
    %v3174 = vpack.c.b16 %v3161, %v3160
    %v3175 = vpack.c.b16 %v3163, %v3162
    %v3176 = vpack.c.b16 %v3165, %v3164
    %v3177 = vpack.c.b16 %v3167, %v3166
    %v3178 = vpack.c.b16 %v3169, %v3168
    %v3179 = vpack.c.b16 %v3171, %v3170
    %3188 = vmatprep.subr.bf16.mxu0 0
    %3189 = vmatpush1.bf16.msra.mxu0 %v3172
    %3190 = vmatprep.subr.bf16.mxu0 0
    %3191 = vmatpush1.bf16.msra.mxu0 %v3173
    %3192 = vmatprep.subr.bf16.mxu0 0
    %3193 = vmatpush1.bf16.msra.mxu0 %v3174
    %3194 = vmatprep.subr.bf16.mxu0 0
    %3195 = vmatpush1.bf16.msra.mxu0 %v3175
    %3196 = vmatprep.subr.bf16.mxu0 0
    %3197 = vmatpush1.bf16.msra.mxu0 %v3176
    %3198 = vmatprep.subr.bf16.mxu0 0
    %3199 = vmatpush1.bf16.msra.mxu0 %v3177
    %3200 = vmatprep.subr.bf16.mxu0 0
    %3201 = vmatpush1.bf16.msra.mxu0 %v3178
    %3202 = vmatprep.subr.bf16.mxu0 0
    %3203 = vmatpush1.bf16.msra.mxu0 %v3179
    %3204 = vmatprep.subr.bf16.mxu0 0
    %3205 = vmatpush1.bf16.msra.mxu0 0
    %3206 = vmatprep.subr.bf16.mxu0 0
    %3207 = vmatpush1.bf16.msra.mxu0 0
    %3208 = vmatprep.subr.bf16.mxu0 0
    %3209 = vmatpush1.bf16.msra.mxu0 0
    %3210 = vmatprep.subr.bf16.mxu0 0
    %3211 = vmatpush1.bf16.msra.mxu0 0
    %3212 = vmatprep.subr.bf16.mxu0 0
    %3213 = vmatpush1.bf16.msra.mxu0 0
    %3214 = vmatprep.subr.bf16.mxu0 0
    %3215 = vmatpush1.bf16.msra.mxu0 0
    %3216 = vmatprep.subr.bf16.mxu0 0
    %3217 = vmatpush1.bf16.msra.mxu0 0
    %3218 = vmatprep.subr.bf16.mxu0 0
    %3219 = vmatpush1.bf16.msra.mxu0 0
    %3220 = vmatprep.mubr.bf16.mxu0 0
    %3221 = vmatmul.mubr.bf16.gmra.mrb[0].mxu0 %v2415
    %v3222 = vpop.f32.mrb[0].mxu0
    %v3223 = vadd.f32 0.0, %v3222
    %v3224 = vpop.f32.mrb[0].mxu0
    %v3225 = vpop.f32.mrb[0].mxu0
    %v3226 = vpop.f32.mrb[0].mxu0
    %3227 = vdwg.mxu0
    %v3228 = vadd.f32 %v402, %v3223
    %v3229 = vtanh.pop %v3228
    %v3230 = vpack.c.bf16 %v3229, %v3229
    %v3231 = vld [vmem:[#allocation7] sm:$0xf]
    %v3232 = vld [vmem:[#allocation7 + $0x4] sm:$0xf]
    %v3233 = vld [vmem:[#allocation7 + $0x8] sm:$0xf]
    %v3234 = vld [vmem:[#allocation7 + $0xc] sm:$0xf]
    %v3235 = vld [vmem:[#allocation7 + $0x10] sm:$0xf]
    %v3236 = vld [vmem:[#allocation7 + $0x14] sm:$0xf]
    %v3237 = vld [vmem:[#allocation7 + $0x18] sm:$0xf]
    %v3238 = vld [vmem:[#allocation7 + $0x1c] sm:$0xf]
    %v3239 = vld [vmem:[#allocation7 + $0x20] sm:$0xf]
    %v3240 = vld [vmem:[#allocation7 + $0x24] sm:$0xf]
    %v3241 = vld [vmem:[#allocation7 + $0x28] sm:$0xf]
    %v3242 = vld [vmem:[#allocation7 + $0x2c] sm:$0xf]
    %v3243 = vld [vmem:[#allocation7 + $0x30] sm:$0xf]
    %v3244 = vld [vmem:[#allocation7 + $0x34] sm:$0xf]
    %v3245 = vld [vmem:[#allocation7 + $0x38] sm:$0xf]
    %v3246 = vld [vmem:[#allocation7 + $0x3c] sm:$0xf]
    %v3247 = vld [vmem:[#allocation7 + $0x40] sm:$0xf]
    %v3248 = vld [vmem:[#allocation7 + $0x44] sm:$0xf]
    %v3249 = vld [vmem:[#allocation7 + $0x48] sm:$0xf]
    %v3250 = vld [vmem:[#allocation7 + $0x4c] sm:$0xf]
    %v3251 = vld [vmem:[#allocation7 + $0x50] sm:$0xf]
    %v3252 = vld [vmem:[#allocation7 + $0x54] sm:$0xf]
    %v3253 = vld [vmem:[#allocation7 + $0x58] sm:$0xf]
    %v3254 = vld [vmem:[#allocation7 + $0x5c] sm:$0xf]
    %v3255 = vld [vmem:[#allocation7 + $0x60] sm:$0xf]
    %v3256 = vld [vmem:[#allocation7 + $0x64] sm:$0xf]
    %v3257 = vld [vmem:[#allocation7 + $0x68] sm:$0xf]
    %v3258 = vld [vmem:[#allocation7 + $0x6c] sm:$0xf]
    %v3259 = vld [vmem:[#allocation7 + $0x70] sm:$0xf]
    %v3260 = vld [vmem:[#allocation7 + $0x74] sm:$0xf]
    %v3261 = vld [vmem:[#allocation7 + $0x78] sm:$0xf]
    %v3262 = vld [vmem:[#allocation7 + $0x7c] sm:$0xf]
    %v3263 = vld [vmem:[%s601] sm:$0x1]
    %v3265 = vlaneseq
    %v3266 = vshrl.u32 %v3265, 7
    %v3267 = vsub.s32 0, %v3266
    %v3268 = vrot.slane %v3263, %v3267
    %v3302 = vunpack.c.l.b16 %v3231
    %v3303 = vunpack.c.l.b16 %v3232
    %v3304 = vunpack.c.l.b16 %v3233
    %v3305 = vunpack.c.l.b16 %v3234
    %v3306 = vunpack.c.l.b16 %v3235
    %v3307 = vunpack.c.l.b16 %v3236
    %v3308 = vunpack.c.l.b16 %v3237
    %v3309 = vunpack.c.l.b16 %v3238
    %v3310 = vunpack.c.l.b16 %v3239
    %v3311 = vunpack.c.l.b16 %v3240
    %v3312 = vunpack.c.l.b16 %v3241
    %v3313 = vunpack.c.l.b16 %v3242
    %v3314 = vunpack.c.l.b16 %v3243
    %v3315 = vunpack.c.l.b16 %v3244
    %v3316 = vunpack.c.l.b16 %v3245
    %v3317 = vunpack.c.l.b16 %v3246
    %v3318 = vunpack.c.l.b16 %v3247
    %v3319 = vunpack.c.l.b16 %v3248
    %v3320 = vunpack.c.l.b16 %v3249
    %v3321 = vunpack.c.l.b16 %v3250
    %v3322 = vunpack.c.l.b16 %v3251
    %v3323 = vunpack.c.l.b16 %v3252
    %v3324 = vunpack.c.l.b16 %v3253
    %v3325 = vunpack.c.l.b16 %v3254
    %v3326 = vunpack.c.l.b16 %v3255
    %v3327 = vunpack.c.l.b16 %v3256
    %v3328 = vunpack.c.l.b16 %v3257
    %v3329 = vunpack.c.l.b16 %v3258
    %v3330 = vunpack.c.l.b16 %v3259
    %v3331 = vunpack.c.l.b16 %v3260
    %v3332 = vunpack.c.l.b16 %v3261
    %v3333 = vunpack.c.l.b16 %v3262
    %v3334 = vpack.c.b16 %v3303, %v3302
    %v3335 = vpack.c.b16 %v3305, %v3304
    %v3336 = vpack.c.b16 %v3307, %v3306
    %v3337 = vpack.c.b16 %v3309, %v3308
    %v3338 = vpack.c.b16 %v3311, %v3310
    %v3339 = vpack.c.b16 %v3313, %v3312
    %v3340 = vpack.c.b16 %v3315, %v3314
    %v3341 = vpack.c.b16 %v3317, %v3316
    %v3342 = vpack.c.b16 %v3319, %v3318
    %v3343 = vpack.c.b16 %v3321, %v3320
    %v3344 = vpack.c.b16 %v3323, %v3322
    %v3345 = vpack.c.b16 %v3325, %v3324
    %v3346 = vpack.c.b16 %v3327, %v3326
    %v3347 = vpack.c.b16 %v3329, %v3328
    %v3348 = vpack.c.b16 %v3331, %v3330
    %v3349 = vpack.c.b16 %v3333, %v3332
    %3366 = vmatprep.subr.bf16.mxu0 0
    %3367 = vmatpush1.bf16.msra.mxu0 %v3334
    %3368 = vmatprep.subr.bf16.mxu0 0
    %3369 = vmatpush1.bf16.msra.mxu0 %v3335
    %3370 = vmatprep.subr.bf16.mxu0 0
    %3371 = vmatpush1.bf16.msra.mxu0 %v3336
    %3372 = vmatprep.subr.bf16.mxu0 0
    %3373 = vmatpush1.bf16.msra.mxu0 %v3337
    %3374 = vmatprep.subr.bf16.mxu0 0
    %3375 = vmatpush1.bf16.msra.mxu0 %v3338
    %3376 = vmatprep.subr.bf16.mxu0 0
    %3377 = vmatpush1.bf16.msra.mxu0 %v3339
    %3378 = vmatprep.subr.bf16.mxu0 0
    %3379 = vmatpush1.bf16.msra.mxu0 %v3340
    %3380 = vmatprep.subr.bf16.mxu0 0
    %3381 = vmatpush1.bf16.msra.mxu0 %v3341
    %3382 = vmatprep.subr.bf16.mxu0 0
    %3383 = vmatpush1.bf16.msra.mxu0 %v3342
    %3384 = vmatprep.subr.bf16.mxu0 0
    %3385 = vmatpush1.bf16.msra.mxu0 %v3343
    %3386 = vmatprep.subr.bf16.mxu0 0
    %3387 = vmatpush1.bf16.msra.mxu0 %v3344
    %3388 = vmatprep.subr.bf16.mxu0 0
    %3389 = vmatpush1.bf16.msra.mxu0 %v3345
    %3390 = vmatprep.subr.bf16.mxu0 0
    %3391 = vmatpush1.bf16.msra.mxu0 %v3346
    %3392 = vmatprep.subr.bf16.mxu0 0
    %3393 = vmatpush1.bf16.msra.mxu0 %v3347
    %3394 = vmatprep.subr.bf16.mxu0 0
    %3395 = vmatpush1.bf16.msra.mxu0 %v3348
    %3396 = vmatprep.subr.bf16.mxu0 0
    %3397 = vmatpush1.bf16.msra.mxu0 %v3349
    %3398 = vmatprep.mubr.bf16.mxu0 %v2592
    %3399 = vmatmul.mubr.bf16.gmra.mrb[0].mxu0 %v2415
    %v3400 = vpop.f32.mrb[0].mxu0
    %v3401 = vadd.f32 %v3268, %v3400
    %v3402 = vpop.f32.mrb[0].mxu0
    %v3403 = vpop.f32.mrb[0].mxu0
    %v3404 = vpop.f32.mrb[0].mxu0
    %3405 = vdwg.mxu0
    %v3406 = vtanh.pop %v3401
    %v3407 = vpack.c.bf16 %v3406, %v3406
    %v3408 = vld [vmem:[%s832] sm:$0xf]
    %v3409 = vld [vmem:[%s832 + $0x4] sm:$0xf]
    %v3410 = vld [vmem:[%s832 + $0x8] sm:$0xf]
    %v3411 = vld [vmem:[%s832 + $0xc] sm:$0xf]
    %v3412 = vld [vmem:[%s832 + $0x10] sm:$0xf]
    %v3413 = vld [vmem:[%s832 + $0x14] sm:$0xf]
    %v3414 = vld [vmem:[%s832 + $0x18] sm:$0xf]
    %v3415 = vld [vmem:[%s832 + $0x1c] sm:$0xf]
    %v3416 = vld [vmem:[%s832 + $0x20] sm:$0xf]
    %v3417 = vld [vmem:[%s832 + $0x24] sm:$0xf]
    %v3418 = vld [vmem:[%s832 + $0x28] sm:$0xf]
    %v3419 = vld [vmem:[%s832 + $0x2c] sm:$0xf]
    %v3420 = vld [vmem:[%s832 + $0x30] sm:$0xf]
    %v3421 = vld [vmem:[%s832 + $0x34] sm:$0xf]
    %v3422 = vld [vmem:[%s832 + $0x38] sm:$0xf]
    %v3423 = vld [vmem:[%s832 + $0x3c] sm:$0xf]
    %v3424 = vld [vmem:[%s832 + $0x40] sm:$0xf]
    %v3425 = vld [vmem:[%s832 + $0x44] sm:$0xf]
    %v3426 = vld [vmem:[%s832 + $0x48] sm:$0xf]
    %v3427 = vld [vmem:[%s832 + $0x4c] sm:$0xf]
    %v3428 = vld [vmem:[%s832 + $0x50] sm:$0xf]
    %v3429 = vld [vmem:[%s832 + $0x54] sm:$0xf]
    %v3430 = vld [vmem:[%s832 + $0x58] sm:$0xf]
    %v3431 = vld [vmem:[%s832 + $0x5c] sm:$0xf]
    %v3432 = vld [vmem:[%s832 + $0x60] sm:$0xf]
    %v3433 = vld [vmem:[%s832 + $0x64] sm:$0xf]
    %v3434 = vld [vmem:[%s832 + $0x68] sm:$0xf]
    %v3435 = vld [vmem:[%s832 + $0x6c] sm:$0xf]
    %v3436 = vld [vmem:[%s832 + $0x70] sm:$0xf]
    %v3437 = vld [vmem:[%s832 + $0x74] sm:$0xf]
    %v3438 = vld [vmem:[%s832 + $0x78] sm:$0xf]
    %v3439 = vld [vmem:[%s832 + $0x7c] sm:$0xf]
    %v3440 = vld [vmem:[%s865] sm:$0x1]
    %v3442 = vlaneseq
    %v3443 = vshrl.u32 %v3442, 7
    %v3444 = vsub.s32 0, %v3443
    %v3445 = vrot.slane %v3440, %v3444
    %v3479 = vunpack.c.l.b16 %v3408
    %v3480 = vunpack.c.l.b16 %v3409
    %v3481 = vunpack.c.l.b16 %v3410
    %v3482 = vunpack.c.l.b16 %v3411
    %v3483 = vunpack.c.l.b16 %v3412
    %v3484 = vunpack.c.l.b16 %v3413
    %v3485 = vunpack.c.l.b16 %v3414
    %v3486 = vunpack.c.l.b16 %v3415
    %v3487 = vunpack.c.l.b16 %v3416
    %v3488 = vunpack.c.l.b16 %v3417
    %v3489 = vunpack.c.l.b16 %v3418
    %v3490 = vunpack.c.l.b16 %v3419
    %v3491 = vunpack.c.l.b16 %v3420
    %v3492 = vunpack.c.l.b16 %v3421
    %v3493 = vunpack.c.l.b16 %v3422
    %v3494 = vunpack.c.l.b16 %v3423
    %v3495 = vunpack.c.l.b16 %v3424
    %v3496 = vunpack.c.l.b16 %v3425
    %v3497 = vunpack.c.l.b16 %v3426
    %v3498 = vunpack.c.l.b16 %v3427
    %v3499 = vunpack.c.l.b16 %v3428
    %v3500 = vunpack.c.l.b16 %v3429
    %v3501 = vunpack.c.l.b16 %v3430
    %v3502 = vunpack.c.l.b16 %v3431
    %v3503 = vunpack.c.l.b16 %v3432
    %v3504 = vunpack.c.l.b16 %v3433
    %v3505 = vunpack.c.l.b16 %v3434
    %v3506 = vunpack.c.l.b16 %v3435
    %v3507 = vunpack.c.l.b16 %v3436
    %v3508 = vunpack.c.l.b16 %v3437
    %v3509 = vunpack.c.l.b16 %v3438
    %v3510 = vunpack.c.l.b16 %v3439
    %v3511 = vpack.c.b16 %v3480, %v3479
    %v3512 = vpack.c.b16 %v3482, %v3481
    %v3513 = vpack.c.b16 %v3484, %v3483
    %v3514 = vpack.c.b16 %v3486, %v3485
    %v3515 = vpack.c.b16 %v3488, %v3487
    %v3516 = vpack.c.b16 %v3490, %v3489
    %v3517 = vpack.c.b16 %v3492, %v3491
    %v3518 = vpack.c.b16 %v3494, %v3493
    %v3519 = vpack.c.b16 %v3496, %v3495
    %v3520 = vpack.c.b16 %v3498, %v3497
    %v3521 = vpack.c.b16 %v3500, %v3499
    %v3522 = vpack.c.b16 %v3502, %v3501
    %v3523 = vpack.c.b16 %v3504, %v3503
    %v3524 = vpack.c.b16 %v3506, %v3505
    %v3525 = vpack.c.b16 %v3508, %v3507
    %v3526 = vpack.c.b16 %v3510, %v3509
    %3543 = vmatprep.subr.bf16.mxu0 0
    %3544 = vmatpush1.bf16.msra.mxu0 %v3511
    %3545 = vmatprep.subr.bf16.mxu0 0
    %3546 = vmatpush1.bf16.msra.mxu0 %v3512
    %3547 = vmatprep.subr.bf16.mxu0 0
    %3548 = vmatpush1.bf16.msra.mxu0 %v3513
    %3549 = vmatprep.subr.bf16.mxu0 0
    %3550 = vmatpush1.bf16.msra.mxu0 %v3514
    %3551 = vmatprep.subr.bf16.mxu0 0
    %3552 = vmatpush1.bf16.msra.mxu0 %v3515
    %3553 = vmatprep.subr.bf16.mxu0 0
    %3554 = vmatpush1.bf16.msra.mxu0 %v3516
    %3555 = vmatprep.subr.bf16.mxu0 0
    %3556 = vmatpush1.bf16.msra.mxu0 %v3517
    %3557 = vmatprep.subr.bf16.mxu0 0
    %3558 = vmatpush1.bf16.msra.mxu0 %v3518
    %3559 = vmatprep.subr.bf16.mxu0 0
    %3560 = vmatpush1.bf16.msra.mxu0 %v3519
    %3561 = vmatprep.subr.bf16.mxu0 0
    %3562 = vmatpush1.bf16.msra.mxu0 %v3520
    %3563 = vmatprep.subr.bf16.mxu0 0
    %3564 = vmatpush1.bf16.msra.mxu0 %v3521
    %3565 = vmatprep.subr.bf16.mxu0 0
    %3566 = vmatpush1.bf16.msra.mxu0 %v3522
    %3567 = vmatprep.subr.bf16.mxu0 0
    %3568 = vmatpush1.bf16.msra.mxu0 %v3523
    %3569 = vmatprep.subr.bf16.mxu0 0
    %3570 = vmatpush1.bf16.msra.mxu0 %v3524
    %3571 = vmatprep.subr.bf16.mxu0 0
    %3572 = vmatpush1.bf16.msra.mxu0 %v3525
    %3573 = vmatprep.subr.bf16.mxu0 0
    %3574 = vmatpush1.bf16.msra.mxu0 %v3526
    %3575 = vmatprep.mubr.bf16.mxu0 %v2769
    %3576 = vmatmul.mubr.bf16.gmra.mrb[0].mxu0 %v2592
    %v3577 = vpop.f32.mrb[0].mxu0
    %v3578 = vadd.f32 %v3445, %v3577
    %v3579 = vpop.f32.mrb[0].mxu0
    %v3580 = vpop.f32.mrb[0].mxu0
    %v3581 = vpop.f32.mrb[0].mxu0
    %3582 = vdwg.mxu0
    %v3583 = vtanh.pop %v3578
    %v3584 = vpack.c.bf16 %v3583, %v3583
    %v3585 = vld [vmem:[%s1138] sm:$0xf]
    %v3586 = vld [vmem:[%s1138 + $0x4] sm:$0xf]
    %v3587 = vld [vmem:[%s1138 + $0x8] sm:$0xf]
    %v3588 = vld [vmem:[%s1138 + $0xc] sm:$0xf]
    %v3589 = vld [vmem:[%s1138 + $0x10] sm:$0xf]
    %v3590 = vld [vmem:[%s1138 + $0x14] sm:$0xf]
    %v3591 = vld [vmem:[%s1138 + $0x18] sm:$0xf]
    %v3592 = vld [vmem:[%s1138 + $0x1c] sm:$0xf]
    %v3593 = vld [vmem:[%s1138 + $0x20] sm:$0xf]
    %v3594 = vld [vmem:[%s1138 + $0x24] sm:$0xf]
    %v3595 = vld [vmem:[%s1138 + $0x28] sm:$0xf]
    %v3596 = vld [vmem:[%s1138 + $0x2c] sm:$0xf]
    %v3597 = vld [vmem:[%s1138 + $0x30] sm:$0xf]
    %v3598 = vld [vmem:[%s1138 + $0x34] sm:$0xf]
    %v3599 = vld [vmem:[%s1138 + $0x38] sm:$0xf]
    %v3600 = vld [vmem:[%s1138 + $0x3c] sm:$0xf]
    %v3601 = vld [vmem:[%s1138 + $0x40] sm:$0xf]
    %v3602 = vld [vmem:[%s1138 + $0x44] sm:$0xf]
    %v3603 = vld [vmem:[%s1138 + $0x48] sm:$0xf]
    %v3604 = vld [vmem:[%s1138 + $0x4c] sm:$0xf]
    %v3605 = vld [vmem:[%s1138 + $0x50] sm:$0xf]
    %v3606 = vld [vmem:[%s1138 + $0x54] sm:$0xf]
    %v3607 = vld [vmem:[%s1138 + $0x58] sm:$0xf]
    %v3608 = vld [vmem:[%s1138 + $0x5c] sm:$0xf]
    %v3609 = vld [vmem:[%s1138 + $0x60] sm:$0xf]
    %v3610 = vld [vmem:[%s1138 + $0x64] sm:$0xf]
    %v3611 = vld [vmem:[%s1138 + $0x68] sm:$0xf]
    %v3612 = vld [vmem:[%s1138 + $0x6c] sm:$0xf]
    %v3613 = vld [vmem:[%s1138 + $0x70] sm:$0xf]
    %v3614 = vld [vmem:[%s1138 + $0x74] sm:$0xf]
    %v3615 = vld [vmem:[%s1138 + $0x78] sm:$0xf]
    %v3616 = vld [vmem:[%s1138 + $0x7c] sm:$0xf]
    %v3617 = vld [vmem:[%s1171] sm:$0x1]
    %v3619 = vlaneseq
    %v3620 = vshrl.u32 %v3619, 7
    %v3621 = vsub.s32 0, %v3620
    %v3622 = vrot.slane %v3617, %v3621
    %v3656 = vunpack.c.l.b16 %v3585
    %v3657 = vunpack.c.l.b16 %v3586
    %v3658 = vunpack.c.l.b16 %v3587
    %v3659 = vunpack.c.l.b16 %v3588
    %v3660 = vunpack.c.l.b16 %v3589
    %v3661 = vunpack.c.l.b16 %v3590
    %v3662 = vunpack.c.l.b16 %v3591
    %v3663 = vunpack.c.l.b16 %v3592
    %v3664 = vunpack.c.l.b16 %v3593
    %v3665 = vunpack.c.l.b16 %v3594
    %v3666 = vunpack.c.l.b16 %v3595
    %v3667 = vunpack.c.l.b16 %v3596
    %v3668 = vunpack.c.l.b16 %v3597
    %v3669 = vunpack.c.l.b16 %v3598
    %v3670 = vunpack.c.l.b16 %v3599
    %v3671 = vunpack.c.l.b16 %v3600
    %v3672 = vunpack.c.l.b16 %v3601
    %v3673 = vunpack.c.l.b16 %v3602
    %v3674 = vunpack.c.l.b16 %v3603
    %v3675 = vunpack.c.l.b16 %v3604
    %v3676 = vunpack.c.l.b16 %v3605
    %v3677 = vunpack.c.l.b16 %v3606
    %v3678 = vunpack.c.l.b16 %v3607
    %v3679 = vunpack.c.l.b16 %v3608
    %v3680 = vunpack.c.l.b16 %v3609
    %v3681 = vunpack.c.l.b16 %v3610
    %v3682 = vunpack.c.l.b16 %v3611
    %v3683 = vunpack.c.l.b16 %v3612
    %v3684 = vunpack.c.l.b16 %v3613
    %v3685 = vunpack.c.l.b16 %v3614
    %v3686 = vunpack.c.l.b16 %v3615
    %v3687 = vunpack.c.l.b16 %v3616
    %v3688 = vpack.c.b16 %v3657, %v3656
    %v3689 = vpack.c.b16 %v3659, %v3658
    %v3690 = vpack.c.b16 %v3661, %v3660
    %v3691 = vpack.c.b16 %v3663, %v3662
    %v3692 = vpack.c.b16 %v3665, %v3664
    %v3693 = vpack.c.b16 %v3667, %v3666
    %v3694 = vpack.c.b16 %v3669, %v3668
    %v3695 = vpack.c.b16 %v3671, %v3670
    %v3696 = vpack.c.b16 %v3673, %v3672
    %v3697 = vpack.c.b16 %v3675, %v3674
    %v3698 = vpack.c.b16 %v3677, %v3676
    %v3699 = vpack.c.b16 %v3679, %v3678
    %v3700 = vpack.c.b16 %v3681, %v3680
    %v3701 = vpack.c.b16 %v3683, %v3682
    %v3702 = vpack.c.b16 %v3685, %v3684
    %v3703 = vpack.c.b16 %v3687, %v3686
    %3720 = vmatprep.subr.bf16.mxu0 0
    %3721 = vmatpush1.bf16.msra.mxu0 %v3688
    %3722 = vmatprep.subr.bf16.mxu0 0
    %3723 = vmatpush1.bf16.msra.mxu0 %v3689
    %3724 = vmatprep.subr.bf16.mxu0 0
    %3725 = vmatpush1.bf16.msra.mxu0 %v3690
    %3726 = vmatprep.subr.bf16.mxu0 0
    %3727 = vmatpush1.bf16.msra.mxu0 %v3691
    %3728 = vmatprep.subr.bf16.mxu0 0
    %3729 = vmatpush1.bf16.msra.mxu0 %v3692
    %3730 = vmatprep.subr.bf16.mxu0 0
    %3731 = vmatpush1.bf16.msra.mxu0 %v3693
    %3732 = vmatprep.subr.bf16.mxu0 0
    %3733 = vmatpush1.bf16.msra.mxu0 %v3694
    %3734 = vmatprep.subr.bf16.mxu0 0
    %3735 = vmatpush1.bf16.msra.mxu0 %v3695
    %3736 = vmatprep.subr.bf16.mxu0 0
    %3737 = vmatpush1.bf16.msra.mxu0 %v3696
    %3738 = vmatprep.subr.bf16.mxu0 0
    %3739 = vmatpush1.bf16.msra.mxu0 %v3697
    %3740 = vmatprep.subr.bf16.mxu0 0
    %3741 = vmatpush1.bf16.msra.mxu0 %v3698
    %3742 = vmatprep.subr.bf16.mxu0 0
    %3743 = vmatpush1.bf16.msra.mxu0 %v3699
    %3744 = vmatprep.subr.bf16.mxu0 0
    %3745 = vmatpush1.bf16.msra.mxu0 %v3700
    %3746 = vmatprep.subr.bf16.mxu0 0
    %3747 = vmatpush1.bf16.msra.mxu0 %v3701
    %3748 = vmatprep.subr.bf16.mxu0 0
    %3749 = vmatpush1.bf16.msra.mxu0 %v3702
    %3750 = vmatprep.subr.bf16.mxu0 0
    %3751 = vmatpush1.bf16.msra.mxu0 %v3703
    %3752 = vmatprep.mubr.bf16.mxu0 %v2946
    %3753 = vmatmul.mubr.bf16.gmra.mrb[0].mxu0 %v2769
    %v3754 = vpop.f32.mrb[0].mxu0
    %v3755 = vadd.f32 %v3622, %v3754
    %v3756 = vpop.f32.mrb[0].mxu0
    %v3757 = vpop.f32.mrb[0].mxu0
    %v3758 = vpop.f32.mrb[0].mxu0
    %3759 = vdwg.mxu0
    %v3760 = vtanh.pop %v3755
    %v3761 = vpack.c.bf16 %v3760, %v3760
    %v3762 = vld [vmem:[%s7] sm:$0xf]
    %v3763 = vld [vmem:[%s7 + $0x4] sm:$0xf]
    %v3764 = vld [vmem:[%s7 + $0x8] sm:$0xf]
    %v3765 = vld [vmem:[%s7 + $0xc] sm:$0xf]
    %v3766 = vld [vmem:[%s7 + $0x10] sm:$0xf]
    %v3767 = vld [vmem:[%s7 + $0x14] sm:$0xf]
    %v3768 = vld [vmem:[%s7 + $0x18] sm:$0xf]
    %v3769 = vld [vmem:[%s7 + $0x1c] sm:$0xf]
    %v3770 = vld [vmem:[%s7 + $0x20] sm:$0xf]
    %v3771 = vld [vmem:[%s7 + $0x24] sm:$0xf]
    %v3772 = vld [vmem:[%s7 + $0x28] sm:$0xf]
    %v3773 = vld [vmem:[%s7 + $0x2c] sm:$0xf]
    %v3774 = vld [vmem:[%s7 + $0x30] sm:$0xf]
    %v3775 = vld [vmem:[%s7 + $0x34] sm:$0xf]
    %v3776 = vld [vmem:[%s7 + $0x38] sm:$0xf]
    %v3777 = vld [vmem:[%s7 + $0x3c] sm:$0xf]
    %v3778 = vld [vmem:[%s8] sm:$0x1]
    %v3780 = vlaneseq
    %v3781 = vshrl.u32 %v3780, 7
    %v3782 = vsub.s32 0, %v3781
    %v3783 = vrot.slane %v3778, %v3782
    %v3801 = vunpack.c.l.b16 %v3762
    %v3802 = vunpack.c.l.b16 %v3763
    %v3803 = vunpack.c.l.b16 %v3764
    %v3804 = vunpack.c.l.b16 %v3765
    %v3805 = vunpack.c.l.b16 %v3766
    %v3806 = vunpack.c.l.b16 %v3767
    %v3807 = vunpack.c.l.b16 %v3768
    %v3808 = vunpack.c.l.b16 %v3769
    %v3809 = vunpack.c.l.b16 %v3770
    %v3810 = vunpack.c.l.b16 %v3771
    %v3811 = vunpack.c.l.b16 %v3772
    %v3812 = vunpack.c.l.b16 %v3773
    %v3813 = vunpack.c.l.b16 %v3774
    %v3814 = vunpack.c.l.b16 %v3775
    %v3815 = vunpack.c.l.b16 %v3776
    %v3816 = vunpack.c.l.b16 %v3777
    %v3817 = vpack.c.b16 %v3802, %v3801
    %v3818 = vpack.c.b16 %v3804, %v3803
    %v3819 = vpack.c.b16 %v3806, %v3805
    %v3820 = vpack.c.b16 %v3808, %v3807
    %v3821 = vpack.c.b16 %v3810, %v3809
    %v3822 = vpack.c.b16 %v3812, %v3811
    %v3823 = vpack.c.b16 %v3814, %v3813
    %v3824 = vpack.c.b16 %v3816, %v3815
    %3833 = vmatprep.subr.bf16.mxu0 0
    %3834 = vmatpush1.bf16.msra.mxu0 %v3817
    %3835 = vmatprep.subr.bf16.mxu0 0
    %3836 = vmatpush1.bf16.msra.mxu0 %v3818
    %3837 = vmatprep.subr.bf16.mxu0 0
    %3838 = vmatpush1.bf16.msra.mxu0 %v3819
    %3839 = vmatprep.subr.bf16.mxu0 0
    %3840 = vmatpush1.bf16.msra.mxu0 %v3820
    %3841 = vmatprep.subr.bf16.mxu0 0
    %3842 = vmatpush1.bf16.msra.mxu0 %v3821
    %3843 = vmatprep.subr.bf16.mxu0 0
    %3844 = vmatpush1.bf16.msra.mxu0 %v3822
    %3845 = vmatprep.subr.bf16.mxu0 0
    %3846 = vmatpush1.bf16.msra.mxu0 %v3823
    %3847 = vmatprep.subr.bf16.mxu0 0
    %3848 = vmatpush1.bf16.msra.mxu0 %v3824
    %3849 = vmatprep.subr.bf16.mxu0 0
    %3850 = vmatpush1.bf16.msra.mxu0 0
    %3851 = vmatprep.subr.bf16.mxu0 0
    %3852 = vmatpush1.bf16.msra.mxu0 0
    %3853 = vmatprep.subr.bf16.mxu0 0
    %3854 = vmatpush1.bf16.msra.mxu0 0
    %3855 = vmatprep.subr.bf16.mxu0 0
    %3856 = vmatpush1.bf16.msra.mxu0 0
    %3857 = vmatprep.subr.bf16.mxu0 0
    %3858 = vmatpush1.bf16.msra.mxu0 0
    %3859 = vmatprep.subr.bf16.mxu0 0
    %3860 = vmatpush1.bf16.msra.mxu0 0
    %3861 = vmatprep.subr.bf16.mxu0 0
    %3862 = vmatpush1.bf16.msra.mxu0 0
    %3863 = vmatprep.subr.bf16.mxu0 0
    %3864 = vmatpush1.bf16.msra.mxu0 0
    %3865 = vmatprep.mubr.bf16.mxu0 0
    %3866 = vmatmul.mubr.bf16.gmra.mrb[0].mxu0 %v3761
    %v3867 = vpop.f32.mrb[0].mxu0
    %v3868 = vadd.f32 %v3783, %v3867
    %v3869 = vpop.f32.mrb[0].mxu0
    %v3870 = vpop.f32.mrb[0].mxu0
    %v3871 = vpop.f32.mrb[0].mxu0
    %3872 = vdwg.mxu0
    %v3874 = vcombine.high %v3868, %v3868
    %v3876 = vunpack.c.l.s4 1966171168
    %v3877 = vunpack.c.0.s8 %v3876
    %v3878 = vlaneseq
    %v3879 = vshrl.u32 %v3878, 7
    %v3880 = vsub.s32 %v3877, %v3879
    %v3881 = vrot.slane %v3868, %v3880
    %v3883 = vunpack.c.l.s4 1966171168
    %v3884 = vunpack.c.0.s8 %v3883
    %v3885 = vlaneseq
    %v3886 = vshrl.u32 %v3885, 7
    %v3887 = vsub.s32 %v3884, %v3886
    %v3888 = vrot.slane %v3874, %v3887
    %v3889 = vcombine.high %v3881, %v3881
    %v3890 = vcombine.high %v3888, %v3888
    %v3892 = vunpack.c.l.s4 1966171168
    %v3893 = vunpack.c.0.s8 %v3892
    %v3894 = vlaneseq
    %v3895 = vshrl.u32 %v3894, 7
    %v3896 = vsub.s32 %v3893, %v3895
    %v3897 = vrot.slane %v3881, %v3896
    %v3899 = vunpack.c.l.s4 1966171168
    %v3900 = vunpack.c.0.s8 %v3899
    %v3901 = vlaneseq
    %v3902 = vshrl.u32 %v3901, 7
    %v3903 = vsub.s32 %v3900, %v3902
    %v3904 = vrot.slane %v3888, %v3903
    %v3906 = vunpack.c.l.s4 1966171168
    %v3907 = vunpack.c.0.s8 %v3906
    %v3908 = vlaneseq
    %v3909 = vshrl.u32 %v3908, 7
    %v3910 = vsub.s32 %v3907, %v3909
    %v3911 = vrot.slane %v3889, %v3910
    %v3913 = vunpack.c.l.s4 1966171168
    %v3914 = vunpack.c.0.s8 %v3913
    %v3915 = vlaneseq
    %v3916 = vshrl.u32 %v3915, 7
    %v3917 = vsub.s32 %v3914, %v3916
    %v3918 = vrot.slane %v3890, %v3917
    %v3919 = vcombine.high %v3897, %v3897
    %v3920 = vcombine.high %v3904, %v3904
    %v3921 = vcombine.high %v3911, %v3911
    %v3922 = vcombine.high %v3918, %v3918
    %3931 = vst [vmem:[#allocation8 + $0x3] sm:$0x1] %v3897
    %3932 = vst [vmem:[#allocation8 + $0xb] sm:$0x1] %v3911
    %3933 = vst [vmem:[#allocation8 + $0x13] sm:$0x1] %v3919
    %3934 = vst [vmem:[#allocation8 + $0x1b] sm:$0x1] %v3921
    %3935 = vst [vmem:[#allocation8 + $0x23] sm:$0x1] %v3904
    %3936 = vst [vmem:[#allocation8 + $0x2b] sm:$0x1] %v3918
    %3937 = vst [vmem:[#allocation8 + $0x33] sm:$0x1] %v3920
    %3938 = vst [vmem:[#allocation8 + $0x3b] sm:$0x1] %v3922
    %v3939 = vld [vmem:[#allocation5] sm:$0xf]
    %v3940 = vld [vmem:[#allocation5 + $0x4] sm:$0xf]
    %v3941 = vld [vmem:[#allocation5 + $0x8] sm:$0xf]
    %v3942 = vld [vmem:[#allocation5 + $0xc] sm:$0xf]
    %v3943 = vld [vmem:[#allocation5 + $0x10] sm:$0xf]
    %v3944 = vld [vmem:[#allocation5 + $0x14] sm:$0xf]
    %v3945 = vld [vmem:[#allocation5 + $0x18] sm:$0xf]
    %v3946 = vld [vmem:[#allocation5 + $0x1c] sm:$0xf]
    %v3947 = vld [vmem:[#allocation5 + $0x20] sm:$0xf]
    %v3948 = vld [vmem:[#allocation5 + $0x24] sm:$0xf]
    %v3949 = vld [vmem:[#allocation5 + $0x28] sm:$0xf]
    %v3950 = vld [vmem:[#allocation5 + $0x2c] sm:$0xf]
    %v3951 = vld [vmem:[#allocation5 + $0x30] sm:$0xf]
    %v3952 = vld [vmem:[#allocation5 + $0x34] sm:$0xf]
    %v3953 = vld [vmem:[#allocation5 + $0x38] sm:$0xf]
    %v3954 = vld [vmem:[#allocation5 + $0x3c] sm:$0xf]
    %v3971 = vunpack.c.l.b16 %v3939
    %v3972 = vunpack.c.l.b16 %v3940
    %v3973 = vunpack.c.l.b16 %v3941
    %v3974 = vunpack.c.l.b16 %v3942
    %v3975 = vunpack.c.l.b16 %v3943
    %v3976 = vunpack.c.l.b16 %v3944
    %v3977 = vunpack.c.l.b16 %v3945
    %v3978 = vunpack.c.l.b16 %v3946
    %v3979 = vunpack.c.l.b16 %v3947
    %v3980 = vunpack.c.l.b16 %v3948
    %v3981 = vunpack.c.l.b16 %v3949
    %v3982 = vunpack.c.l.b16 %v3950
    %v3983 = vunpack.c.l.b16 %v3951
    %v3984 = vunpack.c.l.b16 %v3952
    %v3985 = vunpack.c.l.b16 %v3953
    %v3986 = vunpack.c.l.b16 %v3954
    %v3987 = vpack.c.b16 %v3972, %v3971
    %v3988 = vpack.c.b16 %v3974, %v3973
    %v3989 = vpack.c.b16 %v3976, %v3975
    %v3990 = vpack.c.b16 %v3978, %v3977
    %v3991 = vpack.c.b16 %v3980, %v3979
    %v3992 = vpack.c.b16 %v3982, %v3981
    %v3993 = vpack.c.b16 %v3984, %v3983
    %v3994 = vpack.c.b16 %v3986, %v3985
    %4003 = vmatprep.subr.bf16.mxu0 0
    %4004 = vmatpush1.bf16.msra.mxu0 %v3987
    %4005 = vmatprep.subr.bf16.mxu0 0
    %4006 = vmatpush1.bf16.msra.mxu0 %v3988
    %4007 = vmatprep.subr.bf16.mxu0 0
    %4008 = vmatpush1.bf16.msra.mxu0 %v3989
    %4009 = vmatprep.subr.bf16.mxu0 0
    %4010 = vmatpush1.bf16.msra.mxu0 %v3990
    %4011 = vmatprep.subr.bf16.mxu0 0
    %4012 = vmatpush1.bf16.msra.mxu0 %v3991
    %4013 = vmatprep.subr.bf16.mxu0 0
    %4014 = vmatpush1.bf16.msra.mxu0 %v3992
    %4015 = vmatprep.subr.bf16.mxu0 0
    %4016 = vmatpush1.bf16.msra.mxu0 %v3993
    %4017 = vmatprep.subr.bf16.mxu0 0
    %4018 = vmatpush1.bf16.msra.mxu0 %v3994
    %4019 = vmatprep.subr.bf16.mxu0 0
    %4020 = vmatpush1.bf16.msra.mxu0 0
    %4021 = vmatprep.subr.bf16.mxu0 0
    %4022 = vmatpush1.bf16.msra.mxu0 0
    %4023 = vmatprep.subr.bf16.mxu0 0
    %4024 = vmatpush1.bf16.msra.mxu0 0
    %4025 = vmatprep.subr.bf16.mxu0 0
    %4026 = vmatpush1.bf16.msra.mxu0 0
    %4027 = vmatprep.subr.bf16.mxu0 0
    %4028 = vmatpush1.bf16.msra.mxu0 0
    %4029 = vmatprep.subr.bf16.mxu0 0
    %4030 = vmatpush1.bf16.msra.mxu0 0
    %4031 = vmatprep.subr.bf16.mxu0 0
    %4032 = vmatpush1.bf16.msra.mxu0 0
    %4033 = vmatprep.subr.bf16.mxu0 0
    %4034 = vmatpush1.bf16.msra.mxu0 0
    %4035 = vmatprep.mubr.bf16.mxu0 0
    %4036 = vmatmul.mubr.bf16.gmra.mrb[0].mxu0 %v3230
    %v4037 = vpop.f32.mrb[0].mxu0
    %v4038 = vadd.f32 0.0, %v4037
    %v4039 = vpop.f32.mrb[0].mxu0
    %v4040 = vpop.f32.mrb[0].mxu0
    %v4041 = vpop.f32.mrb[0].mxu0
    %4042 = vdwg.mxu0
    %v4043 = vadd.f32 %v405, %v4038
    %v4044 = vtanh.pop %v4043
    %v4045 = vpack.c.bf16 %v4044, %v4044
    %v4046 = vunpack.c.l.bf16 %v4045
    %4047 = vst [vmem:[%s10] sm:$0xff] %v4046
    %v4048 = vld [vmem:[#allocation7] sm:$0xf]
    %v4049 = vld [vmem:[#allocation7 + $0x4] sm:$0xf]
    %v4050 = vld [vmem:[#allocation7 + $0x8] sm:$0xf]
    %v4051 = vld [vmem:[#allocation7 + $0xc] sm:$0xf]
    %v4052 = vld [vmem:[#allocation7 + $0x10] sm:$0xf]
    %v4053 = vld [vmem:[#allocation7 + $0x14] sm:$0xf]
    %v4054 = vld [vmem:[#allocation7 + $0x18] sm:$0xf]
    %v4055 = vld [vmem:[#allocation7 + $0x1c] sm:$0xf]
    %v4056 = vld [vmem:[#allocation7 + $0x20] sm:$0xf]
    %v4057 = vld [vmem:[#allocation7 + $0x24] sm:$0xf]
    %v4058 = vld [vmem:[#allocation7 + $0x28] sm:$0xf]
    %v4059 = vld [vmem:[#allocation7 + $0x2c] sm:$0xf]
    %v4060 = vld [vmem:[#allocation7 + $0x30] sm:$0xf]
    %v4061 = vld [vmem:[#allocation7 + $0x34] sm:$0xf]
    %v4062 = vld [vmem:[#allocation7 + $0x38] sm:$0xf]
    %v4063 = vld [vmem:[#allocation7 + $0x3c] sm:$0xf]
    %v4064 = vld [vmem:[#allocation7 + $0x40] sm:$0xf]
    %v4065 = vld [vmem:[#allocation7 + $0x44] sm:$0xf]
    %v4066 = vld [vmem:[#allocation7 + $0x48] sm:$0xf]
    %v4067 = vld [vmem:[#allocation7 + $0x4c] sm:$0xf]
    %v4068 = vld [vmem:[#allocation7 + $0x50] sm:$0xf]
    %v4069 = vld [vmem:[#allocation7 + $0x54] sm:$0xf]
    %v4070 = vld [vmem:[#allocation7 + $0x58] sm:$0xf]
    %v4071 = vld [vmem:[#allocation7 + $0x5c] sm:$0xf]
    %v4072 = vld [vmem:[#allocation7 + $0x60] sm:$0xf]
    %v4073 = vld [vmem:[#allocation7 + $0x64] sm:$0xf]
    %v4074 = vld [vmem:[#allocation7 + $0x68] sm:$0xf]
    %v4075 = vld [vmem:[#allocation7 + $0x6c] sm:$0xf]
    %v4076 = vld [vmem:[#allocation7 + $0x70] sm:$0xf]
    %v4077 = vld [vmem:[#allocation7 + $0x74] sm:$0xf]
    %v4078 = vld [vmem:[#allocation7 + $0x78] sm:$0xf]
    %v4079 = vld [vmem:[#allocation7 + $0x7c] sm:$0xf]
    %v4080 = vld [vmem:[%s601] sm:$0x1]
    %v4082 = vlaneseq
    %v4083 = vshrl.u32 %v4082, 7
    %v4084 = vsub.s32 0, %v4083
    %v4085 = vrot.slane %v4080, %v4084
    %v4119 = vunpack.c.l.b16 %v4048
    %v4120 = vunpack.c.l.b16 %v4049
    %v4121 = vunpack.c.l.b16 %v4050
    %v4122 = vunpack.c.l.b16 %v4051
    %v4123 = vunpack.c.l.b16 %v4052
    %v4124 = vunpack.c.l.b16 %v4053
    %v4125 = vunpack.c.l.b16 %v4054
    %v4126 = vunpack.c.l.b16 %v4055
    %v4127 = vunpack.c.l.b16 %v4056
    %v4128 = vunpack.c.l.b16 %v4057
    %v4129 = vunpack.c.l.b16 %v4058
    %v4130 = vunpack.c.l.b16 %v4059
    %v4131 = vunpack.c.l.b16 %v4060
    %v4132 = vunpack.c.l.b16 %v4061
    %v4133 = vunpack.c.l.b16 %v4062
    %v4134 = vunpack.c.l.b16 %v4063
    %v4135 = vunpack.c.l.b16 %v4064
    %v4136 = vunpack.c.l.b16 %v4065
    %v4137 = vunpack.c.l.b16 %v4066
    %v4138 = vunpack.c.l.b16 %v4067
    %v4139 = vunpack.c.l.b16 %v4068
    %v4140 = vunpack.c.l.b16 %v4069
    %v4141 = vunpack.c.l.b16 %v4070
    %v4142 = vunpack.c.l.b16 %v4071
    %v4143 = vunpack.c.l.b16 %v4072
    %v4144 = vunpack.c.l.b16 %v4073
    %v4145 = vunpack.c.l.b16 %v4074
    %v4146 = vunpack.c.l.b16 %v4075
    %v4147 = vunpack.c.l.b16 %v4076
    %v4148 = vunpack.c.l.b16 %v4077
    %v4149 = vunpack.c.l.b16 %v4078
    %v4150 = vunpack.c.l.b16 %v4079
    %v4151 = vpack.c.b16 %v4120, %v4119
    %v4152 = vpack.c.b16 %v4122, %v4121
    %v4153 = vpack.c.b16 %v4124, %v4123
    %v4154 = vpack.c.b16 %v4126, %v4125
    %v4155 = vpack.c.b16 %v4128, %v4127
    %v4156 = vpack.c.b16 %v4130, %v4129
    %v4157 = vpack.c.b16 %v4132, %v4131
    %v4158 = vpack.c.b16 %v4134, %v4133
    %v4159 = vpack.c.b16 %v4136, %v4135
    %v4160 = vpack.c.b16 %v4138, %v4137
    %v4161 = vpack.c.b16 %v4140, %v4139
    %v4162 = vpack.c.b16 %v4142, %v4141
    %v4163 = vpack.c.b16 %v4144, %v4143
    %v4164 = vpack.c.b16 %v4146, %v4145
    %v4165 = vpack.c.b16 %v4148, %v4147
    %v4166 = vpack.c.b16 %v4150, %v4149
    %4183 = vmatprep.subr.bf16.mxu0 0
    %4184 = vmatpush1.bf16.msra.mxu0 %v4151
    %4185 = vmatprep.subr.bf16.mxu0 0
    %4186 = vmatpush1.bf16.msra.mxu0 %v4152
    %4187 = vmatprep.subr.bf16.mxu0 0
    %4188 = vmatpush1.bf16.msra.mxu0 %v4153
    %4189 = vmatprep.subr.bf16.mxu0 0
    %4190 = vmatpush1.bf16.msra.mxu0 %v4154
    %4191 = vmatprep.subr.bf16.mxu0 0
    %4192 = vmatpush1.bf16.msra.mxu0 %v4155
    %4193 = vmatprep.subr.bf16.mxu0 0
    %4194 = vmatpush1.bf16.msra.mxu0 %v4156
    %4195 = vmatprep.subr.bf16.mxu0 0
    %4196 = vmatpush1.bf16.msra.mxu0 %v4157
    %4197 = vmatprep.subr.bf16.mxu0 0
    %4198 = vmatpush1.bf16.msra.mxu0 %v4158
    %4199 = vmatprep.subr.bf16.mxu0 0
    %4200 = vmatpush1.bf16.msra.mxu0 %v4159
    %4201 = vmatprep.subr.bf16.mxu0 0
    %4202 = vmatpush1.bf16.msra.mxu0 %v4160
    %4203 = vmatprep.subr.bf16.mxu0 0
    %4204 = vmatpush1.bf16.msra.mxu0 %v4161
    %4205 = vmatprep.subr.bf16.mxu0 0
    %4206 = vmatpush1.bf16.msra.mxu0 %v4162
    %4207 = vmatprep.subr.bf16.mxu0 0
    %4208 = vmatpush1.bf16.msra.mxu0 %v4163
    %4209 = vmatprep.subr.bf16.mxu0 0
    %4210 = vmatpush1.bf16.msra.mxu0 %v4164
    %4211 = vmatprep.subr.bf16.mxu0 0
    %4212 = vmatpush1.bf16.msra.mxu0 %v4165
    %4213 = vmatprep.subr.bf16.mxu0 0
    %4214 = vmatpush1.bf16.msra.mxu0 %v4166
    %4215 = vmatprep.mubr.bf16.mxu0 %v3407
    %4216 = vmatmul.mubr.bf16.gmra.mrb[0].mxu0 %v3230
    %v4217 = vpop.f32.mrb[0].mxu0
    %v4218 = vadd.f32 %v4085, %v4217
    %v4219 = vpop.f32.mrb[0].mxu0
    %v4220 = vpop.f32.mrb[0].mxu0
    %v4221 = vpop.f32.mrb[0].mxu0
    %4222 = vdwg.mxu0
    %v4223 = vtanh.pop %v4218
    %v4224 = vpack.c.bf16 %v4223, %v4223
    %v4225 = vld [vmem:[%s832] sm:$0xf]
    %v4226 = vld [vmem:[%s832 + $0x4] sm:$0xf]
    %v4227 = vld [vmem:[%s832 + $0x8] sm:$0xf]
    %v4228 = vld [vmem:[%s832 + $0xc] sm:$0xf]
    %v4229 = vld [vmem:[%s832 + $0x10] sm:$0xf]
    %v4230 = vld [vmem:[%s832 + $0x14] sm:$0xf]
    %v4231 = vld [vmem:[%s832 + $0x18] sm:$0xf]
    %v4232 = vld [vmem:[%s832 + $0x1c] sm:$0xf]
    %v4233 = vld [vmem:[%s832 + $0x20] sm:$0xf]
    %v4234 = vld [vmem:[%s832 + $0x24] sm:$0xf]
    %v4235 = vld [vmem:[%s832 + $0x28] sm:$0xf]
    %v4236 = vld [vmem:[%s832 + $0x2c] sm:$0xf]
    %v4237 = vld [vmem:[%s832 + $0x30] sm:$0xf]
    %v4238 = vld [vmem:[%s832 + $0x34] sm:$0xf]
    %v4239 = vld [vmem:[%s832 + $0x38] sm:$0xf]
    %v4240 = vld [vmem:[%s832 + $0x3c] sm:$0xf]
    %v4241 = vld [vmem:[%s832 + $0x40] sm:$0xf]
    %v4242 = vld [vmem:[%s832 + $0x44] sm:$0xf]
    %v4243 = vld [vmem:[%s832 + $0x48] sm:$0xf]
    %v4244 = vld [vmem:[%s832 + $0x4c] sm:$0xf]
    %v4245 = vld [vmem:[%s832 + $0x50] sm:$0xf]
    %v4246 = vld [vmem:[%s832 + $0x54] sm:$0xf]
    %v4247 = vld [vmem:[%s832 + $0x58] sm:$0xf]
    %v4248 = vld [vmem:[%s832 + $0x5c] sm:$0xf]
    %v4249 = vld [vmem:[%s832 + $0x60] sm:$0xf]
    %v4250 = vld [vmem:[%s832 + $0x64] sm:$0xf]
    %v4251 = vld [vmem:[%s832 + $0x68] sm:$0xf]
    %v4252 = vld [vmem:[%s832 + $0x6c] sm:$0xf]
    %v4253 = vld [vmem:[%s832 + $0x70] sm:$0xf]
    %v4254 = vld [vmem:[%s832 + $0x74] sm:$0xf]
    %v4255 = vld [vmem:[%s832 + $0x78] sm:$0xf]
    %v4256 = vld [vmem:[%s832 + $0x7c] sm:$0xf]
    %v4257 = vld [vmem:[%s865] sm:$0x1]
    %v4259 = vlaneseq
    %v4260 = vshrl.u32 %v4259, 7
    %v4261 = vsub.s32 0, %v4260
    %v4262 = vrot.slane %v4257, %v4261
    %v4296 = vunpack.c.l.b16 %v4225
    %v4297 = vunpack.c.l.b16 %v4226
    %v4298 = vunpack.c.l.b16 %v4227
    %v4299 = vunpack.c.l.b16 %v4228
    %v4300 = vunpack.c.l.b16 %v4229
    %v4301 = vunpack.c.l.b16 %v4230
    %v4302 = vunpack.c.l.b16 %v4231
    %v4303 = vunpack.c.l.b16 %v4232
    %v4304 = vunpack.c.l.b16 %v4233
    %v4305 = vunpack.c.l.b16 %v4234
    %v4306 = vunpack.c.l.b16 %v4235
    %v4307 = vunpack.c.l.b16 %v4236
    %v4308 = vunpack.c.l.b16 %v4237
    %v4309 = vunpack.c.l.b16 %v4238
    %v4310 = vunpack.c.l.b16 %v4239
    %v4311 = vunpack.c.l.b16 %v4240
    %v4312 = vunpack.c.l.b16 %v4241
    %v4313 = vunpack.c.l.b16 %v4242
    %v4314 = vunpack.c.l.b16 %v4243
    %v4315 = vunpack.c.l.b16 %v4244
    %v4316 = vunpack.c.l.b16 %v4245
    %v4317 = vunpack.c.l.b16 %v4246
    %v4318 = vunpack.c.l.b16 %v4247
    %v4319 = vunpack.c.l.b16 %v4248
    %v4320 = vunpack.c.l.b16 %v4249
    %v4321 = vunpack.c.l.b16 %v4250
    %v4322 = vunpack.c.l.b16 %v4251
    %v4323 = vunpack.c.l.b16 %v4252
    %v4324 = vunpack.c.l.b16 %v4253
    %v4325 = vunpack.c.l.b16 %v4254
    %v4326 = vunpack.c.l.b16 %v4255
    %v4327 = vunpack.c.l.b16 %v4256
    %v4328 = vpack.c.b16 %v4297, %v4296
    %v4329 = vpack.c.b16 %v4299, %v4298
    %v4330 = vpack.c.b16 %v4301, %v4300
    %v4331 = vpack.c.b16 %v4303, %v4302
    %v4332 = vpack.c.b16 %v4305, %v4304
    %v4333 = vpack.c.b16 %v4307, %v4306
    %v4334 = vpack.c.b16 %v4309, %v4308
    %v4335 = vpack.c.b16 %v4311, %v4310
    %v4336 = vpack.c.b16 %v4313, %v4312
    %v4337 = vpack.c.b16 %v4315, %v4314
    %v4338 = vpack.c.b16 %v4317, %v4316
    %v4339 = vpack.c.b16 %v4319, %v4318
    %v4340 = vpack.c.b16 %v4321, %v4320
    %v4341 = vpack.c.b16 %v4323, %v4322
    %v4342 = vpack.c.b16 %v4325, %v4324
    %v4343 = vpack.c.b16 %v4327, %v4326
    %4360 = vmatprep.subr.bf16.mxu0 0
    %4361 = vmatpush1.bf16.msra.mxu0 %v4328
    %4362 = vmatprep.subr.bf16.mxu0 0
    %4363 = vmatpush1.bf16.msra.mxu0 %v4329
    %4364 = vmatprep.subr.bf16.mxu0 0
    %4365 = vmatpush1.bf16.msra.mxu0 %v4330
    %4366 = vmatprep.subr.bf16.mxu0 0
    %4367 = vmatpush1.bf16.msra.mxu0 %v4331
    %4368 = vmatprep.subr.bf16.mxu0 0
    %4369 = vmatpush1.bf16.msra.mxu0 %v4332
    %4370 = vmatprep.subr.bf16.mxu0 0
    %4371 = vmatpush1.bf16.msra.mxu0 %v4333
    %4372 = vmatprep.subr.bf16.mxu0 0
    %4373 = vmatpush1.bf16.msra.mxu0 %v4334
    %4374 = vmatprep.subr.bf16.mxu0 0
    %4375 = vmatpush1.bf16.msra.mxu0 %v4335
    %4376 = vmatprep.subr.bf16.mxu0 0
    %4377 = vmatpush1.bf16.msra.mxu0 %v4336
    %4378 = vmatprep.subr.bf16.mxu0 0
    %4379 = vmatpush1.bf16.msra.mxu0 %v4337
    %4380 = vmatprep.subr.bf16.mxu0 0
    %4381 = vmatpush1.bf16.msra.mxu0 %v4338
    %4382 = vmatprep.subr.bf16.mxu0 0
    %4383 = vmatpush1.bf16.msra.mxu0 %v4339
    %4384 = vmatprep.subr.bf16.mxu0 0
    %4385 = vmatpush1.bf16.msra.mxu0 %v4340
    %4386 = vmatprep.subr.bf16.mxu0 0
    %4387 = vmatpush1.bf16.msra.mxu0 %v4341
    %4388 = vmatprep.subr.bf16.mxu0 0
    %4389 = vmatpush1.bf16.msra.mxu0 %v4342
    %4390 = vmatprep.subr.bf16.mxu0 0
    %4391 = vmatpush1.bf16.msra.mxu0 %v4343
    %4392 = vmatprep.mubr.bf16.mxu0 %v3584
    %4393 = vmatmul.mubr.bf16.gmra.mrb[0].mxu0 %v3407
    %v4394 = vpop.f32.mrb[0].mxu0
    %v4395 = vadd.f32 %v4262, %v4394
    %v4396 = vpop.f32.mrb[0].mxu0
    %v4397 = vpop.f32.mrb[0].mxu0
    %v4398 = vpop.f32.mrb[0].mxu0
    %4399 = vdwg.mxu0
    %v4400 = vtanh.pop %v4395
    %v4401 = vpack.c.bf16 %v4400, %v4400
    %v4402 = vld [vmem:[%s1138] sm:$0xf]
    %v4403 = vld [vmem:[%s1138 + $0x4] sm:$0xf]
    %v4404 = vld [vmem:[%s1138 + $0x8] sm:$0xf]
    %v4405 = vld [vmem:[%s1138 + $0xc] sm:$0xf]
    %v4406 = vld [vmem:[%s1138 + $0x10] sm:$0xf]
    %v4407 = vld [vmem:[%s1138 + $0x14] sm:$0xf]
    %v4408 = vld [vmem:[%s1138 + $0x18] sm:$0xf]
    %v4409 = vld [vmem:[%s1138 + $0x1c] sm:$0xf]
    %v4410 = vld [vmem:[%s1138 + $0x20] sm:$0xf]
    %v4411 = vld [vmem:[%s1138 + $0x24] sm:$0xf]
    %v4412 = vld [vmem:[%s1138 + $0x28] sm:$0xf]
    %v4413 = vld [vmem:[%s1138 + $0x2c] sm:$0xf]
    %v4414 = vld [vmem:[%s1138 + $0x30] sm:$0xf]
    %v4415 = vld [vmem:[%s1138 + $0x34] sm:$0xf]
    %v4416 = vld [vmem:[%s1138 + $0x38] sm:$0xf]
    %v4417 = vld [vmem:[%s1138 + $0x3c] sm:$0xf]
    %v4418 = vld [vmem:[%s1138 + $0x40] sm:$0xf]
    %v4419 = vld [vmem:[%s1138 + $0x44] sm:$0xf]
    %v4420 = vld [vmem:[%s1138 + $0x48] sm:$0xf]
    %v4421 = vld [vmem:[%s1138 + $0x4c] sm:$0xf]
    %v4422 = vld [vmem:[%s1138 + $0x50] sm:$0xf]
    %v4423 = vld [vmem:[%s1138 + $0x54] sm:$0xf]
    %v4424 = vld [vmem:[%s1138 + $0x58] sm:$0xf]
    %v4425 = vld [vmem:[%s1138 + $0x5c] sm:$0xf]
    %v4426 = vld [vmem:[%s1138 + $0x60] sm:$0xf]
    %v4427 = vld [vmem:[%s1138 + $0x64] sm:$0xf]
    %v4428 = vld [vmem:[%s1138 + $0x68] sm:$0xf]
    %v4429 = vld [vmem:[%s1138 + $0x6c] sm:$0xf]
    %v4430 = vld [vmem:[%s1138 + $0x70] sm:$0xf]
    %v4431 = vld [vmem:[%s1138 + $0x74] sm:$0xf]
    %v4432 = vld [vmem:[%s1138 + $0x78] sm:$0xf]
    %v4433 = vld [vmem:[%s1138 + $0x7c] sm:$0xf]
    %v4434 = vld [vmem:[%s1171] sm:$0x1]
    %v4436 = vlaneseq
    %v4437 = vshrl.u32 %v4436, 7
    %v4438 = vsub.s32 0, %v4437
    %v4439 = vrot.slane %v4434, %v4438
    %v4473 = vunpack.c.l.b16 %v4402
    %v4474 = vunpack.c.l.b16 %v4403
    %v4475 = vunpack.c.l.b16 %v4404
    %v4476 = vunpack.c.l.b16 %v4405
    %v4477 = vunpack.c.l.b16 %v4406
    %v4478 = vunpack.c.l.b16 %v4407
    %v4479 = vunpack.c.l.b16 %v4408
    %v4480 = vunpack.c.l.b16 %v4409
    %v4481 = vunpack.c.l.b16 %v4410
    %v4482 = vunpack.c.l.b16 %v4411
    %v4483 = vunpack.c.l.b16 %v4412
    %v4484 = vunpack.c.l.b16 %v4413
    %v4485 = vunpack.c.l.b16 %v4414
    %v4486 = vunpack.c.l.b16 %v4415
    %v4487 = vunpack.c.l.b16 %v4416
    %v4488 = vunpack.c.l.b16 %v4417
    %v4489 = vunpack.c.l.b16 %v4418
    %v4490 = vunpack.c.l.b16 %v4419
    %v4491 = vunpack.c.l.b16 %v4420
    %v4492 = vunpack.c.l.b16 %v4421
    %v4493 = vunpack.c.l.b16 %v4422
    %v4494 = vunpack.c.l.b16 %v4423
    %v4495 = vunpack.c.l.b16 %v4424
    %v4496 = vunpack.c.l.b16 %v4425
    %v4497 = vunpack.c.l.b16 %v4426
    %v4498 = vunpack.c.l.b16 %v4427
    %v4499 = vunpack.c.l.b16 %v4428
    %v4500 = vunpack.c.l.b16 %v4429
    %v4501 = vunpack.c.l.b16 %v4430
    %v4502 = vunpack.c.l.b16 %v4431
    %v4503 = vunpack.c.l.b16 %v4432
    %v4504 = vunpack.c.l.b16 %v4433
    %v4505 = vpack.c.b16 %v4474, %v4473
    %v4506 = vpack.c.b16 %v4476, %v4475
    %v4507 = vpack.c.b16 %v4478, %v4477
    %v4508 = vpack.c.b16 %v4480, %v4479
    %v4509 = vpack.c.b16 %v4482, %v4481
    %v4510 = vpack.c.b16 %v4484, %v4483
    %v4511 = vpack.c.b16 %v4486, %v4485
    %v4512 = vpack.c.b16 %v4488, %v4487
    %v4513 = vpack.c.b16 %v4490, %v4489
    %v4514 = vpack.c.b16 %v4492, %v4491
    %v4515 = vpack.c.b16 %v4494, %v4493
    %v4516 = vpack.c.b16 %v4496, %v4495
    %v4517 = vpack.c.b16 %v4498, %v4497
    %v4518 = vpack.c.b16 %v4500, %v4499
    %v4519 = vpack.c.b16 %v4502, %v4501
    %v4520 = vpack.c.b16 %v4504, %v4503
    %4537 = vmatprep.subr.bf16.mxu0 0
    %4538 = vmatpush1.bf16.msra.mxu0 %v4505
    %4539 = vmatprep.subr.bf16.mxu0 0
    %4540 = vmatpush1.bf16.msra.mxu0 %v4506
    %4541 = vmatprep.subr.bf16.mxu0 0
    %4542 = vmatpush1.bf16.msra.mxu0 %v4507
    %4543 = vmatprep.subr.bf16.mxu0 0
    %4544 = vmatpush1.bf16.msra.mxu0 %v4508
    %4545 = vmatprep.subr.bf16.mxu0 0
    %4546 = vmatpush1.bf16.msra.mxu0 %v4509
    %4547 = vmatprep.subr.bf16.mxu0 0
    %4548 = vmatpush1.bf16.msra.mxu0 %v4510
    %4549 = vmatprep.subr.bf16.mxu0 0
    %4550 = vmatpush1.bf16.msra.mxu0 %v4511
    %4551 = vmatprep.subr.bf16.mxu0 0
    %4552 = vmatpush1.bf16.msra.mxu0 %v4512
    %4553 = vmatprep.subr.bf16.mxu0 0
    %4554 = vmatpush1.bf16.msra.mxu0 %v4513
    %4555 = vmatprep.subr.bf16.mxu0 0
    %4556 = vmatpush1.bf16.msra.mxu0 %v4514
    %4557 = vmatprep.subr.bf16.mxu0 0
    %4558 = vmatpush1.bf16.msra.mxu0 %v4515
    %4559 = vmatprep.subr.bf16.mxu0 0
    %4560 = vmatpush1.bf16.msra.mxu0 %v4516
    %4561 = vmatprep.subr.bf16.mxu0 0
    %4562 = vmatpush1.bf16.msra.mxu0 %v4517
    %4563 = vmatprep.subr.bf16.mxu0 0
    %4564 = vmatpush1.bf16.msra.mxu0 %v4518
    %4565 = vmatprep.subr.bf16.mxu0 0
    %4566 = vmatpush1.bf16.msra.mxu0 %v4519
    %4567 = vmatprep.subr.bf16.mxu0 0
    %4568 = vmatpush1.bf16.msra.mxu0 %v4520
    %4569 = vmatprep.mubr.bf16.mxu0 %v3761
    %4570 = vmatmul.mubr.bf16.gmra.mrb[0].mxu0 %v3584
    %v4571 = vpop.f32.mrb[0].mxu0
    %v4572 = vadd.f32 %v4439, %v4571
    %v4573 = vpop.f32.mrb[0].mxu0
    %v4574 = vpop.f32.mrb[0].mxu0
    %v4575 = vpop.f32.mrb[0].mxu0
    %4576 = vdwg.mxu0
    %v4577 = vtanh.pop %v4572
    %v4578 = vpack.c.bf16 %v4577, %v4577
    %v4579 = vld [vmem:[%s7] sm:$0xf]
    %v4580 = vld [vmem:[%s7 + $0x4] sm:$0xf]
    %v4581 = vld [vmem:[%s7 + $0x8] sm:$0xf]
    %v4582 = vld [vmem:[%s7 + $0xc] sm:$0xf]
    %v4583 = vld [vmem:[%s7 + $0x10] sm:$0xf]
    %v4584 = vld [vmem:[%s7 + $0x14] sm:$0xf]
    %v4585 = vld [vmem:[%s7 + $0x18] sm:$0xf]
    %v4586 = vld [vmem:[%s7 + $0x1c] sm:$0xf]
    %v4587 = vld [vmem:[%s7 + $0x20] sm:$0xf]
    %v4588 = vld [vmem:[%s7 + $0x24] sm:$0xf]
    %v4589 = vld [vmem:[%s7 + $0x28] sm:$0xf]
    %v4590 = vld [vmem:[%s7 + $0x2c] sm:$0xf]
    %v4591 = vld [vmem:[%s7 + $0x30] sm:$0xf]
    %v4592 = vld [vmem:[%s7 + $0x34] sm:$0xf]
    %v4593 = vld [vmem:[%s7 + $0x38] sm:$0xf]
    %v4594 = vld [vmem:[%s7 + $0x3c] sm:$0xf]
    %v4595 = vld [vmem:[%s8] sm:$0x1]
    %v4597 = vlaneseq
    %v4598 = vshrl.u32 %v4597, 7
    %v4599 = vsub.s32 0, %v4598
    %v4600 = vrot.slane %v4595, %v4599
    %v4618 = vunpack.c.l.b16 %v4579
    %v4619 = vunpack.c.l.b16 %v4580
    %v4620 = vunpack.c.l.b16 %v4581
    %v4621 = vunpack.c.l.b16 %v4582
    %v4622 = vunpack.c.l.b16 %v4583
    %v4623 = vunpack.c.l.b16 %v4584
    %v4624 = vunpack.c.l.b16 %v4585
    %v4625 = vunpack.c.l.b16 %v4586
    %v4626 = vunpack.c.l.b16 %v4587
    %v4627 = vunpack.c.l.b16 %v4588
    %v4628 = vunpack.c.l.b16 %v4589
    %v4629 = vunpack.c.l.b16 %v4590
    %v4630 = vunpack.c.l.b16 %v4591
    %v4631 = vunpack.c.l.b16 %v4592
    %v4632 = vunpack.c.l.b16 %v4593
    %v4633 = vunpack.c.l.b16 %v4594
    %v4634 = vpack.c.b16 %v4619, %v4618
    %v4635 = vpack.c.b16 %v4621, %v4620
    %v4636 = vpack.c.b16 %v4623, %v4622
    %v4637 = vpack.c.b16 %v4625, %v4624
    %v4638 = vpack.c.b16 %v4627, %v4626
    %v4639 = vpack.c.b16 %v4629, %v4628
    %v4640 = vpack.c.b16 %v4631, %v4630
    %v4641 = vpack.c.b16 %v4633, %v4632
    %4650 = vmatprep.subr.bf16.mxu0 0
    %4651 = vmatpush1.bf16.msra.mxu0 %v4634
    %4652 = vmatprep.subr.bf16.mxu0 0
    %4653 = vmatpush1.bf16.msra.mxu0 %v4635
    %4654 = vmatprep.subr.bf16.mxu0 0
    %4655 = vmatpush1.bf16.msra.mxu0 %v4636
    %4656 = vmatprep.subr.bf16.mxu0 0
    %4657 = vmatpush1.bf16.msra.mxu0 %v4637
    %4658 = vmatprep.subr.bf16.mxu0 0
    %4659 = vmatpush1.bf16.msra.mxu0 %v4638
    %4660 = vmatprep.subr.bf16.mxu0 0
    %4661 = vmatpush1.bf16.msra.mxu0 %v4639
    %4662 = vmatprep.subr.bf16.mxu0 0
    %4663 = vmatpush1.bf16.msra.mxu0 %v4640
    %4664 = vmatprep.subr.bf16.mxu0 0
    %4665 = vmatpush1.bf16.msra.mxu0 %v4641
    %4666 = vmatprep.subr.bf16.mxu0 0
    %4667 = vmatpush1.bf16.msra.mxu0 0
    %4668 = vmatprep.subr.bf16.mxu0 0
    %4669 = vmatpush1.bf16.msra.mxu0 0
    %4670 = vmatprep.subr.bf16.mxu0 0
    %4671 = vmatpush1.bf16.msra.mxu0 0
    %4672 = vmatprep.subr.bf16.mxu0 0
    %4673 = vmatpush1.bf16.msra.mxu0 0
    %4674 = vmatprep.subr.bf16.mxu0 0
    %4675 = vmatpush1.bf16.msra.mxu0 0
    %4676 = vmatprep.subr.bf16.mxu0 0
    %4677 = vmatpush1.bf16.msra.mxu0 0
    %4678 = vmatprep.subr.bf16.mxu0 0
    %4679 = vmatpush1.bf16.msra.mxu0 0
    %4680 = vmatprep.subr.bf16.mxu0 0
    %4681 = vmatpush1.bf16.msra.mxu0 0
    %4682 = vmatprep.mubr.bf16.mxu0 0
    %4683 = vmatmul.mubr.bf16.gmra.mrb[0].mxu0 %v4578
    %v4684 = vpop.f32.mrb[0].mxu0
    %v4685 = vadd.f32 %v4600, %v4684
    %v4686 = vpop.f32.mrb[0].mxu0
    %v4687 = vpop.f32.mrb[0].mxu0
    %v4688 = vpop.f32.mrb[0].mxu0
    %4689 = vdwg.mxu0
    %v4691 = vcombine.high %v4685, %v4685
    %v4693 = vunpack.c.l.s4 1966171168
    %v4694 = vunpack.c.0.s8 %v4693
    %v4695 = vlaneseq
    %v4696 = vshrl.u32 %v4695, 7
    %v4697 = vsub.s32 %v4694, %v4696
    %v4698 = vrot.slane %v4685, %v4697
    %v4700 = vunpack.c.l.s4 1966171168
    %v4701 = vunpack.c.0.s8 %v4700
    %v4702 = vlaneseq
    %v4703 = vshrl.u32 %v4702, 7
    %v4704 = vsub.s32 %v4701, %v4703
    %v4705 = vrot.slane %v4691, %v4704
    %v4706 = vcombine.high %v4698, %v4698
    %v4707 = vcombine.high %v4705, %v4705
    %v4709 = vunpack.c.l.s4 1966171168
    %v4710 = vunpack.c.0.s8 %v4709
    %v4711 = vlaneseq
    %v4712 = vshrl.u32 %v4711, 7
    %v4713 = vsub.s32 %v4710, %v4712
    %v4714 = vrot.slane %v4698, %v4713
    %v4716 = vunpack.c.l.s4 1966171168
    %v4717 = vunpack.c.0.s8 %v4716
    %v4718 = vlaneseq
    %v4719 = vshrl.u32 %v4718, 7
    %v4720 = vsub.s32 %v4717, %v4719
    %v4721 = vrot.slane %v4705, %v4720
    %v4723 = vunpack.c.l.s4 1966171168
    %v4724 = vunpack.c.0.s8 %v4723
    %v4725 = vlaneseq
    %v4726 = vshrl.u32 %v4725, 7
    %v4727 = vsub.s32 %v4724, %v4726
    %v4728 = vrot.slane %v4706, %v4727
    %v4730 = vunpack.c.l.s4 1966171168
    %v4731 = vunpack.c.0.s8 %v4730
    %v4732 = vlaneseq
    %v4733 = vshrl.u32 %v4732, 7
    %v4734 = vsub.s32 %v4731, %v4733
    %v4735 = vrot.slane %v4707, %v4734
    %v4736 = vcombine.high %v4714, %v4714
    %v4737 = vcombine.high %v4721, %v4721
    %v4738 = vcombine.high %v4728, %v4728
    %v4739 = vcombine.high %v4735, %v4735
    %4748 = vst [vmem:[#allocation8 + $0x4] sm:$0x1] %v4714
    %4749 = vst [vmem:[#allocation8 + $0xc] sm:$0x1] %v4728
    %4750 = vst [vmem:[#allocation8 + $0x14] sm:$0x1] %v4736
    %4751 = vst [vmem:[#allocation8 + $0x1c] sm:$0x1] %v4738
    %4752 = vst [vmem:[#allocation8 + $0x24] sm:$0x1] %v4721
    %4753 = vst [vmem:[#allocation8 + $0x2c] sm:$0x1] %v4735
    %4754 = vst [vmem:[#allocation8 + $0x34] sm:$0x1] %v4737
    %4755 = vst [vmem:[#allocation8 + $0x3c] sm:$0x1] %v4739
    %v4756 = vld [vmem:[#allocation7] sm:$0xf]
    %v4757 = vld [vmem:[#allocation7 + $0x4] sm:$0xf]
    %v4758 = vld [vmem:[#allocation7 + $0x8] sm:$0xf]
    %v4759 = vld [vmem:[#allocation7 + $0xc] sm:$0xf]
    %v4760 = vld [vmem:[#allocation7 + $0x10] sm:$0xf]
    %v4761 = vld [vmem:[#allocation7 + $0x14] sm:$0xf]
    %v4762 = vld [vmem:[#allocation7 + $0x18] sm:$0xf]
    %v4763 = vld [vmem:[#allocation7 + $0x1c] sm:$0xf]
    %v4764 = vld [vmem:[#allocation7 + $0x20] sm:$0xf]
    %v4765 = vld [vmem:[#allocation7 + $0x24] sm:$0xf]
    %v4766 = vld [vmem:[#allocation7 + $0x28] sm:$0xf]
    %v4767 = vld [vmem:[#allocation7 + $0x2c] sm:$0xf]
    %v4768 = vld [vmem:[#allocation7 + $0x30] sm:$0xf]
    %v4769 = vld [vmem:[#allocation7 + $0x34] sm:$0xf]
    %v4770 = vld [vmem:[#allocation7 + $0x38] sm:$0xf]
    %v4771 = vld [vmem:[#allocation7 + $0x3c] sm:$0xf]
    %v4772 = vld [vmem:[#allocation7 + $0x40] sm:$0xf]
    %v4773 = vld [vmem:[#allocation7 + $0x44] sm:$0xf]
    %v4774 = vld [vmem:[#allocation7 + $0x48] sm:$0xf]
    %v4775 = vld [vmem:[#allocation7 + $0x4c] sm:$0xf]
    %v4776 = vld [vmem:[#allocation7 + $0x50] sm:$0xf]
    %v4777 = vld [vmem:[#allocation7 + $0x54] sm:$0xf]
    %v4778 = vld [vmem:[#allocation7 + $0x58] sm:$0xf]
    %v4779 = vld [vmem:[#allocation7 + $0x5c] sm:$0xf]
    %v4780 = vld [vmem:[#allocation7 + $0x60] sm:$0xf]
    %v4781 = vld [vmem:[#allocation7 + $0x64] sm:$0xf]
    %v4782 = vld [vmem:[#allocation7 + $0x68] sm:$0xf]
    %v4783 = vld [vmem:[#allocation7 + $0x6c] sm:$0xf]
    %v4784 = vld [vmem:[#allocation7 + $0x70] sm:$0xf]
    %v4785 = vld [vmem:[#allocation7 + $0x74] sm:$0xf]
    %v4786 = vld [vmem:[#allocation7 + $0x78] sm:$0xf]
    %v4787 = vld [vmem:[#allocation7 + $0x7c] sm:$0xf]
    %v4788 = vld [vmem:[%s601] sm:$0x1]
    %v4790 = vlaneseq
    %v4791 = vshrl.u32 %v4790, 7
    %v4792 = vsub.s32 0, %v4791
    %v4793 = vrot.slane %v4788, %v4792
    %v4827 = vunpack.c.l.b16 %v4756
    %v4828 = vunpack.c.l.b16 %v4757
    %v4829 = vunpack.c.l.b16 %v4758
    %v4830 = vunpack.c.l.b16 %v4759
    %v4831 = vunpack.c.l.b16 %v4760
    %v4832 = vunpack.c.l.b16 %v4761
    %v4833 = vunpack.c.l.b16 %v4762
    %v4834 = vunpack.c.l.b16 %v4763
    %v4835 = vunpack.c.l.b16 %v4764
    %v4836 = vunpack.c.l.b16 %v4765
    %v4837 = vunpack.c.l.b16 %v4766
    %v4838 = vunpack.c.l.b16 %v4767
    %v4839 = vunpack.c.l.b16 %v4768
    %v4840 = vunpack.c.l.b16 %v4769
    %v4841 = vunpack.c.l.b16 %v4770
    %v4842 = vunpack.c.l.b16 %v4771
    %v4843 = vunpack.c.l.b16 %v4772
    %v4844 = vunpack.c.l.b16 %v4773
    %v4845 = vunpack.c.l.b16 %v4774
    %v4846 = vunpack.c.l.b16 %v4775
    %v4847 = vunpack.c.l.b16 %v4776
    %v4848 = vunpack.c.l.b16 %v4777
    %v4849 = vunpack.c.l.b16 %v4778
    %v4850 = vunpack.c.l.b16 %v4779
    %v4851 = vunpack.c.l.b16 %v4780
    %v4852 = vunpack.c.l.b16 %v4781
    %v4853 = vunpack.c.l.b16 %v4782
    %v4854 = vunpack.c.l.b16 %v4783
    %v4855 = vunpack.c.l.b16 %v4784
    %v4856 = vunpack.c.l.b16 %v4785
    %v4857 = vunpack.c.l.b16 %v4786
    %v4858 = vunpack.c.l.b16 %v4787
    %v4859 = vpack.c.b16 %v4828, %v4827
    %v4860 = vpack.c.b16 %v4830, %v4829
    %v4861 = vpack.c.b16 %v4832, %v4831
    %v4862 = vpack.c.b16 %v4834, %v4833
    %v4863 = vpack.c.b16 %v4836, %v4835
    %v4864 = vpack.c.b16 %v4838, %v4837
    %v4865 = vpack.c.b16 %v4840, %v4839
    %v4866 = vpack.c.b16 %v4842, %v4841
    %v4867 = vpack.c.b16 %v4844, %v4843
    %v4868 = vpack.c.b16 %v4846, %v4845
    %v4869 = vpack.c.b16 %v4848, %v4847
    %v4870 = vpack.c.b16 %v4850, %v4849
    %v4871 = vpack.c.b16 %v4852, %v4851
    %v4872 = vpack.c.b16 %v4854, %v4853
    %v4873 = vpack.c.b16 %v4856, %v4855
    %v4874 = vpack.c.b16 %v4858, %v4857
    %4891 = vmatprep.subr.bf16.mxu0 0
    %4892 = vmatpush1.bf16.msra.mxu0 %v4859
    %4893 = vmatprep.subr.bf16.mxu0 0
    %4894 = vmatpush1.bf16.msra.mxu0 %v4860
    %4895 = vmatprep.subr.bf16.mxu0 0
    %4896 = vmatpush1.bf16.msra.mxu0 %v4861
    %4897 = vmatprep.subr.bf16.mxu0 0
    %4898 = vmatpush1.bf16.msra.mxu0 %v4862
    %4899 = vmatprep.subr.bf16.mxu0 0
    %4900 = vmatpush1.bf16.msra.mxu0 %v4863
    %4901 = vmatprep.subr.bf16.mxu0 0
    %4902 = vmatpush1.bf16.msra.mxu0 %v4864
    %4903 = vmatprep.subr.bf16.mxu0 0
    %4904 = vmatpush1.bf16.msra.mxu0 %v4865
    %4905 = vmatprep.subr.bf16.mxu0 0
    %4906 = vmatpush1.bf16.msra.mxu0 %v4866
    %4907 = vmatprep.subr.bf16.mxu0 0
    %4908 = vmatpush1.bf16.msra.mxu0 %v4867
    %4909 = vmatprep.subr.bf16.mxu0 0
    %4910 = vmatpush1.bf16.msra.mxu0 %v4868
    %4911 = vmatprep.subr.bf16.mxu0 0
    %4912 = vmatpush1.bf16.msra.mxu0 %v4869
    %4913 = vmatprep.subr.bf16.mxu0 0
    %4914 = vmatpush1.bf16.msra.mxu0 %v4870
    %4915 = vmatprep.subr.bf16.mxu0 0
    %4916 = vmatpush1.bf16.msra.mxu0 %v4871
    %4917 = vmatprep.subr.bf16.mxu0 0
    %4918 = vmatpush1.bf16.msra.mxu0 %v4872
    %4919 = vmatprep.subr.bf16.mxu0 0
    %4920 = vmatpush1.bf16.msra.mxu0 %v4873
    %4921 = vmatprep.subr.bf16.mxu0 0
    %4922 = vmatpush1.bf16.msra.mxu0 %v4874
    %4923 = vmatprep.mubr.bf16.mxu0 %v4224
    %4924 = vmatmul.mubr.bf16.gmra.mrb[0].mxu0 %v4045
    %v4925 = vpop.f32.mrb[0].mxu0
    %v4926 = vadd.f32 %v4793, %v4925
    %v4927 = vpop.f32.mrb[0].mxu0
    %v4928 = vpop.f32.mrb[0].mxu0
    %v4929 = vpop.f32.mrb[0].mxu0
    %4930 = vdwg.mxu0
    %v4931 = vtanh.pop %v4926
    %v4932 = vpack.c.bf16 %v4931, %v4931
    %v4933 = vunpack.c.l.bf16 %v4932
    %s4934 = scalar_lea.vmem %s10, 8
    %4935 = vst [vmem:[%s4934] sm:$0xff] %v4933
    %v4936 = vld [vmem:[%s832] sm:$0xf]
    %v4937 = vld [vmem:[%s832 + $0x4] sm:$0xf]
    %v4938 = vld [vmem:[%s832 + $0x8] sm:$0xf]
    %v4939 = vld [vmem:[%s832 + $0xc] sm:$0xf]
    %v4940 = vld [vmem:[%s832 + $0x10] sm:$0xf]
    %v4941 = vld [vmem:[%s832 + $0x14] sm:$0xf]
    %v4942 = vld [vmem:[%s832 + $0x18] sm:$0xf]
    %v4943 = vld [vmem:[%s832 + $0x1c] sm:$0xf]
    %v4944 = vld [vmem:[%s832 + $0x20] sm:$0xf]
    %v4945 = vld [vmem:[%s832 + $0x24] sm:$0xf]
    %v4946 = vld [vmem:[%s832 + $0x28] sm:$0xf]
    %v4947 = vld [vmem:[%s832 + $0x2c] sm:$0xf]
    %v4948 = vld [vmem:[%s832 + $0x30] sm:$0xf]
    %v4949 = vld [vmem:[%s832 + $0x34] sm:$0xf]
    %v4950 = vld [vmem:[%s832 + $0x38] sm:$0xf]
    %v4951 = vld [vmem:[%s832 + $0x3c] sm:$0xf]
    %v4952 = vld [vmem:[%s832 + $0x40] sm:$0xf]
    %v4953 = vld [vmem:[%s832 + $0x44] sm:$0xf]
    %v4954 = vld [vmem:[%s832 + $0x48] sm:$0xf]
    %v4955 = vld [vmem:[%s832 + $0x4c] sm:$0xf]
    %v4956 = vld [vmem:[%s832 + $0x50] sm:$0xf]
    %v4957 = vld [vmem:[%s832 + $0x54] sm:$0xf]
    %v4958 = vld [vmem:[%s832 + $0x58] sm:$0xf]
    %v4959 = vld [vmem:[%s832 + $0x5c] sm:$0xf]
    %v4960 = vld [vmem:[%s832 + $0x60] sm:$0xf]
    %v4961 = vld [vmem:[%s832 + $0x64] sm:$0xf]
    %v4962 = vld [vmem:[%s832 + $0x68] sm:$0xf]
    %v4963 = vld [vmem:[%s832 + $0x6c] sm:$0xf]
    %v4964 = vld [vmem:[%s832 + $0x70] sm:$0xf]
    %v4965 = vld [vmem:[%s832 + $0x74] sm:$0xf]
    %v4966 = vld [vmem:[%s832 + $0x78] sm:$0xf]
    %v4967 = vld [vmem:[%s832 + $0x7c] sm:$0xf]
    %v4968 = vld [vmem:[%s865] sm:$0x1]
    %v4970 = vlaneseq
    %v4971 = vshrl.u32 %v4970, 7
    %v4972 = vsub.s32 0, %v4971
    %v4973 = vrot.slane %v4968, %v4972
    %v5007 = vunpack.c.l.b16 %v4936
    %v5008 = vunpack.c.l.b16 %v4937
    %v5009 = vunpack.c.l.b16 %v4938
    %v5010 = vunpack.c.l.b16 %v4939
    %v5011 = vunpack.c.l.b16 %v4940
    %v5012 = vunpack.c.l.b16 %v4941
    %v5013 = vunpack.c.l.b16 %v4942
    %v5014 = vunpack.c.l.b16 %v4943
    %v5015 = vunpack.c.l.b16 %v4944
    %v5016 = vunpack.c.l.b16 %v4945
    %v5017 = vunpack.c.l.b16 %v4946
    %v5018 = vunpack.c.l.b16 %v4947
    %v5019 = vunpack.c.l.b16 %v4948
    %v5020 = vunpack.c.l.b16 %v4949
    %v5021 = vunpack.c.l.b16 %v4950
    %v5022 = vunpack.c.l.b16 %v4951
    %v5023 = vunpack.c.l.b16 %v4952
    %v5024 = vunpack.c.l.b16 %v4953
    %v5025 = vunpack.c.l.b16 %v4954
    %v5026 = vunpack.c.l.b16 %v4955
    %v5027 = vunpack.c.l.b16 %v4956
    %v5028 = vunpack.c.l.b16 %v4957
    %v5029 = vunpack.c.l.b16 %v4958
    %v5030 = vunpack.c.l.b16 %v4959
    %v5031 = vunpack.c.l.b16 %v4960
    %v5032 = vunpack.c.l.b16 %v4961
    %v5033 = vunpack.c.l.b16 %v4962
    %v5034 = vunpack.c.l.b16 %v4963
    %v5035 = vunpack.c.l.b16 %v4964
    %v5036 = vunpack.c.l.b16 %v4965
    %v5037 = vunpack.c.l.b16 %v4966
    %v5038 = vunpack.c.l.b16 %v4967
    %v5039 = vpack.c.b16 %v5008, %v5007
    %v5040 = vpack.c.b16 %v5010, %v5009
    %v5041 = vpack.c.b16 %v5012, %v5011
    %v5042 = vpack.c.b16 %v5014, %v5013
    %v5043 = vpack.c.b16 %v5016, %v5015
    %v5044 = vpack.c.b16 %v5018, %v5017
    %v5045 = vpack.c.b16 %v5020, %v5019
    %v5046 = vpack.c.b16 %v5022, %v5021
    %v5047 = vpack.c.b16 %v5024, %v5023
    %v5048 = vpack.c.b16 %v5026, %v5025
    %v5049 = vpack.c.b16 %v5028, %v5027
    %v5050 = vpack.c.b16 %v5030, %v5029
    %v5051 = vpack.c.b16 %v5032, %v5031
    %v5052 = vpack.c.b16 %v5034, %v5033
    %v5053 = vpack.c.b16 %v5036, %v5035
    %v5054 = vpack.c.b16 %v5038, %v5037
    %5071 = vmatprep.subr.bf16.mxu0 0
    %5072 = vmatpush1.bf16.msra.mxu0 %v5039
    %5073 = vmatprep.subr.bf16.mxu0 0
    %5074 = vmatpush1.bf16.msra.mxu0 %v5040
    %5075 = vmatprep.subr.bf16.mxu0 0
    %5076 = vmatpush1.bf16.msra.mxu0 %v5041
    %5077 = vmatprep.subr.bf16.mxu0 0
    %5078 = vmatpush1.bf16.msra.mxu0 %v5042
    %5079 = vmatprep.subr.bf16.mxu0 0
    %5080 = vmatpush1.bf16.msra.mxu0 %v5043
    %5081 = vmatprep.subr.bf16.mxu0 0
    %5082 = vmatpush1.bf16.msra.mxu0 %v5044
    %5083 = vmatprep.subr.bf16.mxu0 0
    %5084 = vmatpush1.bf16.msra.mxu0 %v5045
    %5085 = vmatprep.subr.bf16.mxu0 0
    %5086 = vmatpush1.bf16.msra.mxu0 %v5046
    %5087 = vmatprep.subr.bf16.mxu0 0
    %5088 = vmatpush1.bf16.msra.mxu0 %v5047
    %5089 = vmatprep.subr.bf16.mxu0 0
    %5090 = vmatpush1.bf16.msra.mxu0 %v5048
    %5091 = vmatprep.subr.bf16.mxu0 0
    %5092 = vmatpush1.bf16.msra.mxu0 %v5049
    %5093 = vmatprep.subr.bf16.mxu0 0
    %5094 = vmatpush1.bf16.msra.mxu0 %v5050
    %5095 = vmatprep.subr.bf16.mxu0 0
    %5096 = vmatpush1.bf16.msra.mxu0 %v5051
    %5097 = vmatprep.subr.bf16.mxu0 0
    %5098 = vmatpush1.bf16.msra.mxu0 %v5052
    %5099 = vmatprep.subr.bf16.mxu0 0
    %5100 = vmatpush1.bf16.msra.mxu0 %v5053
    %5101 = vmatprep.subr.bf16.mxu0 0
    %5102 = vmatpush1.bf16.msra.mxu0 %v5054
    %5103 = vmatprep.mubr.bf16.mxu0 %v4401
    %5104 = vmatmul.mubr.bf16.gmra.mrb[0].mxu0 %v4224
    %v5105 = vpop.f32.mrb[0].mxu0
    %v5106 = vadd.f32 %v4973, %v5105
    %v5107 = vpop.f32.mrb[0].mxu0
    %v5108 = vpop.f32.mrb[0].mxu0
    %v5109 = vpop.f32.mrb[0].mxu0
    %5110 = vdwg.mxu0
    %v5111 = vtanh.pop %v5106
    %v5112 = vpack.c.bf16 %v5111, %v5111
    %v5113 = vld [vmem:[%s1138] sm:$0xf]
    %v5114 = vld [vmem:[%s1138 + $0x4] sm:$0xf]
    %v5115 = vld [vmem:[%s1138 + $0x8] sm:$0xf]
    %v5116 = vld [vmem:[%s1138 + $0xc] sm:$0xf]
    %v5117 = vld [vmem:[%s1138 + $0x10] sm:$0xf]
    %v5118 = vld [vmem:[%s1138 + $0x14] sm:$0xf]
    %v5119 = vld [vmem:[%s1138 + $0x18] sm:$0xf]
    %v5120 = vld [vmem:[%s1138 + $0x1c] sm:$0xf]
    %v5121 = vld [vmem:[%s1138 + $0x20] sm:$0xf]
    %v5122 = vld [vmem:[%s1138 + $0x24] sm:$0xf]
    %v5123 = vld [vmem:[%s1138 + $0x28] sm:$0xf]
    %v5124 = vld [vmem:[%s1138 + $0x2c] sm:$0xf]
    %v5125 = vld [vmem:[%s1138 + $0x30] sm:$0xf]
    %v5126 = vld [vmem:[%s1138 + $0x34] sm:$0xf]
    %v5127 = vld [vmem:[%s1138 + $0x38] sm:$0xf]
    %v5128 = vld [vmem:[%s1138 + $0x3c] sm:$0xf]
    %v5129 = vld [vmem:[%s1138 + $0x40] sm:$0xf]
    %v5130 = vld [vmem:[%s1138 + $0x44] sm:$0xf]
    %v5131 = vld [vmem:[%s1138 + $0x48] sm:$0xf]
    %v5132 = vld [vmem:[%s1138 + $0x4c] sm:$0xf]
    %v5133 = vld [vmem:[%s1138 + $0x50] sm:$0xf]
    %v5134 = vld [vmem:[%s1138 + $0x54] sm:$0xf]
    %v5135 = vld [vmem:[%s1138 + $0x58] sm:$0xf]
    %v5136 = vld [vmem:[%s1138 + $0x5c] sm:$0xf]
    %v5137 = vld [vmem:[%s1138 + $0x60] sm:$0xf]
    %v5138 = vld [vmem:[%s1138 + $0x64] sm:$0xf]
    %v5139 = vld [vmem:[%s1138 + $0x68] sm:$0xf]
    %v5140 = vld [vmem:[%s1138 + $0x6c] sm:$0xf]
    %v5141 = vld [vmem:[%s1138 + $0x70] sm:$0xf]
    %v5142 = vld [vmem:[%s1138 + $0x74] sm:$0xf]
    %v5143 = vld [vmem:[%s1138 + $0x78] sm:$0xf]
    %v5144 = vld [vmem:[%s1138 + $0x7c] sm:$0xf]
    %v5145 = vld [vmem:[%s1171] sm:$0x1]
    %v5147 = vlaneseq
    %v5148 = vshrl.u32 %v5147, 7
    %v5149 = vsub.s32 0, %v5148
    %v5150 = vrot.slane %v5145, %v5149
    %v5184 = vunpack.c.l.b16 %v5113
    %v5185 = vunpack.c.l.b16 %v5114
    %v5186 = vunpack.c.l.b16 %v5115
    %v5187 = vunpack.c.l.b16 %v5116
    %v5188 = vunpack.c.l.b16 %v5117
    %v5189 = vunpack.c.l.b16 %v5118
    %v5190 = vunpack.c.l.b16 %v5119
    %v5191 = vunpack.c.l.b16 %v5120
    %v5192 = vunpack.c.l.b16 %v5121
    %v5193 = vunpack.c.l.b16 %v5122
    %v5194 = vunpack.c.l.b16 %v5123
    %v5195 = vunpack.c.l.b16 %v5124
    %v5196 = vunpack.c.l.b16 %v5125
    %v5197 = vunpack.c.l.b16 %v5126
    %v5198 = vunpack.c.l.b16 %v5127
    %v5199 = vunpack.c.l.b16 %v5128
    %v5200 = vunpack.c.l.b16 %v5129
    %v5201 = vunpack.c.l.b16 %v5130
    %v5202 = vunpack.c.l.b16 %v5131
    %v5203 = vunpack.c.l.b16 %v5132
    %v5204 = vunpack.c.l.b16 %v5133
    %v5205 = vunpack.c.l.b16 %v5134
    %v5206 = vunpack.c.l.b16 %v5135
    %v5207 = vunpack.c.l.b16 %v5136
    %v5208 = vunpack.c.l.b16 %v5137
    %v5209 = vunpack.c.l.b16 %v5138
    %v5210 = vunpack.c.l.b16 %v5139
    %v5211 = vunpack.c.l.b16 %v5140
    %v5212 = vunpack.c.l.b16 %v5141
    %v5213 = vunpack.c.l.b16 %v5142
    %v5214 = vunpack.c.l.b16 %v5143
    %v5215 = vunpack.c.l.b16 %v5144
    %v5216 = vpack.c.b16 %v5185, %v5184
    %v5217 = vpack.c.b16 %v5187, %v5186
    %v5218 = vpack.c.b16 %v5189, %v5188
    %v5219 = vpack.c.b16 %v5191, %v5190
    %v5220 = vpack.c.b16 %v5193, %v5192
    %v5221 = vpack.c.b16 %v5195, %v5194
    %v5222 = vpack.c.b16 %v5197, %v5196
    %v5223 = vpack.c.b16 %v5199, %v5198
    %v5224 = vpack.c.b16 %v5201, %v5200
    %v5225 = vpack.c.b16 %v5203, %v5202
    %v5226 = vpack.c.b16 %v5205, %v5204
    %v5227 = vpack.c.b16 %v5207, %v5206
    %v5228 = vpack.c.b16 %v5209, %v5208
    %v5229 = vpack.c.b16 %v5211, %v5210
    %v5230 = vpack.c.b16 %v5213, %v5212
    %v5231 = vpack.c.b16 %v5215, %v5214
    %5248 = vmatprep.subr.bf16.mxu0 0
    %5249 = vmatpush1.bf16.msra.mxu0 %v5216
    %5250 = vmatprep.subr.bf16.mxu0 0
    %5251 = vmatpush1.bf16.msra.mxu0 %v5217
    %5252 = vmatprep.subr.bf16.mxu0 0
    %5253 = vmatpush1.bf16.msra.mxu0 %v5218
    %5254 = vmatprep.subr.bf16.mxu0 0
    %5255 = vmatpush1.bf16.msra.mxu0 %v5219
    %5256 = vmatprep.subr.bf16.mxu0 0
    %5257 = vmatpush1.bf16.msra.mxu0 %v5220
    %5258 = vmatprep.subr.bf16.mxu0 0
    %5259 = vmatpush1.bf16.msra.mxu0 %v5221
    %5260 = vmatprep.subr.bf16.mxu0 0
    %5261 = vmatpush1.bf16.msra.mxu0 %v5222
    %5262 = vmatprep.subr.bf16.mxu0 0
    %5263 = vmatpush1.bf16.msra.mxu0 %v5223
    %5264 = vmatprep.subr.bf16.mxu0 0
    %5265 = vmatpush1.bf16.msra.mxu0 %v5224
    %5266 = vmatprep.subr.bf16.mxu0 0
    %5267 = vmatpush1.bf16.msra.mxu0 %v5225
    %5268 = vmatprep.subr.bf16.mxu0 0
    %5269 = vmatpush1.bf16.msra.mxu0 %v5226
    %5270 = vmatprep.subr.bf16.mxu0 0
    %5271 = vmatpush1.bf16.msra.mxu0 %v5227
    %5272 = vmatprep.subr.bf16.mxu0 0
    %5273 = vmatpush1.bf16.msra.mxu0 %v5228
    %5274 = vmatprep.subr.bf16.mxu0 0
    %5275 = vmatpush1.bf16.msra.mxu0 %v5229
    %5276 = vmatprep.subr.bf16.mxu0 0
    %5277 = vmatpush1.bf16.msra.mxu0 %v5230
    %5278 = vmatprep.subr.bf16.mxu0 0
    %5279 = vmatpush1.bf16.msra.mxu0 %v5231
    %5280 = vmatprep.mubr.bf16.mxu0 %v4578
    %5281 = vmatmul.mubr.bf16.gmra.mrb[0].mxu0 %v4401
    %v5282 = vpop.f32.mrb[0].mxu0
    %v5283 = vadd.f32 %v5150, %v5282
    %v5284 = vpop.f32.mrb[0].mxu0
    %v5285 = vpop.f32.mrb[0].mxu0
    %v5286 = vpop.f32.mrb[0].mxu0
    %5287 = vdwg.mxu0
    %v5288 = vtanh.pop %v5283
    %v5289 = vpack.c.bf16 %v5288, %v5288
    %v5290 = vld [vmem:[%s7] sm:$0xf]
    %v5291 = vld [vmem:[%s7 + $0x4] sm:$0xf]
    %v5292 = vld [vmem:[%s7 + $0x8] sm:$0xf]
    %v5293 = vld [vmem:[%s7 + $0xc] sm:$0xf]
    %v5294 = vld [vmem:[%s7 + $0x10] sm:$0xf]
    %v5295 = vld [vmem:[%s7 + $0x14] sm:$0xf]
    %v5296 = vld [vmem:[%s7 + $0x18] sm:$0xf]
    %v5297 = vld [vmem:[%s7 + $0x1c] sm:$0xf]
    %v5298 = vld [vmem:[%s7 + $0x20] sm:$0xf]
    %v5299 = vld [vmem:[%s7 + $0x24] sm:$0xf]
    %v5300 = vld [vmem:[%s7 + $0x28] sm:$0xf]
    %v5301 = vld [vmem:[%s7 + $0x2c] sm:$0xf]
    %v5302 = vld [vmem:[%s7 + $0x30] sm:$0xf]
    %v5303 = vld [vmem:[%s7 + $0x34] sm:$0xf]
    %v5304 = vld [vmem:[%s7 + $0x38] sm:$0xf]
    %v5305 = vld [vmem:[%s7 + $0x3c] sm:$0xf]
    %v5306 = vld [vmem:[%s8] sm:$0x1]
    %v5308 = vlaneseq
    %v5309 = vshrl.u32 %v5308, 7
    %v5310 = vsub.s32 0, %v5309
    %v5311 = vrot.slane %v5306, %v5310
    %v5329 = vunpack.c.l.b16 %v5290
    %v5330 = vunpack.c.l.b16 %v5291
    %v5331 = vunpack.c.l.b16 %v5292
    %v5332 = vunpack.c.l.b16 %v5293
    %v5333 = vunpack.c.l.b16 %v5294
    %v5334 = vunpack.c.l.b16 %v5295
    %v5335 = vunpack.c.l.b16 %v5296
    %v5336 = vunpack.c.l.b16 %v5297
    %v5337 = vunpack.c.l.b16 %v5298
    %v5338 = vunpack.c.l.b16 %v5299
    %v5339 = vunpack.c.l.b16 %v5300
    %v5340 = vunpack.c.l.b16 %v5301
    %v5341 = vunpack.c.l.b16 %v5302
    %v5342 = vunpack.c.l.b16 %v5303
    %v5343 = vunpack.c.l.b16 %v5304
    %v5344 = vunpack.c.l.b16 %v5305
    %v5345 = vpack.c.b16 %v5330, %v5329
    %v5346 = vpack.c.b16 %v5332, %v5331
    %v5347 = vpack.c.b16 %v5334, %v5333
    %v5348 = vpack.c.b16 %v5336, %v5335
    %v5349 = vpack.c.b16 %v5338, %v5337
    %v5350 = vpack.c.b16 %v5340, %v5339
    %v5351 = vpack.c.b16 %v5342, %v5341
    %v5352 = vpack.c.b16 %v5344, %v5343
    %5361 = vmatprep.subr.bf16.mxu0 0
    %5362 = vmatpush1.bf16.msra.mxu0 %v5345
    %5363 = vmatprep.subr.bf16.mxu0 0
    %5364 = vmatpush1.bf16.msra.mxu0 %v5346
    %5365 = vmatprep.subr.bf16.mxu0 0
    %5366 = vmatpush1.bf16.msra.mxu0 %v5347
    %5367 = vmatprep.subr.bf16.mxu0 0
    %5368 = vmatpush1.bf16.msra.mxu0 %v5348
    %5369 = vmatprep.subr.bf16.mxu0 0
    %5370 = vmatpush1.bf16.msra.mxu0 %v5349
    %5371 = vmatprep.subr.bf16.mxu0 0
    %5372 = vmatpush1.bf16.msra.mxu0 %v5350
    %5373 = vmatprep.subr.bf16.mxu0 0
    %5374 = vmatpush1.bf16.msra.mxu0 %v5351
    %5375 = vmatprep.subr.bf16.mxu0 0
    %5376 = vmatpush1.bf16.msra.mxu0 %v5352
    %5377 = vmatprep.subr.bf16.mxu0 0
    %5378 = vmatpush1.bf16.msra.mxu0 0
    %5379 = vmatprep.subr.bf16.mxu0 0
    %5380 = vmatpush1.bf16.msra.mxu0 0
    %5381 = vmatprep.subr.bf16.mxu0 0
    %5382 = vmatpush1.bf16.msra.mxu0 0
    %5383 = vmatprep.subr.bf16.mxu0 0
    %5384 = vmatpush1.bf16.msra.mxu0 0
    %5385 = vmatprep.subr.bf16.mxu0 0
    %5386 = vmatpush1.bf16.msra.mxu0 0
    %5387 = vmatprep.subr.bf16.mxu0 0
    %5388 = vmatpush1.bf16.msra.mxu0 0
    %5389 = vmatprep.subr.bf16.mxu0 0
    %5390 = vmatpush1.bf16.msra.mxu0 0
    %5391 = vmatprep.subr.bf16.mxu0 0
    %5392 = vmatpush1.bf16.msra.mxu0 0
    %5393 = vmatprep.mubr.bf16.mxu0 0
    %5394 = vmatmul.mubr.bf16.gmra.mrb[0].mxu0 %v5289
    %v5395 = vpop.f32.mrb[0].mxu0
    %v5396 = vadd.f32 %v5311, %v5395
    %v5397 = vpop.f32.mrb[0].mxu0
    %v5398 = vpop.f32.mrb[0].mxu0
    %v5399 = vpop.f32.mrb[0].mxu0
    %5400 = vdwg.mxu0
    %v5402 = vcombine.high %v5396, %v5396
    %v5404 = vunpack.c.l.s4 1966171168
    %v5405 = vunpack.c.0.s8 %v5404
    %v5406 = vlaneseq
    %v5407 = vshrl.u32 %v5406, 7
    %v5408 = vsub.s32 %v5405, %v5407
    %v5409 = vrot.slane %v5396, %v5408
    %v5411 = vunpack.c.l.s4 1966171168
    %v5412 = vunpack.c.0.s8 %v5411
    %v5413 = vlaneseq
    %v5414 = vshrl.u32 %v5413, 7
    %v5415 = vsub.s32 %v5412, %v5414
    %v5416 = vrot.slane %v5402, %v5415
    %v5417 = vcombine.high %v5409, %v5409
    %v5418 = vcombine.high %v5416, %v5416
    %v5420 = vunpack.c.l.s4 1966171168
    %v5421 = vunpack.c.0.s8 %v5420
    %v5422 = vlaneseq
    %v5423 = vshrl.u32 %v5422, 7
    %v5424 = vsub.s32 %v5421, %v5423
    %v5425 = vrot.slane %v5409, %v5424
    %v5427 = vunpack.c.l.s4 1966171168
    %v5428 = vunpack.c.0.s8 %v5427
    %v5429 = vlaneseq
    %v5430 = vshrl.u32 %v5429, 7
    %v5431 = vsub.s32 %v5428, %v5430
    %v5432 = vrot.slane %v5416, %v5431
    %v5434 = vunpack.c.l.s4 1966171168
    %v5435 = vunpack.c.0.s8 %v5434
    %v5436 = vlaneseq
    %v5437 = vshrl.u32 %v5436, 7
    %v5438 = vsub.s32 %v5435, %v5437
    %v5439 = vrot.slane %v5417, %v5438
    %v5441 = vunpack.c.l.s4 1966171168
    %v5442 = vunpack.c.0.s8 %v5441
    %v5443 = vlaneseq
    %v5444 = vshrl.u32 %v5443, 7
    %v5445 = vsub.s32 %v5442, %v5444
    %v5446 = vrot.slane %v5418, %v5445
    %v5447 = vcombine.high %v5425, %v5425
    %v5448 = vcombine.high %v5432, %v5432
    %v5449 = vcombine.high %v5439, %v5439
    %v5450 = vcombine.high %v5446, %v5446
    %5459 = vst [vmem:[#allocation8 + $0x5] sm:$0x1] %v5425
    %5460 = vst [vmem:[#allocation8 + $0xd] sm:$0x1] %v5439
    %5461 = vst [vmem:[#allocation8 + $0x15] sm:$0x1] %v5447
    %5462 = vst [vmem:[#allocation8 + $0x1d] sm:$0x1] %v5449
    %5463 = vst [vmem:[#allocation8 + $0x25] sm:$0x1] %v5432
    %5464 = vst [vmem:[#allocation8 + $0x2d] sm:$0x1] %v5446
    %5465 = vst [vmem:[#allocation8 + $0x35] sm:$0x1] %v5448
    %5466 = vst [vmem:[#allocation8 + $0x3d] sm:$0x1] %v5450
    %v5467 = vld [vmem:[%s832] sm:$0xf]
    %v5468 = vld [vmem:[%s832 + $0x4] sm:$0xf]
    %v5469 = vld [vmem:[%s832 + $0x8] sm:$0xf]
    %v5470 = vld [vmem:[%s832 + $0xc] sm:$0xf]
    %v5471 = vld [vmem:[%s832 + $0x10] sm:$0xf]
    %v5472 = vld [vmem:[%s832 + $0x14] sm:$0xf]
    %v5473 = vld [vmem:[%s832 + $0x18] sm:$0xf]
    %v5474 = vld [vmem:[%s832 + $0x1c] sm:$0xf]
    %v5475 = vld [vmem:[%s832 + $0x20] sm:$0xf]
    %v5476 = vld [vmem:[%s832 + $0x24] sm:$0xf]
    %v5477 = vld [vmem:[%s832 + $0x28] sm:$0xf]
    %v5478 = vld [vmem:[%s832 + $0x2c] sm:$0xf]
    %v5479 = vld [vmem:[%s832 + $0x30] sm:$0xf]
    %v5480 = vld [vmem:[%s832 + $0x34] sm:$0xf]
    %v5481 = vld [vmem:[%s832 + $0x38] sm:$0xf]
    %v5482 = vld [vmem:[%s832 + $0x3c] sm:$0xf]
    %v5483 = vld [vmem:[%s832 + $0x40] sm:$0xf]
    %v5484 = vld [vmem:[%s832 + $0x44] sm:$0xf]
    %v5485 = vld [vmem:[%s832 + $0x48] sm:$0xf]
    %v5486 = vld [vmem:[%s832 + $0x4c] sm:$0xf]
    %v5487 = vld [vmem:[%s832 + $0x50] sm:$0xf]
    %v5488 = vld [vmem:[%s832 + $0x54] sm:$0xf]
    %v5489 = vld [vmem:[%s832 + $0x58] sm:$0xf]
    %v5490 = vld [vmem:[%s832 + $0x5c] sm:$0xf]
    %v5491 = vld [vmem:[%s832 + $0x60] sm:$0xf]
    %v5492 = vld [vmem:[%s832 + $0x64] sm:$0xf]
    %v5493 = vld [vmem:[%s832 + $0x68] sm:$0xf]
    %v5494 = vld [vmem:[%s832 + $0x6c] sm:$0xf]
    %v5495 = vld [vmem:[%s832 + $0x70] sm:$0xf]
    %v5496 = vld [vmem:[%s832 + $0x74] sm:$0xf]
    %v5497 = vld [vmem:[%s832 + $0x78] sm:$0xf]
    %v5498 = vld [vmem:[%s832 + $0x7c] sm:$0xf]
    %v5499 = vld [vmem:[%s865] sm:$0x1]
    %v5501 = vlaneseq
    %v5502 = vshrl.u32 %v5501, 7
    %v5503 = vsub.s32 0, %v5502
    %v5504 = vrot.slane %v5499, %v5503
    %v5538 = vunpack.c.l.b16 %v5467
    %v5539 = vunpack.c.l.b16 %v5468
    %v5540 = vunpack.c.l.b16 %v5469
    %v5541 = vunpack.c.l.b16 %v5470
    %v5542 = vunpack.c.l.b16 %v5471
    %v5543 = vunpack.c.l.b16 %v5472
    %v5544 = vunpack.c.l.b16 %v5473
    %v5545 = vunpack.c.l.b16 %v5474
    %v5546 = vunpack.c.l.b16 %v5475
    %v5547 = vunpack.c.l.b16 %v5476
    %v5548 = vunpack.c.l.b16 %v5477
    %v5549 = vunpack.c.l.b16 %v5478
    %v5550 = vunpack.c.l.b16 %v5479
    %v5551 = vunpack.c.l.b16 %v5480
    %v5552 = vunpack.c.l.b16 %v5481
    %v5553 = vunpack.c.l.b16 %v5482
    %v5554 = vunpack.c.l.b16 %v5483
    %v5555 = vunpack.c.l.b16 %v5484
    %v5556 = vunpack.c.l.b16 %v5485
    %v5557 = vunpack.c.l.b16 %v5486
    %v5558 = vunpack.c.l.b16 %v5487
    %v5559 = vunpack.c.l.b16 %v5488
    %v5560 = vunpack.c.l.b16 %v5489
    %v5561 = vunpack.c.l.b16 %v5490
    %v5562 = vunpack.c.l.b16 %v5491
    %v5563 = vunpack.c.l.b16 %v5492
    %v5564 = vunpack.c.l.b16 %v5493
    %v5565 = vunpack.c.l.b16 %v5494
    %v5566 = vunpack.c.l.b16 %v5495
    %v5567 = vunpack.c.l.b16 %v5496
    %v5568 = vunpack.c.l.b16 %v5497
    %v5569 = vunpack.c.l.b16 %v5498
    %v5570 = vpack.c.b16 %v5539, %v5538
    %v5571 = vpack.c.b16 %v5541, %v5540
    %v5572 = vpack.c.b16 %v5543, %v5542
    %v5573 = vpack.c.b16 %v5545, %v5544
    %v5574 = vpack.c.b16 %v5547, %v5546
    %v5575 = vpack.c.b16 %v5549, %v5548
    %v5576 = vpack.c.b16 %v5551, %v5550
    %v5577 = vpack.c.b16 %v5553, %v5552
    %v5578 = vpack.c.b16 %v5555, %v5554
    %v5579 = vpack.c.b16 %v5557, %v5556
    %v5580 = vpack.c.b16 %v5559, %v5558
    %v5581 = vpack.c.b16 %v5561, %v5560
    %v5582 = vpack.c.b16 %v5563, %v5562
    %v5583 = vpack.c.b16 %v5565, %v5564
    %v5584 = vpack.c.b16 %v5567, %v5566
    %v5585 = vpack.c.b16 %v5569, %v5568
    %5602 = vmatprep.subr.bf16.mxu0 0
    %5603 = vmatpush1.bf16.msra.mxu0 %v5570
    %5604 = vmatprep.subr.bf16.mxu0 0
    %5605 = vmatpush1.bf16.msra.mxu0 %v5571
    %5606 = vmatprep.subr.bf16.mxu0 0
    %5607 = vmatpush1.bf16.msra.mxu0 %v5572
    %5608 = vmatprep.subr.bf16.mxu0 0
    %5609 = vmatpush1.bf16.msra.mxu0 %v5573
    %5610 = vmatprep.subr.bf16.mxu0 0
    %5611 = vmatpush1.bf16.msra.mxu0 %v5574
    %5612 = vmatprep.subr.bf16.mxu0 0
    %5613 = vmatpush1.bf16.msra.mxu0 %v5575
    %5614 = vmatprep.subr.bf16.mxu0 0
    %5615 = vmatpush1.bf16.msra.mxu0 %v5576
    %5616 = vmatprep.subr.bf16.mxu0 0
    %5617 = vmatpush1.bf16.msra.mxu0 %v5577
    %5618 = vmatprep.subr.bf16.mxu0 0
    %5619 = vmatpush1.bf16.msra.mxu0 %v5578
    %5620 = vmatprep.subr.bf16.mxu0 0
    %5621 = vmatpush1.bf16.msra.mxu0 %v5579
    %5622 = vmatprep.subr.bf16.mxu0 0
    %5623 = vmatpush1.bf16.msra.mxu0 %v5580
    %5624 = vmatprep.subr.bf16.mxu0 0
    %5625 = vmatpush1.bf16.msra.mxu0 %v5581
    %5626 = vmatprep.subr.bf16.mxu0 0
    %5627 = vmatpush1.bf16.msra.mxu0 %v5582
    %5628 = vmatprep.subr.bf16.mxu0 0
    %5629 = vmatpush1.bf16.msra.mxu0 %v5583
    %5630 = vmatprep.subr.bf16.mxu0 0
    %5631 = vmatpush1.bf16.msra.mxu0 %v5584
    %5632 = vmatprep.subr.bf16.mxu0 0
    %5633 = vmatpush1.bf16.msra.mxu0 %v5585
    %5634 = vmatprep.mubr.bf16.mxu0 %v5112
    %5635 = vmatmul.mubr.bf16.gmra.mrb[0].mxu0 %v4932
    %v5636 = vpop.f32.mrb[0].mxu0
    %v5637 = vadd.f32 %v5504, %v5636
    %v5638 = vpop.f32.mrb[0].mxu0
    %v5639 = vpop.f32.mrb[0].mxu0
    %v5640 = vpop.f32.mrb[0].mxu0
    %5641 = vdwg.mxu0
    %v5642 = vtanh.pop %v5637
    %v5643 = vpack.c.bf16 %v5642, %v5642
    %v5644 = vunpack.c.l.bf16 %v5643
    %s5645 = scalar_lea.vmem %s10, 16
    %5646 = vst [vmem:[%s5645] sm:$0xff] %v5644
    %v5647 = vld [vmem:[%s1138] sm:$0xf]
    %v5648 = vld [vmem:[%s1138 + $0x4] sm:$0xf]
    %v5649 = vld [vmem:[%s1138 + $0x8] sm:$0xf]
    %v5650 = vld [vmem:[%s1138 + $0xc] sm:$0xf]
    %v5651 = vld [vmem:[%s1138 + $0x10] sm:$0xf]
    %v5652 = vld [vmem:[%s1138 + $0x14] sm:$0xf]
    %v5653 = vld [vmem:[%s1138 + $0x18] sm:$0xf]
    %v5654 = vld [vmem:[%s1138 + $0x1c] sm:$0xf]
    %v5655 = vld [vmem:[%s1138 + $0x20] sm:$0xf]
    %v5656 = vld [vmem:[%s1138 + $0x24] sm:$0xf]
    %v5657 = vld [vmem:[%s1138 + $0x28] sm:$0xf]
    %v5658 = vld [vmem:[%s1138 + $0x2c] sm:$0xf]
    %v5659 = vld [vmem:[%s1138 + $0x30] sm:$0xf]
    %v5660 = vld [vmem:[%s1138 + $0x34] sm:$0xf]
    %v5661 = vld [vmem:[%s1138 + $0x38] sm:$0xf]
    %v5662 = vld [vmem:[%s1138 + $0x3c] sm:$0xf]
    %v5663 = vld [vmem:[%s1138 + $0x40] sm:$0xf]
    %v5664 = vld [vmem:[%s1138 + $0x44] sm:$0xf]
    %v5665 = vld [vmem:[%s1138 + $0x48] sm:$0xf]
    %v5666 = vld [vmem:[%s1138 + $0x4c] sm:$0xf]
    %v5667 = vld [vmem:[%s1138 + $0x50] sm:$0xf]
    %v5668 = vld [vmem:[%s1138 + $0x54] sm:$0xf]
    %v5669 = vld [vmem:[%s1138 + $0x58] sm:$0xf]
    %v5670 = vld [vmem:[%s1138 + $0x5c] sm:$0xf]
    %v5671 = vld [vmem:[%s1138 + $0x60] sm:$0xf]
    %v5672 = vld [vmem:[%s1138 + $0x64] sm:$0xf]
    %v5673 = vld [vmem:[%s1138 + $0x68] sm:$0xf]
    %v5674 = vld [vmem:[%s1138 + $0x6c] sm:$0xf]
    %v5675 = vld [vmem:[%s1138 + $0x70] sm:$0xf]
    %v5676 = vld [vmem:[%s1138 + $0x74] sm:$0xf]
    %v5677 = vld [vmem:[%s1138 + $0x78] sm:$0xf]
    %v5678 = vld [vmem:[%s1138 + $0x7c] sm:$0xf]
    %v5679 = vld [vmem:[%s1171] sm:$0x1]
    %v5681 = vlaneseq
    %v5682 = vshrl.u32 %v5681, 7
    %v5683 = vsub.s32 0, %v5682
    %v5684 = vrot.slane %v5679, %v5683
    %v5718 = vunpack.c.l.b16 %v5647
    %v5719 = vunpack.c.l.b16 %v5648
    %v5720 = vunpack.c.l.b16 %v5649
    %v5721 = vunpack.c.l.b16 %v5650
    %v5722 = vunpack.c.l.b16 %v5651
    %v5723 = vunpack.c.l.b16 %v5652
    %v5724 = vunpack.c.l.b16 %v5653
    %v5725 = vunpack.c.l.b16 %v5654
    %v5726 = vunpack.c.l.b16 %v5655
    %v5727 = vunpack.c.l.b16 %v5656
    %v5728 = vunpack.c.l.b16 %v5657
    %v5729 = vunpack.c.l.b16 %v5658
    %v5730 = vunpack.c.l.b16 %v5659
    %v5731 = vunpack.c.l.b16 %v5660
    %v5732 = vunpack.c.l.b16 %v5661
    %v5733 = vunpack.c.l.b16 %v5662
    %v5734 = vunpack.c.l.b16 %v5663
    %v5735 = vunpack.c.l.b16 %v5664
    %v5736 = vunpack.c.l.b16 %v5665
    %v5737 = vunpack.c.l.b16 %v5666
    %v5738 = vunpack.c.l.b16 %v5667
    %v5739 = vunpack.c.l.b16 %v5668
    %v5740 = vunpack.c.l.b16 %v5669
    %v5741 = vunpack.c.l.b16 %v5670
    %v5742 = vunpack.c.l.b16 %v5671
    %v5743 = vunpack.c.l.b16 %v5672
    %v5744 = vunpack.c.l.b16 %v5673
    %v5745 = vunpack.c.l.b16 %v5674
    %v5746 = vunpack.c.l.b16 %v5675
    %v5747 = vunpack.c.l.b16 %v5676
    %v5748 = vunpack.c.l.b16 %v5677
    %v5749 = vunpack.c.l.b16 %v5678
    %v5750 = vpack.c.b16 %v5719, %v5718
    %v5751 = vpack.c.b16 %v5721, %v5720
    %v5752 = vpack.c.b16 %v5723, %v5722
    %v5753 = vpack.c.b16 %v5725, %v5724
    %v5754 = vpack.c.b16 %v5727, %v5726
    %v5755 = vpack.c.b16 %v5729, %v5728
    %v5756 = vpack.c.b16 %v5731, %v5730
    %v5757 = vpack.c.b16 %v5733, %v5732
    %v5758 = vpack.c.b16 %v5735, %v5734
    %v5759 = vpack.c.b16 %v5737, %v5736
    %v5760 = vpack.c.b16 %v5739, %v5738
    %v5761 = vpack.c.b16 %v5741, %v5740
    %v5762 = vpack.c.b16 %v5743, %v5742
    %v5763 = vpack.c.b16 %v5745, %v5744
    %v5764 = vpack.c.b16 %v5747, %v5746
    %v5765 = vpack.c.b16 %v5749, %v5748
    %5782 = vmatprep.subr.bf16.mxu0 0
    %5783 = vmatpush1.bf16.msra.mxu0 %v5750
    %5784 = vmatprep.subr.bf16.mxu0 0
    %5785 = vmatpush1.bf16.msra.mxu0 %v5751
    %5786 = vmatprep.subr.bf16.mxu0 0
    %5787 = vmatpush1.bf16.msra.mxu0 %v5752
    %5788 = vmatprep.subr.bf16.mxu0 0
    %5789 = vmatpush1.bf16.msra.mxu0 %v5753
    %5790 = vmatprep.subr.bf16.mxu0 0
    %5791 = vmatpush1.bf16.msra.mxu0 %v5754
    %5792 = vmatprep.subr.bf16.mxu0 0
    %5793 = vmatpush1.bf16.msra.mxu0 %v5755
    %5794 = vmatprep.subr.bf16.mxu0 0
    %5795 = vmatpush1.bf16.msra.mxu0 %v5756
    %5796 = vmatprep.subr.bf16.mxu0 0
    %5797 = vmatpush1.bf16.msra.mxu0 %v5757
    %5798 = vmatprep.subr.bf16.mxu0 0
    %5799 = vmatpush1.bf16.msra.mxu0 %v5758
    %5800 = vmatprep.subr.bf16.mxu0 0
    %5801 = vmatpush1.bf16.msra.mxu0 %v5759
    %5802 = vmatprep.subr.bf16.mxu0 0
    %5803 = vmatpush1.bf16.msra.mxu0 %v5760
    %5804 = vmatprep.subr.bf16.mxu0 0
    %5805 = vmatpush1.bf16.msra.mxu0 %v5761
    %5806 = vmatprep.subr.bf16.mxu0 0
    %5807 = vmatpush1.bf16.msra.mxu0 %v5762
    %5808 = vmatprep.subr.bf16.mxu0 0
    %5809 = vmatpush1.bf16.msra.mxu0 %v5763
    %5810 = vmatprep.subr.bf16.mxu0 0
    %5811 = vmatpush1.bf16.msra.mxu0 %v5764
    %5812 = vmatprep.subr.bf16.mxu0 0
    %5813 = vmatpush1.bf16.msra.mxu0 %v5765
    %5814 = vmatprep.mubr.bf16.mxu0 %v5289
    %5815 = vmatmul.mubr.bf16.gmra.mrb[0].mxu0 %v5112
    %v5816 = vpop.f32.mrb[0].mxu0
    %v5817 = vadd.f32 %v5684, %v5816
    %v5818 = vpop.f32.mrb[0].mxu0
    %v5819 = vpop.f32.mrb[0].mxu0
    %v5820 = vpop.f32.mrb[0].mxu0
    %5821 = vdwg.mxu0
    %v5822 = vtanh.pop %v5817
    %v5823 = vpack.c.bf16 %v5822, %v5822
    %v5824 = vld [vmem:[%s7] sm:$0xf]
    %v5825 = vld [vmem:[%s7 + $0x4] sm:$0xf]
    %v5826 = vld [vmem:[%s7 + $0x8] sm:$0xf]
    %v5827 = vld [vmem:[%s7 + $0xc] sm:$0xf]
    %v5828 = vld [vmem:[%s7 + $0x10] sm:$0xf]
    %v5829 = vld [vmem:[%s7 + $0x14] sm:$0xf]
    %v5830 = vld [vmem:[%s7 + $0x18] sm:$0xf]
    %v5831 = vld [vmem:[%s7 + $0x1c] sm:$0xf]
    %v5832 = vld [vmem:[%s7 + $0x20] sm:$0xf]
    %v5833 = vld [vmem:[%s7 + $0x24] sm:$0xf]
    %v5834 = vld [vmem:[%s7 + $0x28] sm:$0xf]
    %v5835 = vld [vmem:[%s7 + $0x2c] sm:$0xf]
    %v5836 = vld [vmem:[%s7 + $0x30] sm:$0xf]
    %v5837 = vld [vmem:[%s7 + $0x34] sm:$0xf]
    %v5838 = vld [vmem:[%s7 + $0x38] sm:$0xf]
    %v5839 = vld [vmem:[%s7 + $0x3c] sm:$0xf]
    %v5840 = vld [vmem:[%s8] sm:$0x1]
    %v5842 = vlaneseq
    %v5843 = vshrl.u32 %v5842, 7
    %v5844 = vsub.s32 0, %v5843
    %v5845 = vrot.slane %v5840, %v5844
    %v5863 = vunpack.c.l.b16 %v5824
    %v5864 = vunpack.c.l.b16 %v5825
    %v5865 = vunpack.c.l.b16 %v5826
    %v5866 = vunpack.c.l.b16 %v5827
    %v5867 = vunpack.c.l.b16 %v5828
    %v5868 = vunpack.c.l.b16 %v5829
    %v5869 = vunpack.c.l.b16 %v5830
    %v5870 = vunpack.c.l.b16 %v5831
    %v5871 = vunpack.c.l.b16 %v5832
    %v5872 = vunpack.c.l.b16 %v5833
    %v5873 = vunpack.c.l.b16 %v5834
    %v5874 = vunpack.c.l.b16 %v5835
    %v5875 = vunpack.c.l.b16 %v5836
    %v5876 = vunpack.c.l.b16 %v5837
    %v5877 = vunpack.c.l.b16 %v5838
    %v5878 = vunpack.c.l.b16 %v5839
    %v5879 = vpack.c.b16 %v5864, %v5863
    %v5880 = vpack.c.b16 %v5866, %v5865
    %v5881 = vpack.c.b16 %v5868, %v5867
    %v5882 = vpack.c.b16 %v5870, %v5869
    %v5883 = vpack.c.b16 %v5872, %v5871
    %v5884 = vpack.c.b16 %v5874, %v5873
    %v5885 = vpack.c.b16 %v5876, %v5875
    %v5886 = vpack.c.b16 %v5878, %v5877
    %5895 = vmatprep.subr.bf16.mxu0 0
    %5896 = vmatpush1.bf16.msra.mxu0 %v5879
    %5897 = vmatprep.subr.bf16.mxu0 0
    %5898 = vmatpush1.bf16.msra.mxu0 %v5880
    %5899 = vmatprep.subr.bf16.mxu0 0
    %5900 = vmatpush1.bf16.msra.mxu0 %v5881
    %5901 = vmatprep.subr.bf16.mxu0 0
    %5902 = vmatpush1.bf16.msra.mxu0 %v5882
    %5903 = vmatprep.subr.bf16.mxu0 0
    %5904 = vmatpush1.bf16.msra.mxu0 %v5883
    %5905 = vmatprep.subr.bf16.mxu0 0
    %5906 = vmatpush1.bf16.msra.mxu0 %v5884
    %5907 = vmatprep.subr.bf16.mxu0 0
    %5908 = vmatpush1.bf16.msra.mxu0 %v5885
    %5909 = vmatprep.subr.bf16.mxu0 0
    %5910 = vmatpush1.bf16.msra.mxu0 %v5886
    %5911 = vmatprep.subr.bf16.mxu0 0
    %5912 = vmatpush1.bf16.msra.mxu0 0
    %5913 = vmatprep.subr.bf16.mxu0 0
    %5914 = vmatpush1.bf16.msra.mxu0 0
    %5915 = vmatprep.subr.bf16.mxu0 0
    %5916 = vmatpush1.bf16.msra.mxu0 0
    %5917 = vmatprep.subr.bf16.mxu0 0
    %5918 = vmatpush1.bf16.msra.mxu0 0
    %5919 = vmatprep.subr.bf16.mxu0 0
    %5920 = vmatpush1.bf16.msra.mxu0 0
    %5921 = vmatprep.subr.bf16.mxu0 0
    %5922 = vmatpush1.bf16.msra.mxu0 0
    %5923 = vmatprep.subr.bf16.mxu0 0
    %5924 = vmatpush1.bf16.msra.mxu0 0
    %5925 = vmatprep.subr.bf16.mxu0 0
    %5926 = vmatpush1.bf16.msra.mxu0 0
    %5927 = vmatprep.mubr.bf16.mxu0 0
    %5928 = vmatmul.mubr.bf16.gmra.mrb[0].mxu0 %v5823
    %v5929 = vpop.f32.mrb[0].mxu0
    %v5930 = vadd.f32 %v5845, %v5929
    %v5931 = vpop.f32.mrb[0].mxu0
    %v5932 = vpop.f32.mrb[0].mxu0
    %v5933 = vpop.f32.mrb[0].mxu0
    %5934 = vdwg.mxu0
    %v5936 = vcombine.high %v5930, %v5930
    %v5938 = vunpack.c.l.s4 1966171168
    %v5939 = vunpack.c.0.s8 %v5938
    %v5940 = vlaneseq
    %v5941 = vshrl.u32 %v5940, 7
    %v5942 = vsub.s32 %v5939, %v5941
    %v5943 = vrot.slane %v5930, %v5942
    %v5945 = vunpack.c.l.s4 1966171168
    %v5946 = vunpack.c.0.s8 %v5945
    %v5947 = vlaneseq
    %v5948 = vshrl.u32 %v5947, 7
    %v5949 = vsub.s32 %v5946, %v5948
    %v5950 = vrot.slane %v5936, %v5949
    %v5951 = vcombine.high %v5943, %v5943
    %v5952 = vcombine.high %v5950, %v5950
    %v5954 = vunpack.c.l.s4 1966171168
    %v5955 = vunpack.c.0.s8 %v5954
    %v5956 = vlaneseq
    %v5957 = vshrl.u32 %v5956, 7
    %v5958 = vsub.s32 %v5955, %v5957
    %v5959 = vrot.slane %v5943, %v5958
    %v5961 = vunpack.c.l.s4 1966171168
    %v5962 = vunpack.c.0.s8 %v5961
    %v5963 = vlaneseq
    %v5964 = vshrl.u32 %v5963, 7
    %v5965 = vsub.s32 %v5962, %v5964
    %v5966 = vrot.slane %v5950, %v5965
    %v5968 = vunpack.c.l.s4 1966171168
    %v5969 = vunpack.c.0.s8 %v5968
    %v5970 = vlaneseq
    %v5971 = vshrl.u32 %v5970, 7
    %v5972 = vsub.s32 %v5969, %v5971
    %v5973 = vrot.slane %v5951, %v5972
    %v5975 = vunpack.c.l.s4 1966171168
    %v5976 = vunpack.c.0.s8 %v5975
    %v5977 = vlaneseq
    %v5978 = vshrl.u32 %v5977, 7
    %v5979 = vsub.s32 %v5976, %v5978
    %v5980 = vrot.slane %v5952, %v5979
    %v5981 = vcombine.high %v5959, %v5959
    %v5982 = vcombine.high %v5966, %v5966
    %v5983 = vcombine.high %v5973, %v5973
    %v5984 = vcombine.high %v5980, %v5980
    %5993 = vst [vmem:[#allocation8 + $0x6] sm:$0x1] %v5959
    %5994 = vst [vmem:[#allocation8 + $0xe] sm:$0x1] %v5973
    %5995 = vst [vmem:[#allocation8 + $0x16] sm:$0x1] %v5981
    %5996 = vst [vmem:[#allocation8 + $0x1e] sm:$0x1] %v5983
    %5997 = vst [vmem:[#allocation8 + $0x26] sm:$0x1] %v5966
    %5998 = vst [vmem:[#allocation8 + $0x2e] sm:$0x1] %v5980
    %5999 = vst [vmem:[#allocation8 + $0x36] sm:$0x1] %v5982
    %6000 = vst [vmem:[#allocation8 + $0x3e] sm:$0x1] %v5984
    %v6001 = vld [vmem:[%s1138] sm:$0xf]
    %v6002 = vld [vmem:[%s1138 + $0x4] sm:$0xf]
    %v6003 = vld [vmem:[%s1138 + $0x8] sm:$0xf]
    %v6004 = vld [vmem:[%s1138 + $0xc] sm:$0xf]
    %v6005 = vld [vmem:[%s1138 + $0x10] sm:$0xf]
    %v6006 = vld [vmem:[%s1138 + $0x14] sm:$0xf]
    %v6007 = vld [vmem:[%s1138 + $0x18] sm:$0xf]
    %v6008 = vld [vmem:[%s1138 + $0x1c] sm:$0xf]
    %v6009 = vld [vmem:[%s1138 + $0x20] sm:$0xf]
    %v6010 = vld [vmem:[%s1138 + $0x24] sm:$0xf]
    %v6011 = vld [vmem:[%s1138 + $0x28] sm:$0xf]
    %v6012 = vld [vmem:[%s1138 + $0x2c] sm:$0xf]
    %v6013 = vld [vmem:[%s1138 + $0x30] sm:$0xf]
    %v6014 = vld [vmem:[%s1138 + $0x34] sm:$0xf]
    %v6015 = vld [vmem:[%s1138 + $0x38] sm:$0xf]
    %v6016 = vld [vmem:[%s1138 + $0x3c] sm:$0xf]
    %v6017 = vld [vmem:[%s1138 + $0x40] sm:$0xf]
    %v6018 = vld [vmem:[%s1138 + $0x44] sm:$0xf]
    %v6019 = vld [vmem:[%s1138 + $0x48] sm:$0xf]
    %v6020 = vld [vmem:[%s1138 + $0x4c] sm:$0xf]
    %v6021 = vld [vmem:[%s1138 + $0x50] sm:$0xf]
    %v6022 = vld [vmem:[%s1138 + $0x54] sm:$0xf]
    %v6023 = vld [vmem:[%s1138 + $0x58] sm:$0xf]
    %v6024 = vld [vmem:[%s1138 + $0x5c] sm:$0xf]
    %v6025 = vld [vmem:[%s1138 + $0x60] sm:$0xf]
    %v6026 = vld [vmem:[%s1138 + $0x64] sm:$0xf]
    %v6027 = vld [vmem:[%s1138 + $0x68] sm:$0xf]
    %v6028 = vld [vmem:[%s1138 + $0x6c] sm:$0xf]
    %v6029 = vld [vmem:[%s1138 + $0x70] sm:$0xf]
    %v6030 = vld [vmem:[%s1138 + $0x74] sm:$0xf]
    %v6031 = vld [vmem:[%s1138 + $0x78] sm:$0xf]
    %v6032 = vld [vmem:[%s1138 + $0x7c] sm:$0xf]
    %v6033 = vld [vmem:[%s1171] sm:$0x1]
    %v6035 = vlaneseq
    %v6036 = vshrl.u32 %v6035, 7
    %v6037 = vsub.s32 0, %v6036
    %v6038 = vrot.slane %v6033, %v6037
    %v6072 = vunpack.c.l.b16 %v6001
    %v6073 = vunpack.c.l.b16 %v6002
    %v6074 = vunpack.c.l.b16 %v6003
    %v6075 = vunpack.c.l.b16 %v6004
    %v6076 = vunpack.c.l.b16 %v6005
    %v6077 = vunpack.c.l.b16 %v6006
    %v6078 = vunpack.c.l.b16 %v6007
    %v6079 = vunpack.c.l.b16 %v6008
    %v6080 = vunpack.c.l.b16 %v6009
    %v6081 = vunpack.c.l.b16 %v6010
    %v6082 = vunpack.c.l.b16 %v6011
    %v6083 = vunpack.c.l.b16 %v6012
    %v6084 = vunpack.c.l.b16 %v6013
    %v6085 = vunpack.c.l.b16 %v6014
    %v6086 = vunpack.c.l.b16 %v6015
    %v6087 = vunpack.c.l.b16 %v6016
    %v6088 = vunpack.c.l.b16 %v6017
    %v6089 = vunpack.c.l.b16 %v6018
    %v6090 = vunpack.c.l.b16 %v6019
    %v6091 = vunpack.c.l.b16 %v6020
    %v6092 = vunpack.c.l.b16 %v6021
    %v6093 = vunpack.c.l.b16 %v6022
    %v6094 = vunpack.c.l.b16 %v6023
    %v6095 = vunpack.c.l.b16 %v6024
    %v6096 = vunpack.c.l.b16 %v6025
    %v6097 = vunpack.c.l.b16 %v6026
    %v6098 = vunpack.c.l.b16 %v6027
    %v6099 = vunpack.c.l.b16 %v6028
    %v6100 = vunpack.c.l.b16 %v6029
    %v6101 = vunpack.c.l.b16 %v6030
    %v6102 = vunpack.c.l.b16 %v6031
    %v6103 = vunpack.c.l.b16 %v6032
    %v6104 = vpack.c.b16 %v6073, %v6072
    %v6105 = vpack.c.b16 %v6075, %v6074
    %v6106 = vpack.c.b16 %v6077, %v6076
    %v6107 = vpack.c.b16 %v6079, %v6078
    %v6108 = vpack.c.b16 %v6081, %v6080
    %v6109 = vpack.c.b16 %v6083, %v6082
    %v6110 = vpack.c.b16 %v6085, %v6084
    %v6111 = vpack.c.b16 %v6087, %v6086
    %v6112 = vpack.c.b16 %v6089, %v6088
    %v6113 = vpack.c.b16 %v6091, %v6090
    %v6114 = vpack.c.b16 %v6093, %v6092
    %v6115 = vpack.c.b16 %v6095, %v6094
    %v6116 = vpack.c.b16 %v6097, %v6096
    %v6117 = vpack.c.b16 %v6099, %v6098
    %v6118 = vpack.c.b16 %v6101, %v6100
    %v6119 = vpack.c.b16 %v6103, %v6102
    %6136 = vmatprep.subr.bf16.mxu0 0
    %6137 = vmatpush1.bf16.msra.mxu0 %v6104
    %6138 = vmatprep.subr.bf16.mxu0 0
    %6139 = vmatpush1.bf16.msra.mxu0 %v6105
    %6140 = vmatprep.subr.bf16.mxu0 0
    %6141 = vmatpush1.bf16.msra.mxu0 %v6106
    %6142 = vmatprep.subr.bf16.mxu0 0
    %6143 = vmatpush1.bf16.msra.mxu0 %v6107
    %6144 = vmatprep.subr.bf16.mxu0 0
    %6145 = vmatpush1.bf16.msra.mxu0 %v6108
    %6146 = vmatprep.subr.bf16.mxu0 0
    %6147 = vmatpush1.bf16.msra.mxu0 %v6109
    %6148 = vmatprep.subr.bf16.mxu0 0
    %6149 = vmatpush1.bf16.msra.mxu0 %v6110
    %6150 = vmatprep.subr.bf16.mxu0 0
    %6151 = vmatpush1.bf16.msra.mxu0 %v6111
    %6152 = vmatprep.subr.bf16.mxu0 0
    %6153 = vmatpush1.bf16.msra.mxu0 %v6112
    %6154 = vmatprep.subr.bf16.mxu0 0
    %6155 = vmatpush1.bf16.msra.mxu0 %v6113
    %6156 = vmatprep.subr.bf16.mxu0 0
    %6157 = vmatpush1.bf16.msra.mxu0 %v6114
    %6158 = vmatprep.subr.bf16.mxu0 0
    %6159 = vmatpush1.bf16.msra.mxu0 %v6115
    %6160 = vmatprep.subr.bf16.mxu0 0
    %6161 = vmatpush1.bf16.msra.mxu0 %v6116
    %6162 = vmatprep.subr.bf16.mxu0 0
    %6163 = vmatpush1.bf16.msra.mxu0 %v6117
    %6164 = vmatprep.subr.bf16.mxu0 0
    %6165 = vmatpush1.bf16.msra.mxu0 %v6118
    %6166 = vmatprep.subr.bf16.mxu0 0
    %6167 = vmatpush1.bf16.msra.mxu0 %v6119
    %6168 = vmatprep.mubr.bf16.mxu0 %v5823
    %6169 = vmatmul.mubr.bf16.gmra.mrb[0].mxu0 %v5643
    %v6170 = vpop.f32.mrb[0].mxu0
    %v6171 = vadd.f32 %v6038, %v6170
    %v6172 = vpop.f32.mrb[0].mxu0
    %v6173 = vpop.f32.mrb[0].mxu0
    %v6174 = vpop.f32.mrb[0].mxu0
    %6175 = vdwg.mxu0
    %v6176 = vtanh.pop %v6171
    %v6177 = vpack.c.bf16 %v6176, %v6176
    %v6178 = vld [vmem:[%s7] sm:$0xf]
    %v6179 = vld [vmem:[%s7 + $0x4] sm:$0xf]
    %v6180 = vld [vmem:[%s7 + $0x8] sm:$0xf]
    %v6181 = vld [vmem:[%s7 + $0xc] sm:$0xf]
    %v6182 = vld [vmem:[%s7 + $0x10] sm:$0xf]
    %v6183 = vld [vmem:[%s7 + $0x14] sm:$0xf]
    %v6184 = vld [vmem:[%s7 + $0x18] sm:$0xf]
    %v6185 = vld [vmem:[%s7 + $0x1c] sm:$0xf]
    %v6186 = vld [vmem:[%s7 + $0x20] sm:$0xf]
    %v6187 = vld [vmem:[%s7 + $0x24] sm:$0xf]
    %v6188 = vld [vmem:[%s7 + $0x28] sm:$0xf]
    %v6189 = vld [vmem:[%s7 + $0x2c] sm:$0xf]
    %v6190 = vld [vmem:[%s7 + $0x30] sm:$0xf]
    %v6191 = vld [vmem:[%s7 + $0x34] sm:$0xf]
    %v6192 = vld [vmem:[%s7 + $0x38] sm:$0xf]
    %v6193 = vld [vmem:[%s7 + $0x3c] sm:$0xf]
    %v6194 = vld [vmem:[%s8] sm:$0x1]
    %v6196 = vlaneseq
    %v6197 = vshrl.u32 %v6196, 7
    %v6198 = vsub.s32 0, %v6197
    %v6199 = vrot.slane %v6194, %v6198
    %v6217 = vunpack.c.l.b16 %v6178
    %v6218 = vunpack.c.l.b16 %v6179
    %v6219 = vunpack.c.l.b16 %v6180
    %v6220 = vunpack.c.l.b16 %v6181
    %v6221 = vunpack.c.l.b16 %v6182
    %v6222 = vunpack.c.l.b16 %v6183
    %v6223 = vunpack.c.l.b16 %v6184
    %v6224 = vunpack.c.l.b16 %v6185
    %v6225 = vunpack.c.l.b16 %v6186
    %v6226 = vunpack.c.l.b16 %v6187
    %v6227 = vunpack.c.l.b16 %v6188
    %v6228 = vunpack.c.l.b16 %v6189
    %v6229 = vunpack.c.l.b16 %v6190
    %v6230 = vunpack.c.l.b16 %v6191
    %v6231 = vunpack.c.l.b16 %v6192
    %v6232 = vunpack.c.l.b16 %v6193
    %v6233 = vpack.c.b16 %v6218, %v6217
    %v6234 = vpack.c.b16 %v6220, %v6219
    %v6235 = vpack.c.b16 %v6222, %v6221
    %v6236 = vpack.c.b16 %v6224, %v6223
    %v6237 = vpack.c.b16 %v6226, %v6225
    %v6238 = vpack.c.b16 %v6228, %v6227
    %v6239 = vpack.c.b16 %v6230, %v6229
    %v6240 = vpack.c.b16 %v6232, %v6231
    %6249 = vmatprep.subr.bf16.mxu0 0
    %6250 = vmatpush1.bf16.msra.mxu0 %v6233
    %6251 = vmatprep.subr.bf16.mxu0 0
    %6252 = vmatpush1.bf16.msra.mxu0 %v6234
    %6253 = vmatprep.subr.bf16.mxu0 0
    %6254 = vmatpush1.bf16.msra.mxu0 %v6235
    %6255 = vmatprep.subr.bf16.mxu0 0
    %6256 = vmatpush1.bf16.msra.mxu0 %v6236
    %6257 = vmatprep.subr.bf16.mxu0 0
    %6258 = vmatpush1.bf16.msra.mxu0 %v6237
    %6259 = vmatprep.subr.bf16.mxu0 0
    %6260 = vmatpush1.bf16.msra.mxu0 %v6238
    %6261 = vmatprep.subr.bf16.mxu0 0
    %6262 = vmatpush1.bf16.msra.mxu0 %v6239
    %6263 = vmatprep.subr.bf16.mxu0 0
    %6264 = vmatpush1.bf16.msra.mxu0 %v6240
    %6265 = vmatprep.subr.bf16.mxu0 0
    %6266 = vmatpush1.bf16.msra.mxu0 0
    %6267 = vmatprep.subr.bf16.mxu0 0
    %6268 = vmatpush1.bf16.msra.mxu0 0
    %6269 = vmatprep.subr.bf16.mxu0 0
    %6270 = vmatpush1.bf16.msra.mxu0 0
    %6271 = vmatprep.subr.bf16.mxu0 0
    %6272 = vmatpush1.bf16.msra.mxu0 0
    %6273 = vmatprep.subr.bf16.mxu0 0
    %6274 = vmatpush1.bf16.msra.mxu0 0
    %6275 = vmatprep.subr.bf16.mxu0 0
    %6276 = vmatpush1.bf16.msra.mxu0 0
    %6277 = vmatprep.subr.bf16.mxu0 0
    %6278 = vmatpush1.bf16.msra.mxu0 0
    %6279 = vmatprep.subr.bf16.mxu0 0
    %6280 = vmatpush1.bf16.msra.mxu0 0
    %6281 = vmatprep.mubr.bf16.mxu0 0
    %6282 = vmatmul.mubr.bf16.gmra.mrb[0].mxu0 %v6177
    %v6283 = vpop.f32.mrb[0].mxu0
    %v6284 = vadd.f32 %v6199, %v6283
    %v6285 = vpop.f32.mrb[0].mxu0
    %v6286 = vpop.f32.mrb[0].mxu0
    %v6287 = vpop.f32.mrb[0].mxu0
    %6288 = vdwg.mxu0
    %v6290 = vcombine.high %v6284, %v6284
    %v6292 = vunpack.c.l.s4 1966171168
    %v6293 = vunpack.c.0.s8 %v6292
    %v6294 = vlaneseq
    %v6295 = vshrl.u32 %v6294, 7
    %v6296 = vsub.s32 %v6293, %v6295
    %v6297 = vrot.slane %v6284, %v6296
    %v6299 = vunpack.c.l.s4 1966171168
    %v6300 = vunpack.c.0.s8 %v6299
    %v6301 = vlaneseq
    %v6302 = vshrl.u32 %v6301, 7
    %v6303 = vsub.s32 %v6300, %v6302
    %v6304 = vrot.slane %v6290, %v6303
    %v6305 = vcombine.high %v6297, %v6297
    %v6306 = vcombine.high %v6304, %v6304
    %v6308 = vunpack.c.l.s4 1966171168
    %v6309 = vunpack.c.0.s8 %v6308
    %v6310 = vlaneseq
    %v6311 = vshrl.u32 %v6310, 7
    %v6312 = vsub.s32 %v6309, %v6311
    %v6313 = vrot.slane %v6297, %v6312
    %v6315 = vunpack.c.l.s4 1966171168
    %v6316 = vunpack.c.0.s8 %v6315
    %v6317 = vlaneseq
    %v6318 = vshrl.u32 %v6317, 7
    %v6319 = vsub.s32 %v6316, %v6318
    %v6320 = vrot.slane %v6304, %v6319
    %v6322 = vunpack.c.l.s4 1966171168
    %v6323 = vunpack.c.0.s8 %v6322
    %v6324 = vlaneseq
    %v6325 = vshrl.u32 %v6324, 7
    %v6326 = vsub.s32 %v6323, %v6325
    %v6327 = vrot.slane %v6305, %v6326
    %v6329 = vunpack.c.l.s4 1966171168
    %v6330 = vunpack.c.0.s8 %v6329
    %v6331 = vlaneseq
    %v6332 = vshrl.u32 %v6331, 7
    %v6333 = vsub.s32 %v6330, %v6332
    %v6334 = vrot.slane %v6306, %v6333
    %v6335 = vcombine.high %v6313, %v6313
    %v6336 = vcombine.high %v6320, %v6320
    %v6337 = vcombine.high %v6327, %v6327
    %v6338 = vcombine.high %v6334, %v6334
    %6347 = vst [vmem:[#allocation8 + $0x7] sm:$0x1] %v6313
    %6348 = vst [vmem:[#allocation8 + $0xf] sm:$0x1] %v6327
    %6349 = vst [vmem:[#allocation8 + $0x17] sm:$0x1] %v6335
    %6350 = vst [vmem:[#allocation8 + $0x1f] sm:$0x1] %v6337
    %6351 = vst [vmem:[#allocation8 + $0x27] sm:$0x1] %v6320
    %6352 = vst [vmem:[#allocation8 + $0x2f] sm:$0x1] %v6334
    %6353 = vst [vmem:[#allocation8 + $0x37] sm:$0x1] %v6336
    %6354 = vst [vmem:[#allocation8 + $0x3f] sm:$0x1] %v6338
    %v6355 = vunpack.c.l.bf16 %v6177
    %s6356 = scalar_lea.vmem %s10, 24
    %6357 = vst [vmem:[%s6356] sm:$0xff] %v6355
    // Predicated region
    $region50: #{char_rnn_forward.1} parent=1 // pred_check
      _
    $region51: #{char_rnn_forward.1} parent=1 // pred_check_branch
      %6359 = sbr.rel (0) target = $region53
    $region52: #{char_rnn_forward.1} parent=1 // pred_region
      %s6361 = ssub.s32 1024, 1024
      %6362 = vsyncadd [#allocation4], %s6361
      %s6363 = sshll.u32 [#allocation8], 4
      %s6364 = int_to_ptr.vmem [resolvable:$true] %s6363
      %6369 = dma.vmem_to_hbm [thread:$0]  %s6364, 1024, %s9, [#allocation4], 128, 128, 8
    $region53: #{char_rnn_forward.1} parent=1 // pred_fallthru
      _
    // Predicated region
    $region54: #{char_rnn_forward.1} parent=1 // pred_check
      _
    $region55: #{char_rnn_forward.1} parent=1 // pred_check_branch
      %6371 = sbr.rel (0) target = $region57
    $region56: #{char_rnn_forward.1} parent=1 // pred_region
      _
    $region57: #{char_rnn_forward.1} parent=1 // pred_fallthru
      _
    // Predicated region
    $region58: #{char_rnn_forward.1} parent=1 // pred_check
      _
    $region59: #{char_rnn_forward.1} parent=1 // pred_check_branch
      %6373 = sbr.rel (0) target = $region61
    $region60: #{char_rnn_forward.1} parent=1 // pred_region
      %6374 = dma.done [#allocation4], 1024
    $region61: #{char_rnn_forward.1} parent=1 // pred_fallthru
      _
    // Predicated region
    $region62: #{char_rnn_forward.1} parent=1 // pred_check
      _
    $region63: #{char_rnn_forward.1} parent=1 // pred_check_branch
      %6376 = sbr.rel (0) target = $region65
    $region64: #{char_rnn_forward.1} parent=1 // pred_region
      _
    $region65: #{char_rnn_forward.1} parent=1 // pred_fallthru
      _
    %6377 = vsyncpa [#allocation3], 1
    %6378 = vsyncpa [#allocation6], 1
    %6379 = vsyncpa [#allocation4], 1

</llo_original>
